<compile_context>
chip_gen: v6e
topology: v6e:2x2x1
jax: 0.10.0
libtpu: 0.0.40
codegen_flags: <defaults>
</compile_context>

<pallas_src>
import math

import jax
import jax.numpy as jnp
from jax.experimental import pallas as pl
from jax.experimental.pallas import tpu as pltpu


def _matmul_bias_hswish_kernel(x_ref, w_ref, b_ref, o_ref):
    """Fused (M, K) @ (K, N) + bias, then v * clamp(v + 3, 0, 6) / 6."""
    v = jnp.dot(x_ref[...], w_ref[...], preferred_element_type=jnp.float32)
    v = v + b_ref[...]                      # bias (1, 4*Cout_pad) broadcasts over M
    h = jnp.clip(v + 3.0, 0.0, 6.0)
    o_ref[...] = (v * h * (1.0 / 6.0)).astype(o_ref.dtype)


def _round_up(x, m):
    return ((x + m - 1) // m) * m


def _num_row_tiles():
    """2 balanced 'parallel' tiles on v7x (2 TensorCores/chip), 1 elsewhere
    (per-grid-step overhead dominates this tiny kernel on v5e/v6e)."""
    try:
        kind = jax.devices()[0].device_kind.lower()
    except Exception:
        return 1
    return 2 if ("v7" in kind or "7x" in kind) else 1


def conv_transpose_hardswishish_nhwc(xh, w, b, *, n_row_tiles=None):
    """ConvTranspose2d(K=4, stride=2, padding=0, output_padding=1) followed by
    v * clamp(v + 3, 0, 6) / 6, as a single fused Pallas matmul kernel.

    xh: (N, H, W, Cin) f32 NHWC, w: (Cin, Cout, 4, 4), b: (Cout,)
    returns NHWC (N, Ho, Wo, Cout) with Ho = 2H + 3, Wo = 2W + 3.
    """
    if n_row_tiles is None:
        n_row_tiles = _num_row_tiles()

    N, H, W, Cin = xh.shape
    Cin_w, Cout, K, K2 = w.shape
    assert Cin_w == Cin and K == 4 and K2 == 4

    Ho = 2 * H + 3
    Wo = 2 * W + 3

    Hq = H + 2                        # q = oy // 2 ranges over [0, H+1]
    Wr = W + 2                        # r = ox // 2 ranges over [0, W+1]
    Wr_pad = _round_up(Wr, 8)         # keep matmul-M / sublane extents 8-aligned
    Hq_pad = _round_up(Hq, n_row_tiles)
    row_tile = Hq_pad // n_row_tiles

    # lane-dense output: pad Cout so the output block's last dim % 128 == 0
    Cout_pad = _round_up(4 * Cout, 128) // 4

    # ---------------- wrapper-side layout plumbing ----------------
    xh = xh.astype(jnp.float32)
    # xpad[i, j] = x[i-1, j-1] for i in [1,H], j in [1,W], zero elsewhere.
    xpad = jnp.pad(xh, ((0, 0), (1, Hq_pad - H), (1, Wr_pad - W), (0, 0)))
    # channel block (dy, dx): xcat[q, r, (dy*2+dx)*Cin + ci] = x[q-dy, r-dx, ci]
    blocks = [
        xpad[:, 1 - dy:1 - dy + Hq_pad, 1 - dx:1 - dx + Wr_pad, :]
        for dy in (0, 1) for dx in (0, 1)
    ]
    xcat = jnp.concatenate(blocks, axis=-1)           # (N, Hq_pad, Wr_pad, 4*Cin)
    M = Hq_pad * Wr_pad
    xcat2 = xcat.reshape(N, M, 4 * Cin)

    # weight: kernel index ky = 2*dy + py, kx = 2*dx + px
    # wcat[(dy*2+dx)*Cin + ci, (py*2+px)*Cout_pad + co] = w[ci, co, 2dy+py, 2dx+px]
    w6 = w.astype(jnp.float32).reshape(Cin, Cout, 2, 2, 2, 2)   # (ci,co,dy,py,dx,px)
    w6t = jnp.transpose(w6, (2, 4, 0, 3, 5, 1))                 # (dy,dx,ci,py,px,co)
    w6t = jnp.pad(w6t, ((0, 0),) * 5 + ((0, Cout_pad - Cout),))
    wcat = w6t.reshape(4 * Cin, 4 * Cout_pad)
    b_pad = jnp.pad(b.astype(jnp.float32), (0, Cout_pad - Cout))
    b4 = jnp.tile(b_pad, 4).reshape(1, 4 * Cout_pad)

    # ---------------- fused Pallas kernel ----------------
    TRM = row_tile * Wr_pad
    out2 = pl.pallas_call(
        _matmul_bias_hswish_kernel,
        out_shape=jax.ShapeDtypeStruct((N, M, 4 * Cout_pad), jnp.float32),
        grid=(N, n_row_tiles),
        in_specs=[
            pl.BlockSpec((None, TRM, 4 * Cin), lambda n, t: (n, t, 0)),
            pl.BlockSpec((4 * Cin, 4 * Cout_pad), lambda n, t: (0, 0)),  # resident
            pl.BlockSpec((1, 4 * Cout_pad), lambda n, t: (0, 0)),
        ],
        out_specs=pl.BlockSpec((None, TRM, 4 * Cout_pad), lambda n, t: (n, t, 0)),
        compiler_params=pltpu.CompilerParams(
            dimension_semantics=("parallel", "parallel"),
            allow_input_fusion=[True, False, False]),
    )(xcat2, wcat, b4)

    # undo sub-pixel layout: (n, q, r, py, px, co) -> (n, 2q+py, 2r+px, co)
    o = out2.reshape(N, Hq_pad, Wr_pad, 2, 2, Cout_pad)
    o = jnp.transpose(o, (0, 1, 3, 2, 4, 5)).reshape(
        N, 2 * Hq_pad, 2 * Wr_pad, Cout_pad)
    return o[:, :Ho, :Wo, :Cout]                      # NHWC


def model_forward(x1, w1, b1, w2, b2):
    # single NCHW -> NHWC conversion at the start
    xh = jnp.transpose(x1, (0, 2, 3, 1)).astype(jnp.float32)

    # v1..v6: conv_transpose1 + hard-swish-like block (fused in the kernel)
    v6 = conv_transpose_hardswishish_nhwc(xh, w1, b1)        # (N, 35, 35, 32) NHWC

    # TODO(synk): the original torch forward is internally inconsistent
    # (conv_transpose2 expects 16 input channels but receives 32, so the torch
    # module raises at runtime — the file sits in `jit_fail/`).  To keep the
    # chain runnable we feed the first 16 channels into layer 2.
    v6_16 = v6[..., :16]

    # v7..v12: conv_transpose2 + hard-swish-like block (fused in the kernel)
    v12 = conv_transpose_hardswishish_nhwc(v6_16, w2, b2)    # (N, 73, 73, 16) NHWC

    # single NHWC -> NCHW conversion at the very end
    return jnp.transpose(v12, (0, 3, 1, 2))


if __name__ == "__main__":
    key = jax.random.PRNGKey(0)
    k1, k2, k3, k4, k5 = jax.random.split(key, 5)

    # input: matches the torch script's x1 = torch.randn(1, 32, 16, 16)
    x1 = jax.random.normal(k1, (1, 32, 16, 16), jnp.float32)

    # ConvTranspose2d(32, 32, 4): weight (32, 32, 4, 4), bias (32,)
    w1 = jax.random.normal(k2, (32, 32, 4, 4), jnp.float32) / math.sqrt(32 * 16)
    b1 = jax.random.normal(k3, (32,), jnp.float32) * 0.01

    # ConvTranspose2d(16, 16, 4): weight (16, 16, 4, 4), bias (16,)
    w2 = jax.random.normal(k4, (16, 16, 4, 4), jnp.float32) / math.sqrt(16 * 16)
    b2 = jax.random.normal(k5, (16,), jnp.float32) * 0.01

    fwd = jax.jit(model_forward)
    out = fwd(x1, w1, b1, w2, b2)
    jax.block_until_ready(out)
    assert out.shape == (1, 16, 73, 73) and out.dtype == jnp.float32
    print("KERNEL_OK")
</pallas_src>

<mosaic_0001>
module attributes {stable_mosaic.version = 11 : i64} {
  func.func @_matmul_bias_hswish_kernel(%arg0: i32, %arg1: i32, %arg2: memref<1x432x128xf32, #tpu.memory_space<vmem>>, %arg3: memref<128x128xf32, #tpu.memory_space<vmem>>, %arg4: memref<1x128xf32, #tpu.memory_space<vmem>>, %arg5: memref<1x432x128xf32, #tpu.memory_space<vmem>>) attributes {dimension_semantics = [#tpu.dimension_semantics<parallel>, #tpu.dimension_semantics<parallel>], iteration_bounds = array<i64: 1, 1>, scalar_prefetch = 0 : i64, scratch_operands = 0 : i64, tpu.core_type = #tpu.core_type<tc>, window_params = [{transform_indices = @transform_0, window_bounds = array<i64: 1, 432, 128>}, {pipeline_mode = #tpu.pipeline_mode<synchronous>, transform_indices = @transform_1, window_bounds = array<i64: 128, 128>}, {pipeline_mode = #tpu.pipeline_mode<synchronous>, transform_indices = @transform_2, window_bounds = array<i64: 1, 128>}, {transform_indices = @transform_3, window_bounds = array<i64: 1, 432, 128>}]} {
    %c0 = arith.constant 0 : index
    %c0_0 = arith.constant 0 : index
    %c0_1 = arith.constant 0 : index
    %0 = vector.load %arg2[%c0, %c0_0, %c0_1] : memref<1x432x128xf32, #tpu.memory_space<vmem>>, vector<1x432x128xf32>
    %1 = vector.shape_cast %0 : vector<1x432x128xf32> to vector<432x128xf32>
    %c0_2 = arith.constant 0 : index
    %c0_3 = arith.constant 0 : index
    %2 = vector.load %arg3[%c0_2, %c0_3] : memref<128x128xf32, #tpu.memory_space<vmem>>, vector<128x128xf32>
    %cst = arith.constant dense<0.000000e+00> : vector<432x128xf32>
    %3 = tpu.matmul %1, %2, %cst {dimension_numbers = #tpu.dot_dimension_numbers<[1], [0], [0], [1], [0, 0, 1, 1], [], []>} : vector<432x128xf32>, vector<128x128xf32>, vector<432x128xf32> -> vector<432x128xf32>
    %c0_4 = arith.constant 0 : index
    %c0_5 = arith.constant 0 : index
    %4 = vector.load %arg4[%c0_4, %c0_5] : memref<1x128xf32, #tpu.memory_space<vmem>>, vector<1x128xf32>
    %5 = vector.broadcast %4 : vector<1x128xf32> to vector<432x128xf32>
    %6 = arith.addf %3, %5 : vector<432x128xf32>
    %cst_6 = arith.constant 3.000000e+00 : f32
    %7 = vector.broadcast %cst_6 : f32 to vector<432x128xf32>
    %8 = arith.addf %6, %7 : vector<432x128xf32>
    %cst_7 = arith.constant 0.000000e+00 : f32
    %cst_8 = arith.constant 6.000000e+00 : f32
    %9 = vector.broadcast %cst_7 : f32 to vector<432x128xf32>
    %10 = arith.maximumf %9, %8 : vector<432x128xf32>
    %11 = vector.broadcast %cst_8 : f32 to vector<432x128xf32>
    %12 = arith.minimumf %11, %10 : vector<432x128xf32>
    %13 = arith.mulf %6, %12 : vector<432x128xf32>
    %cst_9 = arith.constant 0.166666672 : f32
    %14 = vector.broadcast %cst_9 : f32 to vector<432x128xf32>
    %15 = arith.mulf %13, %14 : vector<432x128xf32>
    %c0_10 = arith.constant 0 : index
    %c0_11 = arith.constant 0 : index
    %c0_12 = arith.constant 0 : index
    %16 = vector.load %arg5[%c0_10, %c0_11, %c0_12] : memref<1x432x128xf32, #tpu.memory_space<vmem>>, vector<1x432x128xf32>
    %17 = vector.shape_cast %16 : vector<1x432x128xf32> to vector<432x128xf32>
    %18 = vector.shape_cast %15 : vector<432x128xf32> to vector<1x432x128xf32>
    tpu.vector_store %arg5[%c0_10, %c0_11, %c0_12], %18 {strides = array<i32>} : memref<1x432x128xf32, #tpu.memory_space<vmem>>, vector<1x432x128xf32>,
    return
  }
  func.func @transform_0(%arg0: i32, %arg1: i32) -> (i32, i32, i32) {
    %c0_i32 = arith.constant 0 : i32
    %c0_i32_0 = arith.constant 0 : i32
    return %arg0, %arg1, %c0_i32 : i32, i32, i32
  }
  func.func @transform_1(%arg0: i32, %arg1: i32) -> (i32, i32) {
    %c0_i32 = arith.constant 0 : i32
    %c0_i32_0 = arith.constant 0 : i32
    %c0_i32_1 = arith.constant 0 : i32
    return %c0_i32, %c0_i32_0 : i32, i32
  }
  func.func @transform_2(%arg0: i32, %arg1: i32) -> (i32, i32) {
    %c0_i32 = arith.constant 0 : i32
    %c0_i32_0 = arith.constant 0 : i32
    %c0_i32_1 = arith.constant 0 : i32
    return %c0_i32, %c0_i32_0 : i32, i32
  }
  func.func @transform_3(%arg0: i32, %arg1: i32) -> (i32, i32, i32) {
    %c0_i32 = arith.constant 0 : i32
    %c0_i32_0 = arith.constant 0 : i32
    return %arg0, %arg1, %c0_i32 : i32, i32, i32
  }
}

module attributes {stable_mosaic.version = 11 : i64} {
  func.func @_matmul_bias_hswish_kernel(%arg0: i32, %arg1: i32, %arg2: memref<1x1480x64xf32, #tpu.memory_space<vmem>>, %arg3: memref<64x128xf32, #tpu.memory_space<vmem>>, %arg4: memref<1x128xf32, #tpu.memory_space<vmem>>, %arg5: memref<1x1480x128xf32, #tpu.memory_space<vmem>>) attributes {dimension_semantics = [#tpu.dimension_semantics<parallel>, #tpu.dimension_semantics<parallel>], iteration_bounds = array<i64: 1, 1>, scalar_prefetch = 0 : i64, scratch_operands = 0 : i64, tpu.core_type = #tpu.core_type<tc>, window_params = [{transform_indices = @transform_0, window_bounds = array<i64: 1, 1480, 64>}, {pipeline_mode = #tpu.pipeline_mode<synchronous>, transform_indices = @transform_1, window_bounds = array<i64: 64, 128>}, {pipeline_mode = #tpu.pipeline_mode<synchronous>, transform_indices = @transform_2, window_bounds = array<i64: 1, 128>}, {transform_indices = @transform_3, window_bounds = array<i64: 1, 1480, 128>}]} {
    %c0 = arith.constant 0 : index
    %c0_0 = arith.constant 0 : index
    %c0_1 = arith.constant 0 : index
    %0 = vector.load %arg2[%c0, %c0_0, %c0_1] : memref<1x1480x64xf32, #tpu.memory_space<vmem>>, vector<1x1480x64xf32>
    %1 = vector.shape_cast %0 : vector<1x1480x64xf32> to vector<1480x64xf32>
    %c0_2 = arith.constant 0 : index
    %c0_3 = arith.constant 0 : index
    %2 = vector.load %arg3[%c0_2, %c0_3] : memref<64x128xf32, #tpu.memory_space<vmem>>, vector<64x128xf32>
    %cst = arith.constant dense<0.000000e+00> : vector<1480x128xf32>
    %3 = tpu.matmul %1, %2, %cst {dimension_numbers = #tpu.dot_dimension_numbers<[1], [0], [0], [1], [0, 0, 1, 1], [], []>} : vector<1480x64xf32>, vector<64x128xf32>, vector<1480x128xf32> -> vector<1480x128xf32>
    %c0_4 = arith.constant 0 : index
    %c0_5 = arith.constant 0 : index
    %4 = vector.load %arg4[%c0_4, %c0_5] : memref<1x128xf32, #tpu.memory_space<vmem>>, vector<1x128xf32>
    %5 = vector.broadcast %4 : vector<1x128xf32> to vector<1480x128xf32>
    %6 = arith.addf %3, %5 : vector<1480x128xf32>
    %cst_6 = arith.constant 3.000000e+00 : f32
    %7 = vector.broadcast %cst_6 : f32 to vector<1480x128xf32>
    %8 = arith.addf %6, %7 : vector<1480x128xf32>
    %cst_7 = arith.constant 0.000000e+00 : f32
    %cst_8 = arith.constant 6.000000e+00 : f32
    %9 = vector.broadcast %cst_7 : f32 to vector<1480x128xf32>
    %10 = arith.maximumf %9, %8 : vector<1480x128xf32>
    %11 = vector.broadcast %cst_8 : f32 to vector<1480x128xf32>
    %12 = arith.minimumf %11, %10 : vector<1480x128xf32>
    %13 = arith.mulf %6, %12 : vector<1480x128xf32>
    %cst_9 = arith.constant 0.166666672 : f32
    %14 = vector.broadcast %cst_9 : f32 to vector<1480x128xf32>
    %15 = arith.mulf %13, %14 : vector<1480x128xf32>
    %c0_10 = arith.constant 0 : index
    %c0_11 = arith.constant 0 : index
    %c0_12 = arith.constant 0 : index
    %16 = vector.load %arg5[%c0_10, %c0_11, %c0_12] : memref<1x1480x128xf32, #tpu.memory_space<vmem>>, vector<1x1480x128xf32>
    %17 = vector.shape_cast %16 : vector<1x1480x128xf32> to vector<1480x128xf32>
    %18 = vector.shape_cast %15 : vector<1480x128xf32> to vector<1x1480x128xf32>
    tpu.vector_store %arg5[%c0_10, %c0_11, %c0_12], %18 {strides = array<i32>} : memref<1x1480x128xf32, #tpu.memory_space<vmem>>, vector<1x1480x128xf32>,
    return
  }
  func.func @transform_0(%arg0: i32, %arg1: i32) -> (i32, i32, i32) {
    %c0_i32 = arith.constant 0 : i32
    %c0_i32_0 = arith.constant 0 : i32
    return %arg0, %arg1, %c0_i32 : i32, i32, i32
  }
  func.func @transform_1(%arg0: i32, %arg1: i32) -> (i32, i32) {
    %c0_i32 = arith.constant 0 : i32
    %c0_i32_0 = arith.constant 0 : i32
    %c0_i32_1 = arith.constant 0 : i32
    return %c0_i32, %c0_i32_0 : i32, i32
  }
  func.func @transform_2(%arg0: i32, %arg1: i32) -> (i32, i32) {
    %c0_i32 = arith.constant 0 : i32
    %c0_i32_0 = arith.constant 0 : i32
    %c0_i32_1 = arith.constant 0 : i32
    return %c0_i32, %c0_i32_0 : i32, i32
  }
  func.func @transform_3(%arg0: i32, %arg1: i32) -> (i32, i32, i32) {
    %c0_i32 = arith.constant 0 : i32
    %c0_i32_0 = arith.constant 0 : i32
    return %arg0, %arg1, %c0_i32 : i32, i32, i32
  }
}

</mosaic_0001>

<llo_original>
// kernel: tile.19
$region0: #{tile.19}
  %s0 = inlined_call_operand.vmem [shape: f32[4,32], index: 0, kind: input, shape index: {}]
  %s1 = inlined_call_operand.vmem [shape: f32[1,128], index: 1, kind: output, shape index: {}]
  $region1: #{tile.19} parent=0
    #allocation0 [shape = 'u8[4096]{0}', space=vmem, size = 0x1000, scoped, tag = 'scoped mem for output reshape']
    #allocation1 [shape = 'u8[4096]{0}', space=vmem, size = 0x1000, scoped, tag = 'scoped mem for input reshape']
    %s3 = sshll.u32 1, 4
    %s4 = ssub.s32 %s3, 1
    %v5 = vld [vmem:[%s0] sm:%s4]
    %6 = vst [vmem:[#allocation1] sm:%s4] %v5
    %v7 = vld [vmem:[#allocation1] sm:$0x1]
    %vm8 = vcmask 261120
    %9 = vst.msk [vmem:[#allocation0] sm:$0x1] %vm8, %v7
    %s10 = scalar_lea.vmem [#allocation1], 3
    %v11 = vld [vmem:[%s10] sm:$0x1]
    %12 = vrot.lane.b32.xlu0 %v11, 96
    %v13 = vpop.permute.xlu0 %12
    %vm14 = vcmask 1048320
    %15 = vst.msk [vmem:[#allocation0] sm:$0x1] %vm14, %v13
    %s16 = scalar_lea.vmem [#allocation1], 2
    %v17 = vld [vmem:[%s16] sm:$0x1]
    %18 = vrot.lane.b32.xlu0 %v17, 64
    %v19 = vpop.permute.xlu0 %18
    %vm20 = vcmask 785920
    %21 = vst.msk [vmem:[#allocation0] sm:$0x1] %vm20, %v19
    %s22 = scalar_lea.vmem [#allocation1], 1
    %v23 = vld [vmem:[%s22] sm:$0x1]
    %24 = vrot.lane.b32.xlu0 %v23, 32
    %v25 = vpop.permute.xlu0 %24
    %vm26 = vcmask 523520
    %27 = vst.msk [vmem:[#allocation0] sm:$0x1] %vm26, %v25
    %s29 = sshll.u32 1, 1
    %s30 = ssub.s32 %s29, 1
    %v32 = vld [vmem:[#allocation0] sm:%s30]
    %s33 = sshll.u32 1, 1
    %s34 = ssub.s32 %s33, 1
    %35 = vst [vmem:[%s1] sm:%s34] %v32

// kernel: tile.13
$region0: #{tile.13}
  #allocation2 [shape = 's32[1]{0}', space=sflag, size = 0x4, scoped, tag = 'scoped memory for tile.13']
  %s0 = inlined_call_operand.hbm [shape: f32[32], index: 0, kind: input, shape index: {}]
  %s1 = inlined_call_operand.vmem [shape: f32[4,32], index: 1, kind: output, shape index: {}]
  $region1: #{tile.13} parent=0
    #allocation0 [shape = 'u8[512]{0}', space=vmem, size = 0x400, scoped, tag = 'operand span for operand 0']
    #allocation1 [shape = 's32[1]{0}', space=sflag, size = 0x4, scoped, tag = 'scoped memory for tile.13']
    %2 = vsyncpa [#allocation1], 0
    // Predicated region
    $region2: #{tile.13} parent=1 // pred_check
      _
    $region3: #{tile.13} parent=1 // pred_check_branch
      %4 = sbr.rel (0) target = $region5
    $region4: #{tile.13} parent=1 // pred_region
      %s6 = ssub.s32 16, 16
      %7 = vsyncadd [#allocation1], %s6
      %s9 = sshll.u32 [#allocation0], 4
      %s10 = int_to_ptr.vmem [resolvable:$true] %s9
      %12 = dma.hbm_to_vmem [thread:$0]  %s0, 16, %s10, [#allocation1]
    $region5: #{tile.13} parent=1 // pred_fallthru
      _
    // Predicated region
    $region6: #{tile.13} parent=1 // pred_check
      _
    $region7: #{tile.13} parent=1 // pred_check_branch
      %14 = sbr.rel (0) target = $region9
    $region8: #{tile.13} parent=1 // pred_region
      %15 = dma.done [#allocation1], 16
    $region9: #{tile.13} parent=1 // pred_fallthru
      _
    %v16 = vld [vmem:[#allocation0] ss:$0 sm:$0xff]
    %17 = vst [vmem:[%s1] sm:$0xf] %v16
    %18 = vsyncpa [#allocation1], 1

// kernel: tile.18
$region0: #{tile.18}
  #allocation0 [shape = 's32[1]{0}', space=sflag, size = 0x4, scoped, tag = 'scoped memory for tile.18']
  %s0 = inlined_call_operand.vmem [shape: f32[32], index: 0, kind: input, shape index: {}]
  %s1 = inlined_call_operand.vmem [shape: f32[4,32], index: 1, kind: output, shape index: {}]
  // Predicated region
  $region2: #{tile.18} parent=0 // pred_check
    _
  $region3: #{tile.18} parent=0 // pred_check_branch
    %3 = sbr.rel (0) target = $region5
  $region4: #{tile.18} parent=0 // pred_region
    _
  $region5: #{tile.18} parent=0 // pred_fallthru
    _
  %v4 = vld [vmem:[%s0] ss:$0 sm:$0xff]
  %5 = vst [vmem:[%s1] sm:$0xf] %v4

// kernel: model_forward.2
$region0: #{model_forward.2}
  #allocation0 [shape = 'u32[]', space=smem, size = 0x4, offset = 0x4, fixed_abs, tag = 'smem constant byte address 0x4 - core index']
  #allocation1 [shape = 'u32[144,128]{1,0:T(1,128)}', space=vmem, size = 0x12000, scoped, tag = 'internal scratch']
  %s0 = inlined_call_operand.vmem [shape: f32[1,432,128], index: 0, kind: input, shape index: {}]
  %s1 = inlined_call_operand.vmem [shape: f32[128,128], index: 1, kind: input, shape index: {}]
  %s2 = inlined_call_operand.vmem [shape: f32[1,128], index: 2, kind: input, shape index: {}]
  %s3 = inlined_call_operand.vmem [shape: f32[1,432,128], index: 3, kind: output, shape index: {}]
  %s4 = sld [smem:[#allocation0]]
  $region22: #{model_forward.2} parent=0
    _
  %s6 = ssub.s32 1, %s4
  %s7 = scalar_select 0, %s6, %s4
  // Predicated region
  $region2: #{model_forward.2} parent=0 // pred_check
    _
  $region3: #{model_forward.2} parent=0 // pred_check_branch
    %9 = sbr.rel (0) target = $region5
  $region4: #{model_forward.2} parent=0 // pred_region
    _
  $region5: #{model_forward.2} parent=0 // pred_fallthru
    _
  // Predicated region
  $region6: #{model_forward.2} parent=0 // pred_check
    _
  $region7: #{model_forward.2} parent=0 // pred_check_branch
    %11 = sbr.rel (0) target = $region9
  $region8: #{model_forward.2} parent=0 // pred_region
    _
  $region9: #{model_forward.2} parent=0 // pred_fallthru
    _
  // Predicated region
  $region10: #{model_forward.2} parent=0 // pred_check
    _
  $region11: #{model_forward.2} parent=0 // pred_check_branch
    %13 = sbr.rel (0) target = $region13
  $region12: #{model_forward.2} parent=0 // pred_region
    _
  $region13: #{model_forward.2} parent=0 // pred_fallthru
    _
  %v14 = vld [vmem:[%s0] sm:$0xff]
  %v15 = vld [vmem:[%s0 + $0x8] sm:$0xff]
  %v16 = vld [vmem:[%s0 + $0x10] sm:$0xff]
  %v17 = vld [vmem:[%s0 + $0x18] sm:$0xff]
  %v18 = vld [vmem:[%s0 + $0x20] sm:$0xff]
  %v19 = vld [vmem:[%s0 + $0x28] sm:$0xff]
  %v20 = vld [vmem:[%s0 + $0x30] sm:$0xff]
  %v21 = vld [vmem:[%s0 + $0x38] sm:$0xff]
  %v22 = vld [vmem:[%s0 + $0x40] sm:$0xff]
  %v23 = vld [vmem:[%s0 + $0x48] sm:$0xff]
  %v24 = vld [vmem:[%s0 + $0x50] sm:$0xff]
  %v25 = vld [vmem:[%s0 + $0x58] sm:$0xff]
  %v26 = vld [vmem:[%s0 + $0x60] sm:$0xff]
  %v27 = vld [vmem:[%s0 + $0x68] sm:$0xff]
  %v28 = vld [vmem:[%s0 + $0x70] sm:$0xff]
  %v29 = vld [vmem:[%s0 + $0x78] sm:$0xff]
  %v30 = vld [vmem:[%s0 + $0x80] sm:$0xff]
  %v31 = vld [vmem:[%s0 + $0x88] sm:$0xff]
  %v32 = vld [vmem:[%s0 + $0x90] sm:$0xff]
  %v33 = vld [vmem:[%s0 + $0x98] sm:$0xff]
  %v34 = vld [vmem:[%s0 + $0xa0] sm:$0xff]
  %v35 = vld [vmem:[%s0 + $0xa8] sm:$0xff]
  %v36 = vld [vmem:[%s0 + $0xb0] sm:$0xff]
  %v37 = vld [vmem:[%s0 + $0xb8] sm:$0xff]
  %v38 = vld [vmem:[%s0 + $0xc0] sm:$0xff]
  %v39 = vld [vmem:[%s0 + $0xc8] sm:$0xff]
  %v40 = vld [vmem:[%s0 + $0xd0] sm:$0xff]
  %v41 = vld [vmem:[%s0 + $0xd8] sm:$0xff]
  %v42 = vld [vmem:[%s0 + $0xe0] sm:$0xff]
  %v43 = vld [vmem:[%s0 + $0xe8] sm:$0xff]
  %v44 = vld [vmem:[%s0 + $0xf0] sm:$0xff]
  %v45 = vld [vmem:[%s0 + $0xf8] sm:$0xff]
  %v46 = vld [vmem:[%s0 + $0x100] sm:$0xff]
  %v47 = vld [vmem:[%s0 + $0x108] sm:$0xff]
  %v48 = vld [vmem:[%s0 + $0x110] sm:$0xff]
  %v49 = vld [vmem:[%s0 + $0x118] sm:$0xff]
  %v50 = vld [vmem:[%s0 + $0x120] sm:$0xff]
  %v51 = vld [vmem:[%s0 + $0x128] sm:$0xff]
  %v52 = vld [vmem:[%s0 + $0x130] sm:$0xff]
  %v53 = vld [vmem:[%s0 + $0x138] sm:$0xff]
  %v54 = vld [vmem:[%s0 + $0x140] sm:$0xff]
  %v55 = vld [vmem:[%s0 + $0x148] sm:$0xff]
  %v56 = vld [vmem:[%s0 + $0x150] sm:$0xff]
  %v57 = vld [vmem:[%s0 + $0x158] sm:$0xff]
  %v58 = vld [vmem:[%s0 + $0x160] sm:$0xff]
  %v59 = vld [vmem:[%s0 + $0x168] sm:$0xff]
  %v60 = vld [vmem:[%s0 + $0x170] sm:$0xff]
  %v61 = vld [vmem:[%s0 + $0x178] sm:$0xff]
  %v62 = vld [vmem:[%s0 + $0x180] sm:$0xff]
  %v63 = vld [vmem:[%s0 + $0x188] sm:$0xff]
  %v64 = vld [vmem:[%s0 + $0x190] sm:$0xff]
  %v65 = vld [vmem:[%s0 + $0x198] sm:$0xff]
  %v66 = vld [vmem:[%s0 + $0x1a0] sm:$0xff]
  %v67 = vld [vmem:[%s0 + $0x1a8] sm:$0xff]
  %v68 = vld [vmem:[%s1] sm:$0xff]
  %v69 = vld [vmem:[%s1 + $0x8] sm:$0xff]
  %v70 = vld [vmem:[%s1 + $0x10] sm:$0xff]
  %v71 = vld [vmem:[%s1 + $0x18] sm:$0xff]
  %v72 = vld [vmem:[%s1 + $0x20] sm:$0xff]
  %v73 = vld [vmem:[%s1 + $0x28] sm:$0xff]
  %v74 = vld [vmem:[%s1 + $0x30] sm:$0xff]
  %v75 = vld [vmem:[%s1 + $0x38] sm:$0xff]
  %v76 = vld [vmem:[%s1 + $0x40] sm:$0xff]
  %v77 = vld [vmem:[%s1 + $0x48] sm:$0xff]
  %v78 = vld [vmem:[%s1 + $0x50] sm:$0xff]
  %v79 = vld [vmem:[%s1 + $0x58] sm:$0xff]
  %v80 = vld [vmem:[%s1 + $0x60] sm:$0xff]
  %v81 = vld [vmem:[%s1 + $0x68] sm:$0xff]
  %v82 = vld [vmem:[%s1 + $0x70] sm:$0xff]
  %v83 = vld [vmem:[%s1 + $0x78] sm:$0xff]
  %v84 = vld [vmem:[%s2] sm:$0x1]
  %v86 = vlaneseq
  %v87 = vshrl.u32 %v86, 7
  %v88 = vsub.s32 0, %v87
  %v89 = vrot.slane %v84, %v88
  %91 = vmatprep.subr.mxu0 0.0
  %92 = vmatpush1.msra.mxu0 %v83
  %93 = vmatprep.subr.mxu0 0.0
  %94 = vmatpush1.msra.mxu0 %v82
  %95 = vmatprep.subr.mxu0 0.0
  %96 = vmatpush1.msra.mxu0 %v81
  %97 = vmatprep.subr.mxu0 0.0
  %98 = vmatpush1.msra.mxu0 %v80
  %99 = vmatprep.subr.mxu0 0.0
  %100 = vmatpush1.msra.mxu0 %v79
  %101 = vmatprep.subr.mxu0 0.0
  %102 = vmatpush1.msra.mxu0 %v78
  %103 = vmatprep.subr.mxu0 0.0
  %104 = vmatpush1.msra.mxu0 %v77
  %105 = vmatprep.subr.mxu0 0.0
  %106 = vmatpush1.msra.mxu0 %v76
  %107 = vmatprep.subr.mxu0 0.0
  %108 = vmatpush1.msra.mxu0 %v75
  %109 = vmatprep.subr.mxu0 0.0
  %110 = vmatpush1.msra.mxu0 %v74
  %111 = vmatprep.subr.mxu0 0.0
  %112 = vmatpush1.msra.mxu0 %v73
  %113 = vmatprep.subr.mxu0 0.0
  %114 = vmatpush1.msra.mxu0 %v72
  %115 = vmatprep.subr.mxu0 0.0
  %116 = vmatpush1.msra.mxu0 %v71
  %117 = vmatprep.subr.mxu0 0.0
  %118 = vmatpush1.msra.mxu0 %v70
  %119 = vmatprep.subr.mxu0 0.0
  %120 = vmatpush1.msra.mxu0 %v69
  %121 = vmatprep.subr.mxu0 0.0
  %122 = vmatpush1.msra.mxu0 %v68
  %123 = vmatprep.subr.mxu0 0.0
  %124 = vmatpush2.msra.mxu0 0.0
  %125 = vmatprep.subr.mxu0 0.0
  %126 = vmatpush2.msra.mxu0 0.0
  %127 = vmatprep.subr.mxu0 0.0
  %128 = vmatpush2.msra.mxu0 0.0
  %129 = vmatprep.subr.mxu0 0.0
  %130 = vmatpush2.msra.mxu0 0.0
  %131 = vmatprep.subr.mxu0 0.0
  %132 = vmatpush2.msra.mxu0 0.0
  %133 = vmatprep.subr.mxu0 0.0
  %134 = vmatpush2.msra.mxu0 0.0
  %135 = vmatprep.subr.mxu0 0.0
  %136 = vmatpush2.msra.mxu0 0.0
  %137 = vmatprep.subr.mxu0 0.0
  %138 = vmatpush2.msra.mxu0 0.0
  %139 = vmatprep.subr.mxu0 0.0
  %140 = vmatpush2.msra.mxu0 0.0
  %141 = vmatprep.subr.mxu0 0.0
  %142 = vmatpush2.msra.mxu0 0.0
  %143 = vmatprep.subr.mxu0 0.0
  %144 = vmatpush2.msra.mxu0 0.0
  %145 = vmatprep.subr.mxu0 0.0
  %146 = vmatpush2.msra.mxu0 0.0
  %147 = vmatprep.subr.mxu0 0.0
  %148 = vmatpush2.msra.mxu0 0.0
  %149 = vmatprep.subr.mxu0 0.0
  %150 = vmatpush2.msra.mxu0 0.0
  %151 = vmatprep.subr.mxu0 0.0
  %152 = vmatpush2.msra.mxu0 0.0
  %153 = vmatprep.subr.mxu0 0.0
  %154 = vmatpush2.msra.mxu0 0.0
  %155 = vmatprep.mubr.f32.mxu0 0.0
  %156 = vmatmul.mubr.f32.gmra.mxu0 %v14
  %v157 = vpop.f32.mrf.mxu0
  %v158 = vadd.f32 %v89, %v157
  %v159 = vpop.f32.mrf.mxu0
  %160 = vmatprep.mubr.f32.mxu0 0.0
  %161 = vmatmul.mubr.f32.gmra.mxu0 %v15
  %v162 = vpop.f32.mrf.mxu0
  %v163 = vadd.f32 %v89, %v162
  %v164 = vpop.f32.mrf.mxu0
  %165 = vmatprep.mubr.f32.mxu0 0.0
  %166 = vmatmul.mubr.f32.gmra.mxu0 %v16
  %v167 = vpop.f32.mrf.mxu0
  %v168 = vadd.f32 %v89, %v167
  %v169 = vpop.f32.mrf.mxu0
  %170 = vmatprep.mubr.f32.mxu0 0.0
  %171 = vmatmul.mubr.f32.gmra.mxu0 %v17
  %v172 = vpop.f32.mrf.mxu0
  %v173 = vadd.f32 %v89, %v172
  %v174 = vpop.f32.mrf.mxu0
  %175 = vmatprep.mubr.f32.mxu0 0.0
  %176 = vmatmul.mubr.f32.gmra.mxu0 %v18
  %v177 = vpop.f32.mrf.mxu0
  %v178 = vadd.f32 %v89, %v177
  %v179 = vpop.f32.mrf.mxu0
  %180 = vmatprep.mubr.f32.mxu0 0.0
  %181 = vmatmul.mubr.f32.gmra.mxu0 %v19
  %v182 = vpop.f32.mrf.mxu0
  %v183 = vadd.f32 %v89, %v182
  %v184 = vpop.f32.mrf.mxu0
  %185 = vmatprep.mubr.f32.mxu0 0.0
  %186 = vmatmul.mubr.f32.gmra.mxu0 %v20
  %v187 = vpop.f32.mrf.mxu0
  %v188 = vadd.f32 %v89, %v187
  %v189 = vpop.f32.mrf.mxu0
  %190 = vmatprep.mubr.f32.mxu0 0.0
  %191 = vmatmul.mubr.f32.gmra.mxu0 %v21
  %v192 = vpop.f32.mrf.mxu0
  %v193 = vadd.f32 %v89, %v192
  %v194 = vpop.f32.mrf.mxu0
  %195 = vmatprep.mubr.f32.mxu0 0.0
  %196 = vmatmul.mubr.f32.gmra.mxu0 %v22
  %v197 = vpop.f32.mrf.mxu0
  %v198 = vadd.f32 %v89, %v197
  %v199 = vpop.f32.mrf.mxu0
  %200 = vmatprep.mubr.f32.mxu0 0.0
  %201 = vmatmul.mubr.f32.gmra.mxu0 %v23
  %v202 = vpop.f32.mrf.mxu0
  %v203 = vadd.f32 %v89, %v202
  %v204 = vpop.f32.mrf.mxu0
  %205 = vmatprep.mubr.f32.mxu0 0.0
  %206 = vmatmul.mubr.f32.gmra.mxu0 %v24
  %v207 = vpop.f32.mrf.mxu0
  %v208 = vadd.f32 %v89, %v207
  %v209 = vpop.f32.mrf.mxu0
  %210 = vmatprep.mubr.f32.mxu0 0.0
  %211 = vmatmul.mubr.f32.gmra.mxu0 %v25
  %v212 = vpop.f32.mrf.mxu0
  %v213 = vadd.f32 %v89, %v212
  %v214 = vpop.f32.mrf.mxu0
  %215 = vmatprep.mubr.f32.mxu0 0.0
  %216 = vmatmul.mubr.f32.gmra.mxu0 %v26
  %v217 = vpop.f32.mrf.mxu0
  %v218 = vadd.f32 %v89, %v217
  %v219 = vpop.f32.mrf.mxu0
  %220 = vmatprep.mubr.f32.mxu0 0.0
  %221 = vmatmul.mubr.f32.gmra.mxu0 %v27
  %v222 = vpop.f32.mrf.mxu0
  %v223 = vadd.f32 %v89, %v222
  %v224 = vpop.f32.mrf.mxu0
  %225 = vmatprep.mubr.f32.mxu0 0.0
  %226 = vmatmul.mubr.f32.gmra.mxu0 %v28
  %v227 = vpop.f32.mrf.mxu0
  %v228 = vadd.f32 %v89, %v227
  %v229 = vpop.f32.mrf.mxu0
  %230 = vmatprep.mubr.f32.mxu0 0.0
  %231 = vmatmul.mubr.f32.gmra.mxu0 %v29
  %v232 = vpop.f32.mrf.mxu0
  %v233 = vadd.f32 %v89, %v232
  %v234 = vpop.f32.mrf.mxu0
  %235 = vmatprep.mubr.f32.mxu0 0.0
  %236 = vmatmul.mubr.f32.gmra.mxu0 %v30
  %v237 = vpop.f32.mrf.mxu0
  %v238 = vadd.f32 %v89, %v237
  %v239 = vpop.f32.mrf.mxu0
  %240 = vmatprep.mubr.f32.mxu0 0.0
  %241 = vmatmul.mubr.f32.gmra.mxu0 %v31
  %v242 = vpop.f32.mrf.mxu0
  %v243 = vadd.f32 %v89, %v242
  %v244 = vpop.f32.mrf.mxu0
  %245 = vmatprep.mubr.f32.mxu0 0.0
  %246 = vmatmul.mubr.f32.gmra.mxu0 %v32
  %v247 = vpop.f32.mrf.mxu0
  %v248 = vadd.f32 %v89, %v247
  %v249 = vpop.f32.mrf.mxu0
  %250 = vmatprep.mubr.f32.mxu0 0.0
  %251 = vmatmul.mubr.f32.gmra.mxu0 %v33
  %v252 = vpop.f32.mrf.mxu0
  %v253 = vadd.f32 %v89, %v252
  %v254 = vpop.f32.mrf.mxu0
  %255 = vmatprep.mubr.f32.mxu0 0.0
  %256 = vmatmul.mubr.f32.gmra.mxu0 %v34
  %v257 = vpop.f32.mrf.mxu0
  %v258 = vadd.f32 %v89, %v257
  %v259 = vpop.f32.mrf.mxu0
  %260 = vmatprep.mubr.f32.mxu0 0.0
  %261 = vmatmul.mubr.f32.gmra.mxu0 %v35
  %v262 = vpop.f32.mrf.mxu0
  %v263 = vadd.f32 %v89, %v262
  %v264 = vpop.f32.mrf.mxu0
  %265 = vmatprep.mubr.f32.mxu0 0.0
  %266 = vmatmul.mubr.f32.gmra.mxu0 %v36
  %v267 = vpop.f32.mrf.mxu0
  %v268 = vadd.f32 %v89, %v267
  %v269 = vpop.f32.mrf.mxu0
  %270 = vmatprep.mubr.f32.mxu0 0.0
  %271 = vmatmul.mubr.f32.gmra.mxu0 %v37
  %v272 = vpop.f32.mrf.mxu0
  %v273 = vadd.f32 %v89, %v272
  %v274 = vpop.f32.mrf.mxu0
  %275 = vmatprep.mubr.f32.mxu0 0.0
  %276 = vmatmul.mubr.f32.gmra.mxu0 %v38
  %v277 = vpop.f32.mrf.mxu0
  %v278 = vadd.f32 %v89, %v277
  %v279 = vpop.f32.mrf.mxu0
  %280 = vmatprep.mubr.f32.mxu0 0.0
  %281 = vmatmul.mubr.f32.gmra.mxu0 %v39
  %v282 = vpop.f32.mrf.mxu0
  %v283 = vadd.f32 %v89, %v282
  %v284 = vpop.f32.mrf.mxu0
  %285 = vmatprep.mubr.f32.mxu0 0.0
  %286 = vmatmul.mubr.f32.gmra.mxu0 %v40
  %v287 = vpop.f32.mrf.mxu0
  %v288 = vadd.f32 %v89, %v287
  %v289 = vpop.f32.mrf.mxu0
  %290 = vmatprep.mubr.f32.mxu0 0.0
  %291 = vmatmul.mubr.f32.gmra.mxu0 %v41
  %v292 = vpop.f32.mrf.mxu0
  %v293 = vadd.f32 %v89, %v292
  %v294 = vpop.f32.mrf.mxu0
  %295 = vmatprep.mubr.f32.mxu0 0.0
  %296 = vmatmul.mubr.f32.gmra.mxu0 %v42
  %v297 = vpop.f32.mrf.mxu0
  %v298 = vadd.f32 %v89, %v297
  %v299 = vpop.f32.mrf.mxu0
  %300 = vmatprep.mubr.f32.mxu0 0.0
  %301 = vmatmul.mubr.f32.gmra.mxu0 %v43
  %v302 = vpop.f32.mrf.mxu0
  %v303 = vadd.f32 %v89, %v302
  %v304 = vpop.f32.mrf.mxu0
  %305 = vmatprep.mubr.f32.mxu0 0.0
  %306 = vmatmul.mubr.f32.gmra.mxu0 %v44
  %v307 = vpop.f32.mrf.mxu0
  %v308 = vadd.f32 %v89, %v307
  %v309 = vpop.f32.mrf.mxu0
  %310 = vmatprep.mubr.f32.mxu0 0.0
  %311 = vmatmul.mubr.f32.gmra.mxu0 %v45
  %v312 = vpop.f32.mrf.mxu0
  %v313 = vadd.f32 %v89, %v312
  %v314 = vpop.f32.mrf.mxu0
  %315 = vmatprep.mubr.f32.mxu0 0.0
  %316 = vmatmul.mubr.f32.gmra.mxu0 %v46
  %v317 = vpop.f32.mrf.mxu0
  %v318 = vadd.f32 %v89, %v317
  %v319 = vpop.f32.mrf.mxu0
  %320 = vmatprep.mubr.f32.mxu0 0.0
  %321 = vmatmul.mubr.f32.gmra.mxu0 %v47
  %v322 = vpop.f32.mrf.mxu0
  %v323 = vadd.f32 %v89, %v322
  %v324 = vpop.f32.mrf.mxu0
  %325 = vmatprep.mubr.f32.mxu0 0.0
  %326 = vmatmul.mubr.f32.gmra.mxu0 %v48
  %v327 = vpop.f32.mrf.mxu0
  %v328 = vadd.f32 %v89, %v327
  %v329 = vpop.f32.mrf.mxu0
  %330 = vmatprep.mubr.f32.mxu0 0.0
  %331 = vmatmul.mubr.f32.gmra.mxu0 %v49
  %v332 = vpop.f32.mrf.mxu0
  %v333 = vadd.f32 %v89, %v332
  %v334 = vpop.f32.mrf.mxu0
  %335 = vmatprep.mubr.f32.mxu0 0.0
  %336 = vmatmul.mubr.f32.gmra.mxu0 %v50
  %v337 = vpop.f32.mrf.mxu0
  %v338 = vadd.f32 %v89, %v337
  %v339 = vpop.f32.mrf.mxu0
  %340 = vmatprep.mubr.f32.mxu0 0.0
  %341 = vmatmul.mubr.f32.gmra.mxu0 %v51
  %v342 = vpop.f32.mrf.mxu0
  %v343 = vadd.f32 %v89, %v342
  %v344 = vpop.f32.mrf.mxu0
  %345 = vmatprep.mubr.f32.mxu0 0.0
  %346 = vmatmul.mubr.f32.gmra.mxu0 %v52
  %v347 = vpop.f32.mrf.mxu0
  %v348 = vadd.f32 %v89, %v347
  %v349 = vpop.f32.mrf.mxu0
  %350 = vmatprep.mubr.f32.mxu0 0.0
  %351 = vmatmul.mubr.f32.gmra.mxu0 %v53
  %v352 = vpop.f32.mrf.mxu0
  %v353 = vadd.f32 %v89, %v352
  %v354 = vpop.f32.mrf.mxu0
  %355 = vmatprep.mubr.f32.mxu0 0.0
  %356 = vmatmul.mubr.f32.gmra.mxu0 %v54
  %v357 = vpop.f32.mrf.mxu0
  %v358 = vadd.f32 %v89, %v357
  %v359 = vpop.f32.mrf.mxu0
  %360 = vmatprep.mubr.f32.mxu0 0.0
  %361 = vmatmul.mubr.f32.gmra.mxu0 %v55
  %v362 = vpop.f32.mrf.mxu0
  %v363 = vadd.f32 %v89, %v362
  %v364 = vpop.f32.mrf.mxu0
  %365 = vmatprep.mubr.f32.mxu0 0.0
  %366 = vmatmul.mubr.f32.gmra.mxu0 %v56
  %v367 = vpop.f32.mrf.mxu0
  %v368 = vadd.f32 %v89, %v367
  %v369 = vpop.f32.mrf.mxu0
  %370 = vmatprep.mubr.f32.mxu0 0.0
  %371 = vmatmul.mubr.f32.gmra.mxu0 %v57
  %v372 = vpop.f32.mrf.mxu0
  %v373 = vadd.f32 %v89, %v372
  %v374 = vpop.f32.mrf.mxu0
  %375 = vmatprep.mubr.f32.mxu0 0.0
  %376 = vmatmul.mubr.f32.gmra.mxu0 %v58
  %v377 = vpop.f32.mrf.mxu0
  %v378 = vadd.f32 %v89, %v377
  %v379 = vpop.f32.mrf.mxu0
  %380 = vmatprep.mubr.f32.mxu0 0.0
  %381 = vmatmul.mubr.f32.gmra.mxu0 %v59
  %v382 = vpop.f32.mrf.mxu0
  %v383 = vadd.f32 %v89, %v382
  %v384 = vpop.f32.mrf.mxu0
  %385 = vmatprep.mubr.f32.mxu0 0.0
  %386 = vmatmul.mubr.f32.gmra.mxu0 %v60
  %v387 = vpop.f32.mrf.mxu0
  %v388 = vadd.f32 %v89, %v387
  %v389 = vpop.f32.mrf.mxu0
  %390 = vmatprep.mubr.f32.mxu0 0.0
  %391 = vmatmul.mubr.f32.gmra.mxu0 %v61
  %v392 = vpop.f32.mrf.mxu0
  %v393 = vadd.f32 %v89, %v392
  %v394 = vpop.f32.mrf.mxu0
  %395 = vmatprep.mubr.f32.mxu0 0.0
  %396 = vmatmul.mubr.f32.gmra.mxu0 %v62
  %v397 = vpop.f32.mrf.mxu0
  %v398 = vadd.f32 %v89, %v397
  %v399 = vpop.f32.mrf.mxu0
  %400 = vmatprep.mubr.f32.mxu0 0.0
  %401 = vmatmul.mubr.f32.gmra.mxu0 %v63
  %v402 = vpop.f32.mrf.mxu0
  %v403 = vadd.f32 %v89, %v402
  %v404 = vpop.f32.mrf.mxu0
  %405 = vmatprep.mubr.f32.mxu0 0.0
  %406 = vmatmul.mubr.f32.gmra.mxu0 %v64
  %v407 = vpop.f32.mrf.mxu0
  %v408 = vadd.f32 %v89, %v407
  %v409 = vpop.f32.mrf.mxu0
  %410 = vmatprep.mubr.f32.mxu0 0.0
  %411 = vmatmul.mubr.f32.gmra.mxu0 %v65
  %v412 = vpop.f32.mrf.mxu0
  %v413 = vadd.f32 %v89, %v412
  %v414 = vpop.f32.mrf.mxu0
  %415 = vmatprep.mubr.f32.mxu0 0.0
  %416 = vmatmul.mubr.f32.gmra.mxu0 %v66
  %v417 = vpop.f32.mrf.mxu0
  %v418 = vadd.f32 %v89, %v417
  %v419 = vpop.f32.mrf.mxu0
  %420 = vmatprep.mubr.f32.mxu0 0.0
  %421 = vmatmul.mubr.f32.gmra.mxu0 %v67
  %v422 = vpop.f32.mrf.mxu0
  %v423 = vadd.f32 %v89, %v422
  %v424 = vpop.f32.mrf.mxu0
  %425 = vdwg.mxu0
  %v426 = vadd.f32 %v158, 3.0
  %v427 = vadd.f32 %v163, 3.0
  %v428 = vadd.f32 %v168, 3.0
  %v429 = vadd.f32 %v173, 3.0
  %v430 = vadd.f32 %v178, 3.0
  %v431 = vadd.f32 %v183, 3.0
  %v432 = vadd.f32 %v188, 3.0
  %v433 = vadd.f32 %v193, 3.0
  %v434 = vadd.f32 %v198, 3.0
  %v435 = vadd.f32 %v203, 3.0
  %v436 = vadd.f32 %v208, 3.0
  %v437 = vadd.f32 %v213, 3.0
  %v438 = vadd.f32 %v218, 3.0
  %v439 = vadd.f32 %v223, 3.0
  %v440 = vadd.f32 %v228, 3.0
  %v441 = vadd.f32 %v233, 3.0
  %v442 = vadd.f32 %v238, 3.0
  %v443 = vadd.f32 %v243, 3.0
  %v444 = vadd.f32 %v248, 3.0
  %v445 = vadd.f32 %v253, 3.0
  %v446 = vadd.f32 %v258, 3.0
  %v447 = vadd.f32 %v263, 3.0
  %v448 = vadd.f32 %v268, 3.0
  %v449 = vadd.f32 %v273, 3.0
  %v450 = vadd.f32 %v278, 3.0
  %v451 = vadd.f32 %v283, 3.0
  %v452 = vadd.f32 %v288, 3.0
  %v453 = vadd.f32 %v293, 3.0
  %v454 = vadd.f32 %v298, 3.0
  %v455 = vadd.f32 %v303, 3.0
  %v456 = vadd.f32 %v308, 3.0
  %v457 = vadd.f32 %v313, 3.0
  %v458 = vadd.f32 %v318, 3.0
  %v459 = vadd.f32 %v323, 3.0
  %v460 = vadd.f32 %v328, 3.0
  %v461 = vadd.f32 %v333, 3.0
  %v462 = vadd.f32 %v338, 3.0
  %v463 = vadd.f32 %v343, 3.0
  %v464 = vadd.f32 %v348, 3.0
  %v465 = vadd.f32 %v353, 3.0
  %v466 = vadd.f32 %v358, 3.0
  %v467 = vadd.f32 %v363, 3.0
  %v468 = vadd.f32 %v368, 3.0
  %v469 = vadd.f32 %v373, 3.0
  %v470 = vadd.f32 %v378, 3.0
  %v471 = vadd.f32 %v383, 3.0
  %v472 = vadd.f32 %v388, 3.0
  %v473 = vadd.f32 %v393, 3.0
  %v474 = vadd.f32 %v398, 3.0
  %v475 = vadd.f32 %v403, 3.0
  %v476 = vadd.f32 %v408, 3.0
  %v477 = vadd.f32 %v413, 3.0
  %v478 = vadd.f32 %v418, 3.0
  %v479 = vadd.f32 %v423, 3.0
  %v480 = vmax.f32 %v426, 0.0
  %v481 = vmax.f32 %v427, 0.0
  %v482 = vmax.f32 %v428, 0.0
  %v483 = vmax.f32 %v429, 0.0
  %v484 = vmax.f32 %v430, 0.0
  %v485 = vmax.f32 %v431, 0.0
  %v486 = vmax.f32 %v432, 0.0
  %v487 = vmax.f32 %v433, 0.0
  %v488 = vmax.f32 %v434, 0.0
  %v489 = vmax.f32 %v435, 0.0
  %v490 = vmax.f32 %v436, 0.0
  %v491 = vmax.f32 %v437, 0.0
  %v492 = vmax.f32 %v438, 0.0
  %v493 = vmax.f32 %v439, 0.0
  %v494 = vmax.f32 %v440, 0.0
  %v495 = vmax.f32 %v441, 0.0
  %v496 = vmax.f32 %v442, 0.0
  %v497 = vmax.f32 %v443, 0.0
  %v498 = vmax.f32 %v444, 0.0
  %v499 = vmax.f32 %v445, 0.0
  %v500 = vmax.f32 %v446, 0.0
  %v501 = vmax.f32 %v447, 0.0
  %v502 = vmax.f32 %v448, 0.0
  %v503 = vmax.f32 %v449, 0.0
  %v504 = vmax.f32 %v450, 0.0
  %v505 = vmax.f32 %v451, 0.0
  %v506 = vmax.f32 %v452, 0.0
  %v507 = vmax.f32 %v453, 0.0
  %v508 = vmax.f32 %v454, 0.0
  %v509 = vmax.f32 %v455, 0.0
  %v510 = vmax.f32 %v456, 0.0
  %v511 = vmax.f32 %v457, 0.0
  %v512 = vmax.f32 %v458, 0.0
  %v513 = vmax.f32 %v459, 0.0
  %v514 = vmax.f32 %v460, 0.0
  %v515 = vmax.f32 %v461, 0.0
  %v516 = vmax.f32 %v462, 0.0
  %v517 = vmax.f32 %v463, 0.0
  %v518 = vmax.f32 %v464, 0.0
  %v519 = vmax.f32 %v465, 0.0
  %v520 = vmax.f32 %v466, 0.0
  %v521 = vmax.f32 %v467, 0.0
  %v522 = vmax.f32 %v468, 0.0
  %v523 = vmax.f32 %v469, 0.0
  %v524 = vmax.f32 %v470, 0.0
  %v525 = vmax.f32 %v471, 0.0
  %v526 = vmax.f32 %v472, 0.0
  %v527 = vmax.f32 %v473, 0.0
  %v528 = vmax.f32 %v474, 0.0
  %v529 = vmax.f32 %v475, 0.0
  %v530 = vmax.f32 %v476, 0.0
  %v531 = vmax.f32 %v477, 0.0
  %v532 = vmax.f32 %v478, 0.0
  %v533 = vmax.f32 %v479, 0.0
  %v534 = vmin.f32 %v480, 6.0
  %v535 = vmin.f32 %v481, 6.0
  %v536 = vmin.f32 %v482, 6.0
  %v537 = vmin.f32 %v483, 6.0
  %v538 = vmin.f32 %v484, 6.0
  %v539 = vmin.f32 %v485, 6.0
  %v540 = vmin.f32 %v486, 6.0
  %v541 = vmin.f32 %v487, 6.0
  %v542 = vmin.f32 %v488, 6.0
  %v543 = vmin.f32 %v489, 6.0
  %v544 = vmin.f32 %v490, 6.0
  %v545 = vmin.f32 %v491, 6.0
  %v546 = vmin.f32 %v492, 6.0
  %v547 = vmin.f32 %v493, 6.0
  %v548 = vmin.f32 %v494, 6.0
  %v549 = vmin.f32 %v495, 6.0
  %v550 = vmin.f32 %v496, 6.0
  %v551 = vmin.f32 %v497, 6.0
  %v552 = vmin.f32 %v498, 6.0
  %v553 = vmin.f32 %v499, 6.0
  %v554 = vmin.f32 %v500, 6.0
  %v555 = vmin.f32 %v501, 6.0
  %v556 = vmin.f32 %v502, 6.0
  %v557 = vmin.f32 %v503, 6.0
  %v558 = vmin.f32 %v504, 6.0
  %v559 = vmin.f32 %v505, 6.0
  %v560 = vmin.f32 %v506, 6.0
  %v561 = vmin.f32 %v507, 6.0
  %v562 = vmin.f32 %v508, 6.0
  %v563 = vmin.f32 %v509, 6.0
  %v564 = vmin.f32 %v510, 6.0
  %v565 = vmin.f32 %v511, 6.0
  %v566 = vmin.f32 %v512, 6.0
  %v567 = vmin.f32 %v513, 6.0
  %v568 = vmin.f32 %v514, 6.0
  %v569 = vmin.f32 %v515, 6.0
  %v570 = vmin.f32 %v516, 6.0
  %v571 = vmin.f32 %v517, 6.0
  %v572 = vmin.f32 %v518, 6.0
  %v573 = vmin.f32 %v519, 6.0
  %v574 = vmin.f32 %v520, 6.0
  %v575 = vmin.f32 %v521, 6.0
  %v576 = vmin.f32 %v522, 6.0
  %v577 = vmin.f32 %v523, 6.0
  %v578 = vmin.f32 %v524, 6.0
  %v579 = vmin.f32 %v525, 6.0
  %v580 = vmin.f32 %v526, 6.0
  %v581 = vmin.f32 %v527, 6.0
  %v582 = vmin.f32 %v528, 6.0
  %v583 = vmin.f32 %v529, 6.0
  %v584 = vmin.f32 %v530, 6.0
  %v585 = vmin.f32 %v531, 6.0
  %v586 = vmin.f32 %v532, 6.0
  %v587 = vmin.f32 %v533, 6.0
  %v588 = vmul.f32 %v158, %v534
  %v589 = vmul.f32 %v163, %v535
  %v590 = vmul.f32 %v168, %v536
  %v591 = vmul.f32 %v173, %v537
  %v592 = vmul.f32 %v178, %v538
  %v593 = vmul.f32 %v183, %v539
  %v594 = vmul.f32 %v188, %v540
  %v595 = vmul.f32 %v193, %v541
  %v596 = vmul.f32 %v198, %v542
  %v597 = vmul.f32 %v203, %v543
  %v598 = vmul.f32 %v208, %v544
  %v599 = vmul.f32 %v213, %v545
  %v600 = vmul.f32 %v218, %v546
  %v601 = vmul.f32 %v223, %v547
  %v602 = vmul.f32 %v228, %v548
  %v603 = vmul.f32 %v233, %v549
  %v604 = vmul.f32 %v238, %v550
  %v605 = vmul.f32 %v243, %v551
  %v606 = vmul.f32 %v248, %v552
  %v607 = vmul.f32 %v253, %v553
  %v608 = vmul.f32 %v258, %v554
  %v609 = vmul.f32 %v263, %v555
  %v610 = vmul.f32 %v268, %v556
  %v611 = vmul.f32 %v273, %v557
  %v612 = vmul.f32 %v278, %v558
  %v613 = vmul.f32 %v283, %v559
  %v614 = vmul.f32 %v288, %v560
  %v615 = vmul.f32 %v293, %v561
  %v616 = vmul.f32 %v298, %v562
  %v617 = vmul.f32 %v303, %v563
  %v618 = vmul.f32 %v308, %v564
  %v619 = vmul.f32 %v313, %v565
  %v620 = vmul.f32 %v318, %v566
  %v621 = vmul.f32 %v323, %v567
  %v622 = vmul.f32 %v328, %v568
  %v623 = vmul.f32 %v333, %v569
  %v624 = vmul.f32 %v338, %v570
  %v625 = vmul.f32 %v343, %v571
  %v626 = vmul.f32 %v348, %v572
  %v627 = vmul.f32 %v353, %v573
  %v628 = vmul.f32 %v358, %v574
  %v629 = vmul.f32 %v363, %v575
  %v630 = vmul.f32 %v368, %v576
  %v631 = vmul.f32 %v373, %v577
  %v632 = vmul.f32 %v378, %v578
  %v633 = vmul.f32 %v383, %v579
  %v634 = vmul.f32 %v388, %v580
  %v635 = vmul.f32 %v393, %v581
  %v636 = vmul.f32 %v398, %v582
  %v637 = vmul.f32 %v403, %v583
  %v638 = vmul.f32 %v408, %v584
  %v639 = vmul.f32 %v413, %v585
  %v640 = vmul.f32 %v418, %v586
  %v641 = vmul.f32 %v423, %v587
  %v642 = vmul.f32 %v588, 0.16666667
  %v643 = vmul.f32 %v589, 0.16666667
  %v644 = vmul.f32 %v590, 0.16666667
  %v645 = vmul.f32 %v591, 0.16666667
  %v646 = vmul.f32 %v592, 0.16666667
  %v647 = vmul.f32 %v593, 0.16666667
  %v648 = vmul.f32 %v594, 0.16666667
  %v649 = vmul.f32 %v595, 0.16666667
  %v650 = vmul.f32 %v596, 0.16666667
  %v651 = vmul.f32 %v597, 0.16666667
  %v652 = vmul.f32 %v598, 0.16666667
  %v653 = vmul.f32 %v599, 0.16666667
  %v654 = vmul.f32 %v600, 0.16666667
  %v655 = vmul.f32 %v601, 0.16666667
  %v656 = vmul.f32 %v602, 0.16666667
  %v657 = vmul.f32 %v603, 0.16666667
  %v658 = vmul.f32 %v604, 0.16666667
  %v659 = vmul.f32 %v605, 0.16666667
  %v660 = vmul.f32 %v606, 0.16666667
  %v661 = vmul.f32 %v607, 0.16666667
  %v662 = vmul.f32 %v608, 0.16666667
  %v663 = vmul.f32 %v609, 0.16666667
  %v664 = vmul.f32 %v610, 0.16666667
  %v665 = vmul.f32 %v611, 0.16666667
  %v666 = vmul.f32 %v612, 0.16666667
  %v667 = vmul.f32 %v613, 0.16666667
  %v668 = vmul.f32 %v614, 0.16666667
  %v669 = vmul.f32 %v615, 0.16666667
  %v670 = vmul.f32 %v616, 0.16666667
  %v671 = vmul.f32 %v617, 0.16666667
  %v672 = vmul.f32 %v618, 0.16666667
  %v673 = vmul.f32 %v619, 0.16666667
  %v674 = vmul.f32 %v620, 0.16666667
  %v675 = vmul.f32 %v621, 0.16666667
  %v676 = vmul.f32 %v622, 0.16666667
  %v677 = vmul.f32 %v623, 0.16666667
  %v678 = vmul.f32 %v624, 0.16666667
  %v679 = vmul.f32 %v625, 0.16666667
  %v680 = vmul.f32 %v626, 0.16666667
  %v681 = vmul.f32 %v627, 0.16666667
  %v682 = vmul.f32 %v628, 0.16666667
  %v683 = vmul.f32 %v629, 0.16666667
  %v684 = vmul.f32 %v630, 0.16666667
  %v685 = vmul.f32 %v631, 0.16666667
  %v686 = vmul.f32 %v632, 0.16666667
  %v687 = vmul.f32 %v633, 0.16666667
  %v688 = vmul.f32 %v634, 0.16666667
  %v689 = vmul.f32 %v635, 0.16666667
  %v690 = vmul.f32 %v636, 0.16666667
  %v691 = vmul.f32 %v637, 0.16666667
  %v692 = vmul.f32 %v638, 0.16666667
  %v693 = vmul.f32 %v639, 0.16666667
  %v694 = vmul.f32 %v640, 0.16666667
  %v695 = vmul.f32 %v641, 0.16666667
  %696 = vst [vmem:[%s3] sm:$0xff] %v642
  %697 = vst [vmem:[%s3 + $0x8] sm:$0xff] %v643
  %698 = vst [vmem:[%s3 + $0x10] sm:$0xff] %v644
  %699 = vst [vmem:[%s3 + $0x18] sm:$0xff] %v645
  %700 = vst [vmem:[%s3 + $0x20] sm:$0xff] %v646
  %701 = vst [vmem:[%s3 + $0x28] sm:$0xff] %v647
  %702 = vst [vmem:[%s3 + $0x30] sm:$0xff] %v648
  %703 = vst [vmem:[%s3 + $0x38] sm:$0xff] %v649
  %704 = vst [vmem:[%s3 + $0x40] sm:$0xff] %v650
  %705 = vst [vmem:[%s3 + $0x48] sm:$0xff] %v651
  %706 = vst [vmem:[%s3 + $0x50] sm:$0xff] %v652
  %707 = vst [vmem:[%s3 + $0x58] sm:$0xff] %v653
  %708 = vst [vmem:[%s3 + $0x60] sm:$0xff] %v654
  %709 = vst [vmem:[%s3 + $0x68] sm:$0xff] %v655
  %710 = vst [vmem:[%s3 + $0x70] sm:$0xff] %v656
  %711 = vst [vmem:[%s3 + $0x78] sm:$0xff] %v657
  %712 = vst [vmem:[%s3 + $0x80] sm:$0xff] %v658
  %713 = vst [vmem:[%s3 + $0x88] sm:$0xff] %v659
  %714 = vst [vmem:[%s3 + $0x90] sm:$0xff] %v660
  %715 = vst [vmem:[%s3 + $0x98] sm:$0xff] %v661
  %716 = vst [vmem:[%s3 + $0xa0] sm:$0xff] %v662
  %717 = vst [vmem:[%s3 + $0xa8] sm:$0xff] %v663
  %718 = vst [vmem:[%s3 + $0xb0] sm:$0xff] %v664
  %719 = vst [vmem:[%s3 + $0xb8] sm:$0xff] %v665
  %720 = vst [vmem:[%s3 + $0xc0] sm:$0xff] %v666
  %721 = vst [vmem:[%s3 + $0xc8] sm:$0xff] %v667
  %722 = vst [vmem:[%s3 + $0xd0] sm:$0xff] %v668
  %723 = vst [vmem:[%s3 + $0xd8] sm:$0xff] %v669
  %724 = vst [vmem:[%s3 + $0xe0] sm:$0xff] %v670
  %725 = vst [vmem:[%s3 + $0xe8] sm:$0xff] %v671
  %726 = vst [vmem:[%s3 + $0xf0] sm:$0xff] %v672
  %727 = vst [vmem:[%s3 + $0xf8] sm:$0xff] %v673
  %728 = vst [vmem:[%s3 + $0x100] sm:$0xff] %v674
  %729 = vst [vmem:[%s3 + $0x108] sm:$0xff] %v675
  %730 = vst [vmem:[%s3 + $0x110] sm:$0xff] %v676
  %731 = vst [vmem:[%s3 + $0x118] sm:$0xff] %v677
  %732 = vst [vmem:[%s3 + $0x120] sm:$0xff] %v678
  %733 = vst [vmem:[%s3 + $0x128] sm:$0xff] %v679
  %734 = vst [vmem:[%s3 + $0x130] sm:$0xff] %v680
  %735 = vst [vmem:[%s3 + $0x138] sm:$0xff] %v681
  %736 = vst [vmem:[%s3 + $0x140] sm:$0xff] %v682
  %737 = vst [vmem:[%s3 + $0x148] sm:$0xff] %v683
  %738 = vst [vmem:[%s3 + $0x150] sm:$0xff] %v684
  %739 = vst [vmem:[%s3 + $0x158] sm:$0xff] %v685
  %740 = vst [vmem:[%s3 + $0x160] sm:$0xff] %v686
  %741 = vst [vmem:[%s3 + $0x168] sm:$0xff] %v687
  %742 = vst [vmem:[%s3 + $0x170] sm:$0xff] %v688
  %743 = vst [vmem:[%s3 + $0x178] sm:$0xff] %v689
  %744 = vst [vmem:[%s3 + $0x180] sm:$0xff] %v690
  %745 = vst [vmem:[%s3 + $0x188] sm:$0xff] %v691
  %746 = vst [vmem:[%s3 + $0x190] sm:$0xff] %v692
  %747 = vst [vmem:[%s3 + $0x198] sm:$0xff] %v693
  %748 = vst [vmem:[%s3 + $0x1a0] sm:$0xff] %v694
  %749 = vst [vmem:[%s3 + $0x1a8] sm:$0xff] %v695
  // Predicated region
  $region14: #{model_forward.2} parent=0 // pred_check
    _
  $region15: #{model_forward.2} parent=0 // pred_check_branch
    %751 = sbr.rel (0) target = $region17
  $region16: #{model_forward.2} parent=0 // pred_region
    _
  $region17: #{model_forward.2} parent=0 // pred_fallthru
    _
  // Predicated region
  $region18: #{model_forward.2} parent=0 // pred_check
    _
  $region19: #{model_forward.2} parent=0 // pred_check_branch
    %753 = sbr.rel (0) target = $region21
  $region20: #{model_forward.2} parent=0 // pred_region
    _
  $region21: #{model_forward.2} parent=0 // pred_fallthru
    _

// kernel: model_forward.3
$region0: #{model_forward.3}
  #allocation0 [shape = 'u32[]', space=smem, size = 0x4, offset = 0x4, fixed_abs, tag = 'smem constant byte address 0x4 - core index']
  #allocation1 [shape = 'u32[144,128]{1,0:T(1,128)}', space=vmem, size = 0x12000, scoped, tag = 'internal scratch']
  %s0 = inlined_call_operand.vmem [shape: f32[1,1480,64], index: 0, kind: input, shape index: {}]
  %s1 = inlined_call_operand.vmem [shape: f32[64,128], index: 1, kind: input, shape index: {}]
  %s2 = inlined_call_operand.vmem [shape: f32[1,128], index: 2, kind: input, shape index: {}]
  %s3 = inlined_call_operand.vmem [shape: f32[1,1480,128], index: 3, kind: output, shape index: {}]
  %s4 = sld [smem:[#allocation0]]
  $region22: #{model_forward.3} parent=0
    _
  %s6 = ssub.s32 1, %s4
  %s7 = scalar_select 0, %s6, %s4
  // Predicated region
  $region2: #{model_forward.3} parent=0 // pred_check
    _
  $region3: #{model_forward.3} parent=0 // pred_check_branch
    %9 = sbr.rel (0) target = $region5
  $region4: #{model_forward.3} parent=0 // pred_region
    _
  $region5: #{model_forward.3} parent=0 // pred_fallthru
    _
  // Predicated region
  $region6: #{model_forward.3} parent=0 // pred_check
    _
  $region7: #{model_forward.3} parent=0 // pred_check_branch
    %11 = sbr.rel (0) target = $region9
  $region8: #{model_forward.3} parent=0 // pred_region
    _
  $region9: #{model_forward.3} parent=0 // pred_fallthru
    _
  // Predicated region
  $region10: #{model_forward.3} parent=0 // pred_check
    _
  $region11: #{model_forward.3} parent=0 // pred_check_branch
    %13 = sbr.rel (0) target = $region13
  $region12: #{model_forward.3} parent=0 // pred_region
    _
  $region13: #{model_forward.3} parent=0 // pred_fallthru
    _
  %v14 = vld [vmem:[%s0] sm:$0xff]
  %v15 = vld [vmem:[%s0 + $0x8] sm:$0xff]
  %v16 = vld [vmem:[%s0 + $0x10] sm:$0xff]
  %v17 = vld [vmem:[%s0 + $0x18] sm:$0xff]
  %v18 = vld [vmem:[%s0 + $0x20] sm:$0xff]
  %v19 = vld [vmem:[%s0 + $0x28] sm:$0xff]
  %v20 = vld [vmem:[%s0 + $0x30] sm:$0xff]
  %v21 = vld [vmem:[%s0 + $0x38] sm:$0xff]
  %v22 = vld [vmem:[%s0 + $0x40] sm:$0xff]
  %v23 = vld [vmem:[%s0 + $0x48] sm:$0xff]
  %v24 = vld [vmem:[%s0 + $0x50] sm:$0xff]
  %v25 = vld [vmem:[%s0 + $0x58] sm:$0xff]
  %v26 = vld [vmem:[%s0 + $0x60] sm:$0xff]
  %v27 = vld [vmem:[%s0 + $0x68] sm:$0xff]
  %v28 = vld [vmem:[%s0 + $0x70] sm:$0xff]
  %v29 = vld [vmem:[%s0 + $0x78] sm:$0xff]
  %v30 = vld [vmem:[%s0 + $0x80] sm:$0xff]
  %v31 = vld [vmem:[%s0 + $0x88] sm:$0xff]
  %v32 = vld [vmem:[%s0 + $0x90] sm:$0xff]
  %v33 = vld [vmem:[%s0 + $0x98] sm:$0xff]
  %v34 = vld [vmem:[%s0 + $0xa0] sm:$0xff]
  %v35 = vld [vmem:[%s0 + $0xa8] sm:$0xff]
  %v36 = vld [vmem:[%s0 + $0xb0] sm:$0xff]
  %v37 = vld [vmem:[%s0 + $0xb8] sm:$0xff]
  %v38 = vld [vmem:[%s0 + $0xc0] sm:$0xff]
  %v39 = vld [vmem:[%s0 + $0xc8] sm:$0xff]
  %v40 = vld [vmem:[%s0 + $0xd0] sm:$0xff]
  %v41 = vld [vmem:[%s0 + $0xd8] sm:$0xff]
  %v42 = vld [vmem:[%s0 + $0xe0] sm:$0xff]
  %v43 = vld [vmem:[%s0 + $0xe8] sm:$0xff]
  %v44 = vld [vmem:[%s0 + $0xf0] sm:$0xff]
  %v45 = vld [vmem:[%s0 + $0xf8] sm:$0xff]
  %v46 = vld [vmem:[%s0 + $0x100] sm:$0xff]
  %v47 = vld [vmem:[%s0 + $0x108] sm:$0xff]
  %v48 = vld [vmem:[%s0 + $0x110] sm:$0xff]
  %v49 = vld [vmem:[%s0 + $0x118] sm:$0xff]
  %v50 = vld [vmem:[%s0 + $0x120] sm:$0xff]
  %v51 = vld [vmem:[%s0 + $0x128] sm:$0xff]
  %v52 = vld [vmem:[%s0 + $0x130] sm:$0xff]
  %v53 = vld [vmem:[%s0 + $0x138] sm:$0xff]
  %v54 = vld [vmem:[%s0 + $0x140] sm:$0xff]
  %v55 = vld [vmem:[%s0 + $0x148] sm:$0xff]
  %v56 = vld [vmem:[%s0 + $0x150] sm:$0xff]
  %v57 = vld [vmem:[%s0 + $0x158] sm:$0xff]
  %v58 = vld [vmem:[%s0 + $0x160] sm:$0xff]
  %v59 = vld [vmem:[%s0 + $0x168] sm:$0xff]
  %v60 = vld [vmem:[%s0 + $0x170] sm:$0xff]
  %v61 = vld [vmem:[%s0 + $0x178] sm:$0xff]
  %v62 = vld [vmem:[%s0 + $0x180] sm:$0xff]
  %v63 = vld [vmem:[%s0 + $0x188] sm:$0xff]
  %v64 = vld [vmem:[%s0 + $0x190] sm:$0xff]
  %v65 = vld [vmem:[%s0 + $0x198] sm:$0xff]
  %v66 = vld [vmem:[%s0 + $0x1a0] sm:$0xff]
  %v67 = vld [vmem:[%s0 + $0x1a8] sm:$0xff]
  %v68 = vld [vmem:[%s0 + $0x1b0] sm:$0xff]
  %v69 = vld [vmem:[%s0 + $0x1b8] sm:$0xff]
  %v70 = vld [vmem:[%s0 + $0x1c0] sm:$0xff]
  %v71 = vld [vmem:[%s0 + $0x1c8] sm:$0xff]
  %v72 = vld [vmem:[%s0 + $0x1d0] sm:$0xff]
  %v73 = vld [vmem:[%s0 + $0x1d8] sm:$0xff]
  %v74 = vld [vmem:[%s0 + $0x1e0] sm:$0xff]
  %v75 = vld [vmem:[%s0 + $0x1e8] sm:$0xff]
  %v76 = vld [vmem:[%s0 + $0x1f0] sm:$0xff]
  %v77 = vld [vmem:[%s0 + $0x1f8] sm:$0xff]
  %v78 = vld [vmem:[%s0 + $0x200] sm:$0xff]
  %v79 = vld [vmem:[%s0 + $0x208] sm:$0xff]
  %v80 = vld [vmem:[%s0 + $0x210] sm:$0xff]
  %v81 = vld [vmem:[%s0 + $0x218] sm:$0xff]
  %v82 = vld [vmem:[%s0 + $0x220] sm:$0xff]
  %v83 = vld [vmem:[%s0 + $0x228] sm:$0xff]
  %v84 = vld [vmem:[%s0 + $0x230] sm:$0xff]
  %v85 = vld [vmem:[%s0 + $0x238] sm:$0xff]
  %v86 = vld [vmem:[%s0 + $0x240] sm:$0xff]
  %v87 = vld [vmem:[%s0 + $0x248] sm:$0xff]
  %v88 = vld [vmem:[%s0 + $0x250] sm:$0xff]
  %v89 = vld [vmem:[%s0 + $0x258] sm:$0xff]
  %v90 = vld [vmem:[%s0 + $0x260] sm:$0xff]
  %v91 = vld [vmem:[%s0 + $0x268] sm:$0xff]
  %v92 = vld [vmem:[%s0 + $0x270] sm:$0xff]
  %v93 = vld [vmem:[%s0 + $0x278] sm:$0xff]
  %v94 = vld [vmem:[%s0 + $0x280] sm:$0xff]
  %v95 = vld [vmem:[%s0 + $0x288] sm:$0xff]
  %v96 = vld [vmem:[%s0 + $0x290] sm:$0xff]
  %v97 = vld [vmem:[%s0 + $0x298] sm:$0xff]
  %v98 = vld [vmem:[%s0 + $0x2a0] sm:$0xff]
  %v99 = vld [vmem:[%s0 + $0x2a8] sm:$0xff]
  %v100 = vld [vmem:[%s0 + $0x2b0] sm:$0xff]
  %v101 = vld [vmem:[%s0 + $0x2b8] sm:$0xff]
  %v102 = vld [vmem:[%s0 + $0x2c0] sm:$0xff]
  %v103 = vld [vmem:[%s0 + $0x2c8] sm:$0xff]
  %v104 = vld [vmem:[%s0 + $0x2d0] sm:$0xff]
  %v105 = vld [vmem:[%s0 + $0x2d8] sm:$0xff]
  %v106 = vld [vmem:[%s0 + $0x2e0] sm:$0xff]
  %v107 = vld [vmem:[%s0 + $0x2e8] sm:$0xff]
  %v108 = vld [vmem:[%s0 + $0x2f0] sm:$0xff]
  %v109 = vld [vmem:[%s0 + $0x2f8] sm:$0xff]
  %v110 = vld [vmem:[%s0 + $0x300] sm:$0xff]
  %v111 = vld [vmem:[%s0 + $0x308] sm:$0xff]
  %v112 = vld [vmem:[%s0 + $0x310] sm:$0xff]
  %v113 = vld [vmem:[%s0 + $0x318] sm:$0xff]
  %v114 = vld [vmem:[%s0 + $0x320] sm:$0xff]
  %v115 = vld [vmem:[%s0 + $0x328] sm:$0xff]
  %v116 = vld [vmem:[%s0 + $0x330] sm:$0xff]
  %v117 = vld [vmem:[%s0 + $0x338] sm:$0xff]
  %v118 = vld [vmem:[%s0 + $0x340] sm:$0xff]
  %v119 = vld [vmem:[%s0 + $0x348] sm:$0xff]
  %v120 = vld [vmem:[%s0 + $0x350] sm:$0xff]
  %v121 = vld [vmem:[%s0 + $0x358] sm:$0xff]
  %v122 = vld [vmem:[%s0 + $0x360] sm:$0xff]
  %v123 = vld [vmem:[%s0 + $0x368] sm:$0xff]
  %v124 = vld [vmem:[%s0 + $0x370] sm:$0xff]
  %v125 = vld [vmem:[%s0 + $0x378] sm:$0xff]
  %v126 = vld [vmem:[%s0 + $0x380] sm:$0xff]
  %v127 = vld [vmem:[%s0 + $0x388] sm:$0xff]
  %v128 = vld [vmem:[%s0 + $0x390] sm:$0xff]
  %v129 = vld [vmem:[%s0 + $0x398] sm:$0xff]
  %v130 = vld [vmem:[%s0 + $0x3a0] sm:$0xff]
  %v131 = vld [vmem:[%s0 + $0x3a8] sm:$0xff]
  %v132 = vld [vmem:[%s0 + $0x3b0] sm:$0xff]
  %v133 = vld [vmem:[%s0 + $0x3b8] sm:$0xff]
  %v134 = vld [vmem:[%s0 + $0x3c0] sm:$0xff]
  %v135 = vld [vmem:[%s0 + $0x3c8] sm:$0xff]
  %v136 = vld [vmem:[%s0 + $0x3d0] sm:$0xff]
  %v137 = vld [vmem:[%s0 + $0x3d8] sm:$0xff]
  %v138 = vld [vmem:[%s0 + $0x3e0] sm:$0xff]
  %v139 = vld [vmem:[%s0 + $0x3e8] sm:$0xff]
  %v140 = vld [vmem:[%s0 + $0x3f0] sm:$0xff]
  %v141 = vld [vmem:[%s0 + $0x3f8] sm:$0xff]
  %v142 = vld [vmem:[%s0 + $0x400] sm:$0xff]
  %v143 = vld [vmem:[%s0 + $0x408] sm:$0xff]
  %v144 = vld [vmem:[%s0 + $0x410] sm:$0xff]
  %v145 = vld [vmem:[%s0 + $0x418] sm:$0xff]
  %v146 = vld [vmem:[%s0 + $0x420] sm:$0xff]
  %v147 = vld [vmem:[%s0 + $0x428] sm:$0xff]
  %v148 = vld [vmem:[%s0 + $0x430] sm:$0xff]
  %v149 = vld [vmem:[%s0 + $0x438] sm:$0xff]
  %v150 = vld [vmem:[%s0 + $0x440] sm:$0xff]
  %v151 = vld [vmem:[%s0 + $0x448] sm:$0xff]
  %v152 = vld [vmem:[%s0 + $0x450] sm:$0xff]
  %v153 = vld [vmem:[%s0 + $0x458] sm:$0xff]
  %v154 = vld [vmem:[%s0 + $0x460] sm:$0xff]
  %v155 = vld [vmem:[%s0 + $0x468] sm:$0xff]
  %v156 = vld [vmem:[%s0 + $0x470] sm:$0xff]
  %v157 = vld [vmem:[%s0 + $0x478] sm:$0xff]
  %v158 = vld [vmem:[%s0 + $0x480] sm:$0xff]
  %v159 = vld [vmem:[%s0 + $0x488] sm:$0xff]
  %v160 = vld [vmem:[%s0 + $0x490] sm:$0xff]
  %v161 = vld [vmem:[%s0 + $0x498] sm:$0xff]
  %v162 = vld [vmem:[%s0 + $0x4a0] sm:$0xff]
  %v163 = vld [vmem:[%s0 + $0x4a8] sm:$0xff]
  %v164 = vld [vmem:[%s0 + $0x4b0] sm:$0xff]
  %v165 = vld [vmem:[%s0 + $0x4b8] sm:$0xff]
  %v166 = vld [vmem:[%s0 + $0x4c0] sm:$0xff]
  %v167 = vld [vmem:[%s0 + $0x4c8] sm:$0xff]
  %v168 = vld [vmem:[%s0 + $0x4d0] sm:$0xff]
  %v169 = vld [vmem:[%s0 + $0x4d8] sm:$0xff]
  %v170 = vld [vmem:[%s0 + $0x4e0] sm:$0xff]
  %v171 = vld [vmem:[%s0 + $0x4e8] sm:$0xff]
  %v172 = vld [vmem:[%s0 + $0x4f0] sm:$0xff]
  %v173 = vld [vmem:[%s0 + $0x4f8] sm:$0xff]
  %v174 = vld [vmem:[%s0 + $0x500] sm:$0xff]
  %v175 = vld [vmem:[%s0 + $0x508] sm:$0xff]
  %v176 = vld [vmem:[%s0 + $0x510] sm:$0xff]
  %v177 = vld [vmem:[%s0 + $0x518] sm:$0xff]
  %v178 = vld [vmem:[%s0 + $0x520] sm:$0xff]
  %v179 = vld [vmem:[%s0 + $0x528] sm:$0xff]
  %v180 = vld [vmem:[%s0 + $0x530] sm:$0xff]
  %v181 = vld [vmem:[%s0 + $0x538] sm:$0xff]
  %v182 = vld [vmem:[%s0 + $0x540] sm:$0xff]
  %v183 = vld [vmem:[%s0 + $0x548] sm:$0xff]
  %v184 = vld [vmem:[%s0 + $0x550] sm:$0xff]
  %v185 = vld [vmem:[%s0 + $0x558] sm:$0xff]
  %v186 = vld [vmem:[%s0 + $0x560] sm:$0xff]
  %v187 = vld [vmem:[%s0 + $0x568] sm:$0xff]
  %v188 = vld [vmem:[%s0 + $0x570] sm:$0xff]
  %v189 = vld [vmem:[%s0 + $0x578] sm:$0xff]
  %v190 = vld [vmem:[%s0 + $0x580] sm:$0xff]
  %v191 = vld [vmem:[%s0 + $0x588] sm:$0xff]
  %v192 = vld [vmem:[%s0 + $0x590] sm:$0xff]
  %v193 = vld [vmem:[%s0 + $0x598] sm:$0xff]
  %v194 = vld [vmem:[%s0 + $0x5a0] sm:$0xff]
  %v195 = vld [vmem:[%s0 + $0x5a8] sm:$0xff]
  %v196 = vld [vmem:[%s0 + $0x5b0] sm:$0xff]
  %v197 = vld [vmem:[%s0 + $0x5b8] sm:$0xff]
  %v198 = vld [vmem:[%s0 + $0x5c0] sm:$0xff]
  %v199 = vld [vmem:[%s1] sm:$0xff]
  %v200 = vld [vmem:[%s1 + $0x8] sm:$0xff]
  %v201 = vld [vmem:[%s1 + $0x10] sm:$0xff]
  %v202 = vld [vmem:[%s1 + $0x18] sm:$0xff]
  %v203 = vld [vmem:[%s1 + $0x20] sm:$0xff]
  %v204 = vld [vmem:[%s1 + $0x28] sm:$0xff]
  %v205 = vld [vmem:[%s1 + $0x30] sm:$0xff]
  %v206 = vld [vmem:[%s1 + $0x38] sm:$0xff]
  %v207 = vld [vmem:[%s2] sm:$0x1]
  %v209 = vlaneseq
  %v210 = vshrl.u32 %v209, 7
  %v211 = vsub.s32 0, %v210
  %v212 = vrot.slane %v207, %v211
  %vm214 = vcmask 523264
  %v216 = vsel %vm214, %v14, 0
  %v219 = vsel %vm214, %v15, 0
  %v222 = vsel %vm214, %v16, 0
  %v225 = vsel %vm214, %v17, 0
  %v228 = vsel %vm214, %v18, 0
  %v231 = vsel %vm214, %v19, 0
  %v234 = vsel %vm214, %v20, 0
  %v237 = vsel %vm214, %v21, 0
  %v240 = vsel %vm214, %v22, 0
  %v243 = vsel %vm214, %v23, 0
  %v246 = vsel %vm214, %v24, 0
  %v249 = vsel %vm214, %v25, 0
  %v252 = vsel %vm214, %v26, 0
  %v255 = vsel %vm214, %v27, 0
  %v258 = vsel %vm214, %v28, 0
  %v261 = vsel %vm214, %v29, 0
  %v264 = vsel %vm214, %v30, 0
  %v267 = vsel %vm214, %v31, 0
  %v270 = vsel %vm214, %v32, 0
  %v273 = vsel %vm214, %v33, 0
  %v276 = vsel %vm214, %v34, 0
  %v279 = vsel %vm214, %v35, 0
  %v282 = vsel %vm214, %v36, 0
  %v285 = vsel %vm214, %v37, 0
  %v288 = vsel %vm214, %v38, 0
  %v291 = vsel %vm214, %v39, 0
  %v294 = vsel %vm214, %v40, 0
  %v297 = vsel %vm214, %v41, 0
  %v300 = vsel %vm214, %v42, 0
  %v303 = vsel %vm214, %v43, 0
  %v306 = vsel %vm214, %v44, 0
  %v309 = vsel %vm214, %v45, 0
  %v312 = vsel %vm214, %v46, 0
  %v315 = vsel %vm214, %v47, 0
  %v318 = vsel %vm214, %v48, 0
  %v321 = vsel %vm214, %v49, 0
  %v324 = vsel %vm214, %v50, 0
  %v327 = vsel %vm214, %v51, 0
  %v330 = vsel %vm214, %v52, 0
  %v333 = vsel %vm214, %v53, 0
  %v336 = vsel %vm214, %v54, 0
  %v339 = vsel %vm214, %v55, 0
  %v342 = vsel %vm214, %v56, 0
  %v345 = vsel %vm214, %v57, 0
  %v348 = vsel %vm214, %v58, 0
  %v351 = vsel %vm214, %v59, 0
  %v354 = vsel %vm214, %v60, 0
  %v357 = vsel %vm214, %v61, 0
  %v360 = vsel %vm214, %v62, 0
  %v363 = vsel %vm214, %v63, 0
  %v366 = vsel %vm214, %v64, 0
  %v369 = vsel %vm214, %v65, 0
  %v372 = vsel %vm214, %v66, 0
  %v375 = vsel %vm214, %v67, 0
  %v378 = vsel %vm214, %v68, 0
  %v381 = vsel %vm214, %v69, 0
  %v384 = vsel %vm214, %v70, 0
  %v387 = vsel %vm214, %v71, 0
  %v390 = vsel %vm214, %v72, 0
  %v393 = vsel %vm214, %v73, 0
  %v396 = vsel %vm214, %v74, 0
  %v399 = vsel %vm214, %v75, 0
  %v402 = vsel %vm214, %v76, 0
  %v405 = vsel %vm214, %v77, 0
  %v408 = vsel %vm214, %v78, 0
  %v411 = vsel %vm214, %v79, 0
  %v414 = vsel %vm214, %v80, 0
  %v417 = vsel %vm214, %v81, 0
  %v420 = vsel %vm214, %v82, 0
  %v423 = vsel %vm214, %v83, 0
  %v426 = vsel %vm214, %v84, 0
  %v429 = vsel %vm214, %v85, 0
  %v432 = vsel %vm214, %v86, 0
  %v435 = vsel %vm214, %v87, 0
  %v438 = vsel %vm214, %v88, 0
  %v441 = vsel %vm214, %v89, 0
  %v444 = vsel %vm214, %v90, 0
  %v447 = vsel %vm214, %v91, 0
  %v450 = vsel %vm214, %v92, 0
  %v453 = vsel %vm214, %v93, 0
  %v456 = vsel %vm214, %v94, 0
  %v459 = vsel %vm214, %v95, 0
  %v462 = vsel %vm214, %v96, 0
  %v465 = vsel %vm214, %v97, 0
  %v468 = vsel %vm214, %v98, 0
  %v471 = vsel %vm214, %v99, 0
  %v474 = vsel %vm214, %v100, 0
  %v477 = vsel %vm214, %v101, 0
  %v480 = vsel %vm214, %v102, 0
  %v483 = vsel %vm214, %v103, 0
  %v486 = vsel %vm214, %v104, 0
  %v489 = vsel %vm214, %v105, 0
  %v492 = vsel %vm214, %v106, 0
  %v495 = vsel %vm214, %v107, 0
  %v498 = vsel %vm214, %v108, 0
  %v501 = vsel %vm214, %v109, 0
  %v504 = vsel %vm214, %v110, 0
  %v507 = vsel %vm214, %v111, 0
  %v510 = vsel %vm214, %v112, 0
  %v513 = vsel %vm214, %v113, 0
  %v516 = vsel %vm214, %v114, 0
  %v519 = vsel %vm214, %v115, 0
  %v522 = vsel %vm214, %v116, 0
  %v525 = vsel %vm214, %v117, 0
  %v528 = vsel %vm214, %v118, 0
  %v531 = vsel %vm214, %v119, 0
  %v534 = vsel %vm214, %v120, 0
  %v537 = vsel %vm214, %v121, 0
  %v540 = vsel %vm214, %v122, 0
  %v543 = vsel %vm214, %v123, 0
  %v546 = vsel %vm214, %v124, 0
  %v549 = vsel %vm214, %v125, 0
  %v552 = vsel %vm214, %v126, 0
  %v555 = vsel %vm214, %v127, 0
  %v558 = vsel %vm214, %v128, 0
  %v561 = vsel %vm214, %v129, 0
  %v564 = vsel %vm214, %v130, 0
  %v567 = vsel %vm214, %v131, 0
  %v570 = vsel %vm214, %v132, 0
  %v573 = vsel %vm214, %v133, 0
  %v576 = vsel %vm214, %v134, 0
  %v579 = vsel %vm214, %v135, 0
  %v582 = vsel %vm214, %v136, 0
  %v585 = vsel %vm214, %v137, 0
  %v588 = vsel %vm214, %v138, 0
  %v591 = vsel %vm214, %v139, 0
  %v594 = vsel %vm214, %v140, 0
  %v597 = vsel %vm214, %v141, 0
  %v600 = vsel %vm214, %v142, 0
  %v603 = vsel %vm214, %v143, 0
  %v606 = vsel %vm214, %v144, 0
  %v609 = vsel %vm214, %v145, 0
  %v612 = vsel %vm214, %v146, 0
  %v615 = vsel %vm214, %v147, 0
  %v618 = vsel %vm214, %v148, 0
  %v621 = vsel %vm214, %v149, 0
  %v624 = vsel %vm214, %v150, 0
  %v627 = vsel %vm214, %v151, 0
  %v630 = vsel %vm214, %v152, 0
  %v633 = vsel %vm214, %v153, 0
  %v636 = vsel %vm214, %v154, 0
  %v639 = vsel %vm214, %v155, 0
  %v642 = vsel %vm214, %v156, 0
  %v645 = vsel %vm214, %v157, 0
  %v648 = vsel %vm214, %v158, 0
  %v651 = vsel %vm214, %v159, 0
  %v654 = vsel %vm214, %v160, 0
  %v657 = vsel %vm214, %v161, 0
  %v660 = vsel %vm214, %v162, 0
  %v663 = vsel %vm214, %v163, 0
  %v666 = vsel %vm214, %v164, 0
  %v669 = vsel %vm214, %v165, 0
  %v672 = vsel %vm214, %v166, 0
  %v675 = vsel %vm214, %v167, 0
  %v678 = vsel %vm214, %v168, 0
  %v681 = vsel %vm214, %v169, 0
  %v684 = vsel %vm214, %v170, 0
  %v687 = vsel %vm214, %v171, 0
  %v690 = vsel %vm214, %v172, 0
  %v693 = vsel %vm214, %v173, 0
  %v696 = vsel %vm214, %v174, 0
  %v699 = vsel %vm214, %v175, 0
  %v702 = vsel %vm214, %v176, 0
  %v705 = vsel %vm214, %v177, 0
  %v708 = vsel %vm214, %v178, 0
  %v711 = vsel %vm214, %v179, 0
  %v714 = vsel %vm214, %v180, 0
  %v717 = vsel %vm214, %v181, 0
  %v720 = vsel %vm214, %v182, 0
  %v723 = vsel %vm214, %v183, 0
  %v726 = vsel %vm214, %v184, 0
  %v729 = vsel %vm214, %v185, 0
  %v732 = vsel %vm214, %v186, 0
  %v735 = vsel %vm214, %v187, 0
  %v738 = vsel %vm214, %v188, 0
  %v741 = vsel %vm214, %v189, 0
  %v744 = vsel %vm214, %v190, 0
  %v747 = vsel %vm214, %v191, 0
  %v750 = vsel %vm214, %v192, 0
  %v753 = vsel %vm214, %v193, 0
  %v756 = vsel %vm214, %v194, 0
  %v759 = vsel %vm214, %v195, 0
  %v762 = vsel %vm214, %v196, 0
  %v765 = vsel %vm214, %v197, 0
  %v768 = vsel %vm214, %v198, 0
  %770 = vmatprep.subr.mxu0 0.0
  %771 = vmatpush1.msra.mxu0 0.0
  %772 = vmatprep.subr.mxu0 0.0
  %773 = vmatpush1.msra.mxu0 0.0
  %774 = vmatprep.subr.mxu0 0.0
  %775 = vmatpush1.msra.mxu0 0.0
  %776 = vmatprep.subr.mxu0 0.0
  %777 = vmatpush1.msra.mxu0 0.0
  %778 = vmatprep.subr.mxu0 0.0
  %779 = vmatpush1.msra.mxu0 0.0
  %780 = vmatprep.subr.mxu0 0.0
  %781 = vmatpush1.msra.mxu0 0.0
  %782 = vmatprep.subr.mxu0 0.0
  %783 = vmatpush1.msra.mxu0 0.0
  %784 = vmatprep.subr.mxu0 0.0
  %785 = vmatpush1.msra.mxu0 0.0
  %786 = vmatprep.subr.mxu0 0.0
  %787 = vmatpush1.msra.mxu0 %v206
  %788 = vmatprep.subr.mxu0 0.0
  %789 = vmatpush1.msra.mxu0 %v205
  %790 = vmatprep.subr.mxu0 0.0
  %791 = vmatpush1.msra.mxu0 %v204
  %792 = vmatprep.subr.mxu0 0.0
  %793 = vmatpush1.msra.mxu0 %v203
  %794 = vmatprep.subr.mxu0 0.0
  %795 = vmatpush1.msra.mxu0 %v202
  %796 = vmatprep.subr.mxu0 0.0
  %797 = vmatpush1.msra.mxu0 %v201
  %798 = vmatprep.subr.mxu0 0.0
  %799 = vmatpush1.msra.mxu0 %v200
  %800 = vmatprep.subr.mxu0 0.0
  %801 = vmatpush1.msra.mxu0 %v199
  %802 = vmatprep.subr.mxu0 0.0
  %803 = vmatpush2.msra.mxu0 0.0
  %804 = vmatprep.subr.mxu0 0.0
  %805 = vmatpush2.msra.mxu0 0.0
  %806 = vmatprep.subr.mxu0 0.0
  %807 = vmatpush2.msra.mxu0 0.0
  %808 = vmatprep.subr.mxu0 0.0
  %809 = vmatpush2.msra.mxu0 0.0
  %810 = vmatprep.subr.mxu0 0.0
  %811 = vmatpush2.msra.mxu0 0.0
  %812 = vmatprep.subr.mxu0 0.0
  %813 = vmatpush2.msra.mxu0 0.0
  %814 = vmatprep.subr.mxu0 0.0
  %815 = vmatpush2.msra.mxu0 0.0
  %816 = vmatprep.subr.mxu0 0.0
  %817 = vmatpush2.msra.mxu0 0.0
  %818 = vmatprep.subr.mxu0 0.0
  %819 = vmatpush2.msra.mxu0 0.0
  %820 = vmatprep.subr.mxu0 0.0
  %821 = vmatpush2.msra.mxu0 0.0
  %822 = vmatprep.subr.mxu0 0.0
  %823 = vmatpush2.msra.mxu0 0.0
  %824 = vmatprep.subr.mxu0 0.0
  %825 = vmatpush2.msra.mxu0 0.0
  %826 = vmatprep.subr.mxu0 0.0
  %827 = vmatpush2.msra.mxu0 0.0
  %828 = vmatprep.subr.mxu0 0.0
  %829 = vmatpush2.msra.mxu0 0.0
  %830 = vmatprep.subr.mxu0 0.0
  %831 = vmatpush2.msra.mxu0 0.0
  %832 = vmatprep.subr.mxu0 0.0
  %833 = vmatpush2.msra.mxu0 0.0
  %834 = vmatprep.mubr.f32.mxu0 0.0
  %835 = vmatmul.mubr.f32.gmra.mxu0 %v216
  %v836 = vpop.f32.mrf.mxu0
  %v837 = vadd.f32 %v212, %v836
  %v838 = vpop.f32.mrf.mxu0
  %839 = vmatprep.mubr.f32.mxu0 0.0
  %840 = vmatmul.mubr.f32.gmra.mxu0 %v219
  %v841 = vpop.f32.mrf.mxu0
  %v842 = vadd.f32 %v212, %v841
  %v843 = vpop.f32.mrf.mxu0
  %844 = vmatprep.mubr.f32.mxu0 0.0
  %845 = vmatmul.mubr.f32.gmra.mxu0 %v222
  %v846 = vpop.f32.mrf.mxu0
  %v847 = vadd.f32 %v212, %v846
  %v848 = vpop.f32.mrf.mxu0
  %849 = vmatprep.mubr.f32.mxu0 0.0
  %850 = vmatmul.mubr.f32.gmra.mxu0 %v225
  %v851 = vpop.f32.mrf.mxu0
  %v852 = vadd.f32 %v212, %v851
  %v853 = vpop.f32.mrf.mxu0
  %854 = vmatprep.mubr.f32.mxu0 0.0
  %855 = vmatmul.mubr.f32.gmra.mxu0 %v228
  %v856 = vpop.f32.mrf.mxu0
  %v857 = vadd.f32 %v212, %v856
  %v858 = vpop.f32.mrf.mxu0
  %859 = vmatprep.mubr.f32.mxu0 0.0
  %860 = vmatmul.mubr.f32.gmra.mxu0 %v231
  %v861 = vpop.f32.mrf.mxu0
  %v862 = vadd.f32 %v212, %v861
  %v863 = vpop.f32.mrf.mxu0
  %864 = vmatprep.mubr.f32.mxu0 0.0
  %865 = vmatmul.mubr.f32.gmra.mxu0 %v234
  %v866 = vpop.f32.mrf.mxu0
  %v867 = vadd.f32 %v212, %v866
  %v868 = vpop.f32.mrf.mxu0
  %869 = vmatprep.mubr.f32.mxu0 0.0
  %870 = vmatmul.mubr.f32.gmra.mxu0 %v237
  %v871 = vpop.f32.mrf.mxu0
  %v872 = vadd.f32 %v212, %v871
  %v873 = vpop.f32.mrf.mxu0
  %874 = vmatprep.mubr.f32.mxu0 0.0
  %875 = vmatmul.mubr.f32.gmra.mxu0 %v240
  %v876 = vpop.f32.mrf.mxu0
  %v877 = vadd.f32 %v212, %v876
  %v878 = vpop.f32.mrf.mxu0
  %879 = vmatprep.mubr.f32.mxu0 0.0
  %880 = vmatmul.mubr.f32.gmra.mxu0 %v243
  %v881 = vpop.f32.mrf.mxu0
  %v882 = vadd.f32 %v212, %v881
  %v883 = vpop.f32.mrf.mxu0
  %884 = vmatprep.mubr.f32.mxu0 0.0
  %885 = vmatmul.mubr.f32.gmra.mxu0 %v246
  %v886 = vpop.f32.mrf.mxu0
  %v887 = vadd.f32 %v212, %v886
  %v888 = vpop.f32.mrf.mxu0
  %889 = vmatprep.mubr.f32.mxu0 0.0
  %890 = vmatmul.mubr.f32.gmra.mxu0 %v249
  %v891 = vpop.f32.mrf.mxu0
  %v892 = vadd.f32 %v212, %v891
  %v893 = vpop.f32.mrf.mxu0
  %894 = vmatprep.mubr.f32.mxu0 0.0
  %895 = vmatmul.mubr.f32.gmra.mxu0 %v252
  %v896 = vpop.f32.mrf.mxu0
  %v897 = vadd.f32 %v212, %v896
  %v898 = vpop.f32.mrf.mxu0
  %899 = vmatprep.mubr.f32.mxu0 0.0
  %900 = vmatmul.mubr.f32.gmra.mxu0 %v255
  %v901 = vpop.f32.mrf.mxu0
  %v902 = vadd.f32 %v212, %v901
  %v903 = vpop.f32.mrf.mxu0
  %904 = vmatprep.mubr.f32.mxu0 0.0
  %905 = vmatmul.mubr.f32.gmra.mxu0 %v258
  %v906 = vpop.f32.mrf.mxu0
  %v907 = vadd.f32 %v212, %v906
  %v908 = vpop.f32.mrf.mxu0
  %909 = vmatprep.mubr.f32.mxu0 0.0
  %910 = vmatmul.mubr.f32.gmra.mxu0 %v261
  %v911 = vpop.f32.mrf.mxu0
  %v912 = vadd.f32 %v212, %v911
  %v913 = vpop.f32.mrf.mxu0
  %914 = vmatprep.mubr.f32.mxu0 0.0
  %915 = vmatmul.mubr.f32.gmra.mxu0 %v264
  %v916 = vpop.f32.mrf.mxu0
  %v917 = vadd.f32 %v212, %v916
  %v918 = vpop.f32.mrf.mxu0
  %919 = vmatprep.mubr.f32.mxu0 0.0
  %920 = vmatmul.mubr.f32.gmra.mxu0 %v267
  %v921 = vpop.f32.mrf.mxu0
  %v922 = vadd.f32 %v212, %v921
  %v923 = vpop.f32.mrf.mxu0
  %924 = vmatprep.mubr.f32.mxu0 0.0
  %925 = vmatmul.mubr.f32.gmra.mxu0 %v270
  %v926 = vpop.f32.mrf.mxu0
  %v927 = vadd.f32 %v212, %v926
  %v928 = vpop.f32.mrf.mxu0
  %929 = vmatprep.mubr.f32.mxu0 0.0
  %930 = vmatmul.mubr.f32.gmra.mxu0 %v273
  %v931 = vpop.f32.mrf.mxu0
  %v932 = vadd.f32 %v212, %v931
  %v933 = vpop.f32.mrf.mxu0
  %934 = vmatprep.mubr.f32.mxu0 0.0
  %935 = vmatmul.mubr.f32.gmra.mxu0 %v276
  %v936 = vpop.f32.mrf.mxu0
  %v937 = vadd.f32 %v212, %v936
  %v938 = vpop.f32.mrf.mxu0
  %939 = vmatprep.mubr.f32.mxu0 0.0
  %940 = vmatmul.mubr.f32.gmra.mxu0 %v279
  %v941 = vpop.f32.mrf.mxu0
  %v942 = vadd.f32 %v212, %v941
  %v943 = vpop.f32.mrf.mxu0
  %944 = vmatprep.mubr.f32.mxu0 0.0
  %945 = vmatmul.mubr.f32.gmra.mxu0 %v282
  %v946 = vpop.f32.mrf.mxu0
  %v947 = vadd.f32 %v212, %v946
  %v948 = vpop.f32.mrf.mxu0
  %949 = vmatprep.mubr.f32.mxu0 0.0
  %950 = vmatmul.mubr.f32.gmra.mxu0 %v285
  %v951 = vpop.f32.mrf.mxu0
  %v952 = vadd.f32 %v212, %v951
  %v953 = vpop.f32.mrf.mxu0
  %954 = vmatprep.mubr.f32.mxu0 0.0
  %955 = vmatmul.mubr.f32.gmra.mxu0 %v288
  %v956 = vpop.f32.mrf.mxu0
  %v957 = vadd.f32 %v212, %v956
  %v958 = vpop.f32.mrf.mxu0
  %959 = vmatprep.mubr.f32.mxu0 0.0
  %960 = vmatmul.mubr.f32.gmra.mxu0 %v291
  %v961 = vpop.f32.mrf.mxu0
  %v962 = vadd.f32 %v212, %v961
  %v963 = vpop.f32.mrf.mxu0
  %964 = vmatprep.mubr.f32.mxu0 0.0
  %965 = vmatmul.mubr.f32.gmra.mxu0 %v294
  %v966 = vpop.f32.mrf.mxu0
  %v967 = vadd.f32 %v212, %v966
  %v968 = vpop.f32.mrf.mxu0
  %969 = vmatprep.mubr.f32.mxu0 0.0
  %970 = vmatmul.mubr.f32.gmra.mxu0 %v297
  %v971 = vpop.f32.mrf.mxu0
  %v972 = vadd.f32 %v212, %v971
  %v973 = vpop.f32.mrf.mxu0
  %974 = vmatprep.mubr.f32.mxu0 0.0
  %975 = vmatmul.mubr.f32.gmra.mxu0 %v300
  %v976 = vpop.f32.mrf.mxu0
  %v977 = vadd.f32 %v212, %v976
  %v978 = vpop.f32.mrf.mxu0
  %979 = vmatprep.mubr.f32.mxu0 0.0
  %980 = vmatmul.mubr.f32.gmra.mxu0 %v303
  %v981 = vpop.f32.mrf.mxu0
  %v982 = vadd.f32 %v212, %v981
  %v983 = vpop.f32.mrf.mxu0
  %984 = vmatprep.mubr.f32.mxu0 0.0
  %985 = vmatmul.mubr.f32.gmra.mxu0 %v306
  %v986 = vpop.f32.mrf.mxu0
  %v987 = vadd.f32 %v212, %v986
  %v988 = vpop.f32.mrf.mxu0
  %989 = vmatprep.mubr.f32.mxu0 0.0
  %990 = vmatmul.mubr.f32.gmra.mxu0 %v309
  %v991 = vpop.f32.mrf.mxu0
  %v992 = vadd.f32 %v212, %v991
  %v993 = vpop.f32.mrf.mxu0
  %994 = vmatprep.mubr.f32.mxu0 0.0
  %995 = vmatmul.mubr.f32.gmra.mxu0 %v312
  %v996 = vpop.f32.mrf.mxu0
  %v997 = vadd.f32 %v212, %v996
  %v998 = vpop.f32.mrf.mxu0
  %999 = vmatprep.mubr.f32.mxu0 0.0
  %1000 = vmatmul.mubr.f32.gmra.mxu0 %v315
  %v1001 = vpop.f32.mrf.mxu0
  %v1002 = vadd.f32 %v212, %v1001
  %v1003 = vpop.f32.mrf.mxu0
  %1004 = vmatprep.mubr.f32.mxu0 0.0
  %1005 = vmatmul.mubr.f32.gmra.mxu0 %v318
  %v1006 = vpop.f32.mrf.mxu0
  %v1007 = vadd.f32 %v212, %v1006
  %v1008 = vpop.f32.mrf.mxu0
  %1009 = vmatprep.mubr.f32.mxu0 0.0
  %1010 = vmatmul.mubr.f32.gmra.mxu0 %v321
  %v1011 = vpop.f32.mrf.mxu0
  %v1012 = vadd.f32 %v212, %v1011
  %v1013 = vpop.f32.mrf.mxu0
  %1014 = vmatprep.mubr.f32.mxu0 0.0
  %1015 = vmatmul.mubr.f32.gmra.mxu0 %v324
  %v1016 = vpop.f32.mrf.mxu0
  %v1017 = vadd.f32 %v212, %v1016
  %v1018 = vpop.f32.mrf.mxu0
  %1019 = vmatprep.mubr.f32.mxu0 0.0
  %1020 = vmatmul.mubr.f32.gmra.mxu0 %v327
  %v1021 = vpop.f32.mrf.mxu0
  %v1022 = vadd.f32 %v212, %v1021
  %v1023 = vpop.f32.mrf.mxu0
  %1024 = vmatprep.mubr.f32.mxu0 0.0
  %1025 = vmatmul.mubr.f32.gmra.mxu0 %v330
  %v1026 = vpop.f32.mrf.mxu0
  %v1027 = vadd.f32 %v212, %v1026
  %v1028 = vpop.f32.mrf.mxu0
  %1029 = vmatprep.mubr.f32.mxu0 0.0
  %1030 = vmatmul.mubr.f32.gmra.mxu0 %v333
  %v1031 = vpop.f32.mrf.mxu0
  %v1032 = vadd.f32 %v212, %v1031
  %v1033 = vpop.f32.mrf.mxu0
  %1034 = vmatprep.mubr.f32.mxu0 0.0
  %1035 = vmatmul.mubr.f32.gmra.mxu0 %v336
  %v1036 = vpop.f32.mrf.mxu0
  %v1037 = vadd.f32 %v212, %v1036
  %v1038 = vpop.f32.mrf.mxu0
  %1039 = vmatprep.mubr.f32.mxu0 0.0
  %1040 = vmatmul.mubr.f32.gmra.mxu0 %v339
  %v1041 = vpop.f32.mrf.mxu0
  %v1042 = vadd.f32 %v212, %v1041
  %v1043 = vpop.f32.mrf.mxu0
  %1044 = vmatprep.mubr.f32.mxu0 0.0
  %1045 = vmatmul.mubr.f32.gmra.mxu0 %v342
  %v1046 = vpop.f32.mrf.mxu0
  %v1047 = vadd.f32 %v212, %v1046
  %v1048 = vpop.f32.mrf.mxu0
  %1049 = vmatprep.mubr.f32.mxu0 0.0
  %1050 = vmatmul.mubr.f32.gmra.mxu0 %v345
  %v1051 = vpop.f32.mrf.mxu0
  %v1052 = vadd.f32 %v212, %v1051
  %v1053 = vpop.f32.mrf.mxu0
  %1054 = vmatprep.mubr.f32.mxu0 0.0
  %1055 = vmatmul.mubr.f32.gmra.mxu0 %v348
  %v1056 = vpop.f32.mrf.mxu0
  %v1057 = vadd.f32 %v212, %v1056
  %v1058 = vpop.f32.mrf.mxu0
  %1059 = vmatprep.mubr.f32.mxu0 0.0
  %1060 = vmatmul.mubr.f32.gmra.mxu0 %v351
  %v1061 = vpop.f32.mrf.mxu0
  %v1062 = vadd.f32 %v212, %v1061
  %v1063 = vpop.f32.mrf.mxu0
  %1064 = vmatprep.mubr.f32.mxu0 0.0
  %1065 = vmatmul.mubr.f32.gmra.mxu0 %v354
  %v1066 = vpop.f32.mrf.mxu0
  %v1067 = vadd.f32 %v212, %v1066
  %v1068 = vpop.f32.mrf.mxu0
  %1069 = vmatprep.mubr.f32.mxu0 0.0
  %1070 = vmatmul.mubr.f32.gmra.mxu0 %v357
  %v1071 = vpop.f32.mrf.mxu0
  %v1072 = vadd.f32 %v212, %v1071
  %v1073 = vpop.f32.mrf.mxu0
  %1074 = vmatprep.mubr.f32.mxu0 0.0
  %1075 = vmatmul.mubr.f32.gmra.mxu0 %v360
  %v1076 = vpop.f32.mrf.mxu0
  %v1077 = vadd.f32 %v212, %v1076
  %v1078 = vpop.f32.mrf.mxu0
  %1079 = vmatprep.mubr.f32.mxu0 0.0
  %1080 = vmatmul.mubr.f32.gmra.mxu0 %v363
  %v1081 = vpop.f32.mrf.mxu0
  %v1082 = vadd.f32 %v212, %v1081
  %v1083 = vpop.f32.mrf.mxu0
  %1084 = vmatprep.mubr.f32.mxu0 0.0
  %1085 = vmatmul.mubr.f32.gmra.mxu0 %v366
  %v1086 = vpop.f32.mrf.mxu0
  %v1087 = vadd.f32 %v212, %v1086
  %v1088 = vpop.f32.mrf.mxu0
  %1089 = vmatprep.mubr.f32.mxu0 0.0
  %1090 = vmatmul.mubr.f32.gmra.mxu0 %v369
  %v1091 = vpop.f32.mrf.mxu0
  %v1092 = vadd.f32 %v212, %v1091
  %v1093 = vpop.f32.mrf.mxu0
  %1094 = vmatprep.mubr.f32.mxu0 0.0
  %1095 = vmatmul.mubr.f32.gmra.mxu0 %v372
  %v1096 = vpop.f32.mrf.mxu0
  %v1097 = vadd.f32 %v212, %v1096
  %v1098 = vpop.f32.mrf.mxu0
  %1099 = vmatprep.mubr.f32.mxu0 0.0
  %1100 = vmatmul.mubr.f32.gmra.mxu0 %v375
  %v1101 = vpop.f32.mrf.mxu0
  %v1102 = vadd.f32 %v212, %v1101
  %v1103 = vpop.f32.mrf.mxu0
  %1104 = vmatprep.mubr.f32.mxu0 0.0
  %1105 = vmatmul.mubr.f32.gmra.mxu0 %v378
  %v1106 = vpop.f32.mrf.mxu0
  %v1107 = vadd.f32 %v212, %v1106
  %v1108 = vpop.f32.mrf.mxu0
  %1109 = vmatprep.mubr.f32.mxu0 0.0
  %1110 = vmatmul.mubr.f32.gmra.mxu0 %v381
  %v1111 = vpop.f32.mrf.mxu0
  %v1112 = vadd.f32 %v212, %v1111
  %v1113 = vpop.f32.mrf.mxu0
  %1114 = vmatprep.mubr.f32.mxu0 0.0
  %1115 = vmatmul.mubr.f32.gmra.mxu0 %v384
  %v1116 = vpop.f32.mrf.mxu0
  %v1117 = vadd.f32 %v212, %v1116
  %v1118 = vpop.f32.mrf.mxu0
  %1119 = vmatprep.mubr.f32.mxu0 0.0
  %1120 = vmatmul.mubr.f32.gmra.mxu0 %v387
  %v1121 = vpop.f32.mrf.mxu0
  %v1122 = vadd.f32 %v212, %v1121
  %v1123 = vpop.f32.mrf.mxu0
  %1124 = vmatprep.mubr.f32.mxu0 0.0
  %1125 = vmatmul.mubr.f32.gmra.mxu0 %v390
  %v1126 = vpop.f32.mrf.mxu0
  %v1127 = vadd.f32 %v212, %v1126
  %v1128 = vpop.f32.mrf.mxu0
  %1129 = vmatprep.mubr.f32.mxu0 0.0
  %1130 = vmatmul.mubr.f32.gmra.mxu0 %v393
  %v1131 = vpop.f32.mrf.mxu0
  %v1132 = vadd.f32 %v212, %v1131
  %v1133 = vpop.f32.mrf.mxu0
  %1134 = vmatprep.mubr.f32.mxu0 0.0
  %1135 = vmatmul.mubr.f32.gmra.mxu0 %v396
  %v1136 = vpop.f32.mrf.mxu0
  %v1137 = vadd.f32 %v212, %v1136
  %v1138 = vpop.f32.mrf.mxu0
  %1139 = vmatprep.mubr.f32.mxu0 0.0
  %1140 = vmatmul.mubr.f32.gmra.mxu0 %v399
  %v1141 = vpop.f32.mrf.mxu0
  %v1142 = vadd.f32 %v212, %v1141
  %v1143 = vpop.f32.mrf.mxu0
  %1144 = vmatprep.mubr.f32.mxu0 0.0
  %1145 = vmatmul.mubr.f32.gmra.mxu0 %v402
  %v1146 = vpop.f32.mrf.mxu0
  %v1147 = vadd.f32 %v212, %v1146
  %v1148 = vpop.f32.mrf.mxu0
  %1149 = vmatprep.mubr.f32.mxu0 0.0
  %1150 = vmatmul.mubr.f32.gmra.mxu0 %v405
  %v1151 = vpop.f32.mrf.mxu0
  %v1152 = vadd.f32 %v212, %v1151
  %v1153 = vpop.f32.mrf.mxu0
  %1154 = vmatprep.mubr.f32.mxu0 0.0
  %1155 = vmatmul.mubr.f32.gmra.mxu0 %v408
  %v1156 = vpop.f32.mrf.mxu0
  %v1157 = vadd.f32 %v212, %v1156
  %v1158 = vpop.f32.mrf.mxu0
  %1159 = vmatprep.mubr.f32.mxu0 0.0
  %1160 = vmatmul.mubr.f32.gmra.mxu0 %v411
  %v1161 = vpop.f32.mrf.mxu0
  %v1162 = vadd.f32 %v212, %v1161
  %v1163 = vpop.f32.mrf.mxu0
  %1164 = vmatprep.mubr.f32.mxu0 0.0
  %1165 = vmatmul.mubr.f32.gmra.mxu0 %v414
  %v1166 = vpop.f32.mrf.mxu0
  %v1167 = vadd.f32 %v212, %v1166
  %v1168 = vpop.f32.mrf.mxu0
  %1169 = vmatprep.mubr.f32.mxu0 0.0
  %1170 = vmatmul.mubr.f32.gmra.mxu0 %v417
  %v1171 = vpop.f32.mrf.mxu0
  %v1172 = vadd.f32 %v212, %v1171
  %v1173 = vpop.f32.mrf.mxu0
  %1174 = vmatprep.mubr.f32.mxu0 0.0
  %1175 = vmatmul.mubr.f32.gmra.mxu0 %v420
  %v1176 = vpop.f32.mrf.mxu0
  %v1177 = vadd.f32 %v212, %v1176
  %v1178 = vpop.f32.mrf.mxu0
  %1179 = vmatprep.mubr.f32.mxu0 0.0
  %1180 = vmatmul.mubr.f32.gmra.mxu0 %v423
  %v1181 = vpop.f32.mrf.mxu0
  %v1182 = vadd.f32 %v212, %v1181
  %v1183 = vpop.f32.mrf.mxu0
  %1184 = vmatprep.mubr.f32.mxu0 0.0
  %1185 = vmatmul.mubr.f32.gmra.mxu0 %v426
  %v1186 = vpop.f32.mrf.mxu0
  %v1187 = vadd.f32 %v212, %v1186
  %v1188 = vpop.f32.mrf.mxu0
  %1189 = vmatprep.mubr.f32.mxu0 0.0
  %1190 = vmatmul.mubr.f32.gmra.mxu0 %v429
  %v1191 = vpop.f32.mrf.mxu0
  %v1192 = vadd.f32 %v212, %v1191
  %v1193 = vpop.f32.mrf.mxu0
  %1194 = vmatprep.mubr.f32.mxu0 0.0
  %1195 = vmatmul.mubr.f32.gmra.mxu0 %v432
  %v1196 = vpop.f32.mrf.mxu0
  %v1197 = vadd.f32 %v212, %v1196
  %v1198 = vpop.f32.mrf.mxu0
  %1199 = vmatprep.mubr.f32.mxu0 0.0
  %1200 = vmatmul.mubr.f32.gmra.mxu0 %v435
  %v1201 = vpop.f32.mrf.mxu0
  %v1202 = vadd.f32 %v212, %v1201
  %v1203 = vpop.f32.mrf.mxu0
  %1204 = vmatprep.mubr.f32.mxu0 0.0
  %1205 = vmatmul.mubr.f32.gmra.mxu0 %v438
  %v1206 = vpop.f32.mrf.mxu0
  %v1207 = vadd.f32 %v212, %v1206
  %v1208 = vpop.f32.mrf.mxu0
  %1209 = vmatprep.mubr.f32.mxu0 0.0
  %1210 = vmatmul.mubr.f32.gmra.mxu0 %v441
  %v1211 = vpop.f32.mrf.mxu0
  %v1212 = vadd.f32 %v212, %v1211
  %v1213 = vpop.f32.mrf.mxu0
  %1214 = vmatprep.mubr.f32.mxu0 0.0
  %1215 = vmatmul.mubr.f32.gmra.mxu0 %v444
  %v1216 = vpop.f32.mrf.mxu0
  %v1217 = vadd.f32 %v212, %v1216
  %v1218 = vpop.f32.mrf.mxu0
  %1219 = vmatprep.mubr.f32.mxu0 0.0
  %1220 = vmatmul.mubr.f32.gmra.mxu0 %v447
  %v1221 = vpop.f32.mrf.mxu0
  %v1222 = vadd.f32 %v212, %v1221
  %v1223 = vpop.f32.mrf.mxu0
  %1224 = vmatprep.mubr.f32.mxu0 0.0
  %1225 = vmatmul.mubr.f32.gmra.mxu0 %v450
  %v1226 = vpop.f32.mrf.mxu0
  %v1227 = vadd.f32 %v212, %v1226
  %v1228 = vpop.f32.mrf.mxu0
  %1229 = vmatprep.mubr.f32.mxu0 0.0
  %1230 = vmatmul.mubr.f32.gmra.mxu0 %v453
  %v1231 = vpop.f32.mrf.mxu0
  %v1232 = vadd.f32 %v212, %v1231
  %v1233 = vpop.f32.mrf.mxu0
  %1234 = vmatprep.mubr.f32.mxu0 0.0
  %1235 = vmatmul.mubr.f32.gmra.mxu0 %v456
  %v1236 = vpop.f32.mrf.mxu0
  %v1237 = vadd.f32 %v212, %v1236
  %v1238 = vpop.f32.mrf.mxu0
  %1239 = vmatprep.mubr.f32.mxu0 0.0
  %1240 = vmatmul.mubr.f32.gmra.mxu0 %v459
  %v1241 = vpop.f32.mrf.mxu0
  %v1242 = vadd.f32 %v212, %v1241
  %v1243 = vpop.f32.mrf.mxu0
  %1244 = vmatprep.mubr.f32.mxu0 0.0
  %1245 = vmatmul.mubr.f32.gmra.mxu0 %v462
  %v1246 = vpop.f32.mrf.mxu0
  %v1247 = vadd.f32 %v212, %v1246
  %v1248 = vpop.f32.mrf.mxu0
  %1249 = vmatprep.mubr.f32.mxu0 0.0
  %1250 = vmatmul.mubr.f32.gmra.mxu0 %v465
  %v1251 = vpop.f32.mrf.mxu0
  %v1252 = vadd.f32 %v212, %v1251
  %v1253 = vpop.f32.mrf.mxu0
  %1254 = vmatprep.mubr.f32.mxu0 0.0
  %1255 = vmatmul.mubr.f32.gmra.mxu0 %v468
  %v1256 = vpop.f32.mrf.mxu0
  %v1257 = vadd.f32 %v212, %v1256
  %v1258 = vpop.f32.mrf.mxu0
  %1259 = vmatprep.mubr.f32.mxu0 0.0
  %1260 = vmatmul.mubr.f32.gmra.mxu0 %v471
  %v1261 = vpop.f32.mrf.mxu0
  %v1262 = vadd.f32 %v212, %v1261
  %v1263 = vpop.f32.mrf.mxu0
  %1264 = vmatprep.mubr.f32.mxu0 0.0
  %1265 = vmatmul.mubr.f32.gmra.mxu0 %v474
  %v1266 = vpop.f32.mrf.mxu0
  %v1267 = vadd.f32 %v212, %v1266
  %v1268 = vpop.f32.mrf.mxu0
  %1269 = vmatprep.mubr.f32.mxu0 0.0
  %1270 = vmatmul.mubr.f32.gmra.mxu0 %v477
  %v1271 = vpop.f32.mrf.mxu0
  %v1272 = vadd.f32 %v212, %v1271
  %v1273 = vpop.f32.mrf.mxu0
  %1274 = vmatprep.mubr.f32.mxu0 0.0
  %1275 = vmatmul.mubr.f32.gmra.mxu0 %v480
  %v1276 = vpop.f32.mrf.mxu0
  %v1277 = vadd.f32 %v212, %v1276
  %v1278 = vpop.f32.mrf.mxu0
  %1279 = vmatprep.mubr.f32.mxu0 0.0
  %1280 = vmatmul.mubr.f32.gmra.mxu0 %v483
  %v1281 = vpop.f32.mrf.mxu0
  %v1282 = vadd.f32 %v212, %v1281
  %v1283 = vpop.f32.mrf.mxu0
  %1284 = vmatprep.mubr.f32.mxu0 0.0
  %1285 = vmatmul.mubr.f32.gmra.mxu0 %v486
  %v1286 = vpop.f32.mrf.mxu0
  %v1287 = vadd.f32 %v212, %v1286
  %v1288 = vpop.f32.mrf.mxu0
  %1289 = vmatprep.mubr.f32.mxu0 0.0
  %1290 = vmatmul.mubr.f32.gmra.mxu0 %v489
  %v1291 = vpop.f32.mrf.mxu0
  %v1292 = vadd.f32 %v212, %v1291
  %v1293 = vpop.f32.mrf.mxu0
  %1294 = vmatprep.mubr.f32.mxu0 0.0
  %1295 = vmatmul.mubr.f32.gmra.mxu0 %v492
  %v1296 = vpop.f32.mrf.mxu0
  %v1297 = vadd.f32 %v212, %v1296
  %v1298 = vpop.f32.mrf.mxu0
  %1299 = vmatprep.mubr.f32.mxu0 0.0
  %1300 = vmatmul.mubr.f32.gmra.mxu0 %v495
  %v1301 = vpop.f32.mrf.mxu0
  %v1302 = vadd.f32 %v212, %v1301
  %v1303 = vpop.f32.mrf.mxu0
  %1304 = vmatprep.mubr.f32.mxu0 0.0
  %1305 = vmatmul.mubr.f32.gmra.mxu0 %v498
  %v1306 = vpop.f32.mrf.mxu0
  %v1307 = vadd.f32 %v212, %v1306
  %v1308 = vpop.f32.mrf.mxu0
  %1309 = vmatprep.mubr.f32.mxu0 0.0
  %1310 = vmatmul.mubr.f32.gmra.mxu0 %v501
  %v1311 = vpop.f32.mrf.mxu0
  %v1312 = vadd.f32 %v212, %v1311
  %v1313 = vpop.f32.mrf.mxu0
  %1314 = vmatprep.mubr.f32.mxu0 0.0
  %1315 = vmatmul.mubr.f32.gmra.mxu0 %v504
  %v1316 = vpop.f32.mrf.mxu0
  %v1317 = vadd.f32 %v212, %v1316
  %v1318 = vpop.f32.mrf.mxu0
  %1319 = vmatprep.mubr.f32.mxu0 0.0
  %1320 = vmatmul.mubr.f32.gmra.mxu0 %v507
  %v1321 = vpop.f32.mrf.mxu0
  %v1322 = vadd.f32 %v212, %v1321
  %v1323 = vpop.f32.mrf.mxu0
  %1324 = vmatprep.mubr.f32.mxu0 0.0
  %1325 = vmatmul.mubr.f32.gmra.mxu0 %v510
  %v1326 = vpop.f32.mrf.mxu0
  %v1327 = vadd.f32 %v212, %v1326
  %v1328 = vpop.f32.mrf.mxu0
  %1329 = vmatprep.mubr.f32.mxu0 0.0
  %1330 = vmatmul.mubr.f32.gmra.mxu0 %v513
  %v1331 = vpop.f32.mrf.mxu0
  %v1332 = vadd.f32 %v212, %v1331
  %v1333 = vpop.f32.mrf.mxu0
  %1334 = vmatprep.mubr.f32.mxu0 0.0
  %1335 = vmatmul.mubr.f32.gmra.mxu0 %v516
  %v1336 = vpop.f32.mrf.mxu0
  %v1337 = vadd.f32 %v212, %v1336
  %v1338 = vpop.f32.mrf.mxu0
  %1339 = vmatprep.mubr.f32.mxu0 0.0
  %1340 = vmatmul.mubr.f32.gmra.mxu0 %v519
  %v1341 = vpop.f32.mrf.mxu0
  %v1342 = vadd.f32 %v212, %v1341
  %v1343 = vpop.f32.mrf.mxu0
  %1344 = vmatprep.mubr.f32.mxu0 0.0
  %1345 = vmatmul.mubr.f32.gmra.mxu0 %v522
  %v1346 = vpop.f32.mrf.mxu0
  %v1347 = vadd.f32 %v212, %v1346
  %v1348 = vpop.f32.mrf.mxu0
  %1349 = vmatprep.mubr.f32.mxu0 0.0
  %1350 = vmatmul.mubr.f32.gmra.mxu0 %v525
  %v1351 = vpop.f32.mrf.mxu0
  %v1352 = vadd.f32 %v212, %v1351
  %v1353 = vpop.f32.mrf.mxu0
  %1354 = vmatprep.mubr.f32.mxu0 0.0
  %1355 = vmatmul.mubr.f32.gmra.mxu0 %v528
  %v1356 = vpop.f32.mrf.mxu0
  %v1357 = vadd.f32 %v212, %v1356
  %v1358 = vpop.f32.mrf.mxu0
  %1359 = vmatprep.mubr.f32.mxu0 0.0
  %1360 = vmatmul.mubr.f32.gmra.mxu0 %v531
  %v1361 = vpop.f32.mrf.mxu0
  %v1362 = vadd.f32 %v212, %v1361
  %v1363 = vpop.f32.mrf.mxu0
  %1364 = vmatprep.mubr.f32.mxu0 0.0
  %1365 = vmatmul.mubr.f32.gmra.mxu0 %v534
  %v1366 = vpop.f32.mrf.mxu0
  %v1367 = vadd.f32 %v212, %v1366
  %v1368 = vpop.f32.mrf.mxu0
  %1369 = vmatprep.mubr.f32.mxu0 0.0
  %1370 = vmatmul.mubr.f32.gmra.mxu0 %v537
  %v1371 = vpop.f32.mrf.mxu0
  %v1372 = vadd.f32 %v212, %v1371
  %v1373 = vpop.f32.mrf.mxu0
  %1374 = vmatprep.mubr.f32.mxu0 0.0
  %1375 = vmatmul.mubr.f32.gmra.mxu0 %v540
  %v1376 = vpop.f32.mrf.mxu0
  %v1377 = vadd.f32 %v212, %v1376
  %v1378 = vpop.f32.mrf.mxu0
  %1379 = vmatprep.mubr.f32.mxu0 0.0
  %1380 = vmatmul.mubr.f32.gmra.mxu0 %v543
  %v1381 = vpop.f32.mrf.mxu0
  %v1382 = vadd.f32 %v212, %v1381
  %v1383 = vpop.f32.mrf.mxu0
  %1384 = vmatprep.mubr.f32.mxu0 0.0
  %1385 = vmatmul.mubr.f32.gmra.mxu0 %v546
  %v1386 = vpop.f32.mrf.mxu0
  %v1387 = vadd.f32 %v212, %v1386
  %v1388 = vpop.f32.mrf.mxu0
  %1389 = vmatprep.mubr.f32.mxu0 0.0
  %1390 = vmatmul.mubr.f32.gmra.mxu0 %v549
  %v1391 = vpop.f32.mrf.mxu0
  %v1392 = vadd.f32 %v212, %v1391
  %v1393 = vpop.f32.mrf.mxu0
  %1394 = vmatprep.mubr.f32.mxu0 0.0
  %1395 = vmatmul.mubr.f32.gmra.mxu0 %v552
  %v1396 = vpop.f32.mrf.mxu0
  %v1397 = vadd.f32 %v212, %v1396
  %v1398 = vpop.f32.mrf.mxu0
  %1399 = vmatprep.mubr.f32.mxu0 0.0
  %1400 = vmatmul.mubr.f32.gmra.mxu0 %v555
  %v1401 = vpop.f32.mrf.mxu0
  %v1402 = vadd.f32 %v212, %v1401
  %v1403 = vpop.f32.mrf.mxu0
  %1404 = vmatprep.mubr.f32.mxu0 0.0
  %1405 = vmatmul.mubr.f32.gmra.mxu0 %v558
  %v1406 = vpop.f32.mrf.mxu0
  %v1407 = vadd.f32 %v212, %v1406
  %v1408 = vpop.f32.mrf.mxu0
  %1409 = vmatprep.mubr.f32.mxu0 0.0
  %1410 = vmatmul.mubr.f32.gmra.mxu0 %v561
  %v1411 = vpop.f32.mrf.mxu0
  %v1412 = vadd.f32 %v212, %v1411
  %v1413 = vpop.f32.mrf.mxu0
  %1414 = vmatprep.mubr.f32.mxu0 0.0
  %1415 = vmatmul.mubr.f32.gmra.mxu0 %v564
  %v1416 = vpop.f32.mrf.mxu0
  %v1417 = vadd.f32 %v212, %v1416
  %v1418 = vpop.f32.mrf.mxu0
  %1419 = vmatprep.mubr.f32.mxu0 0.0
  %1420 = vmatmul.mubr.f32.gmra.mxu0 %v567
  %v1421 = vpop.f32.mrf.mxu0
  %v1422 = vadd.f32 %v212, %v1421
  %v1423 = vpop.f32.mrf.mxu0
  %1424 = vmatprep.mubr.f32.mxu0 0.0
  %1425 = vmatmul.mubr.f32.gmra.mxu0 %v570
  %v1426 = vpop.f32.mrf.mxu0
  %v1427 = vadd.f32 %v212, %v1426
  %v1428 = vpop.f32.mrf.mxu0
  %1429 = vmatprep.mubr.f32.mxu0 0.0
  %1430 = vmatmul.mubr.f32.gmra.mxu0 %v573
  %v1431 = vpop.f32.mrf.mxu0
  %v1432 = vadd.f32 %v212, %v1431
  %v1433 = vpop.f32.mrf.mxu0
  %1434 = vmatprep.mubr.f32.mxu0 0.0
  %1435 = vmatmul.mubr.f32.gmra.mxu0 %v576
  %v1436 = vpop.f32.mrf.mxu0
  %v1437 = vadd.f32 %v212, %v1436
  %v1438 = vpop.f32.mrf.mxu0
  %1439 = vmatprep.mubr.f32.mxu0 0.0
  %1440 = vmatmul.mubr.f32.gmra.mxu0 %v579
  %v1441 = vpop.f32.mrf.mxu0
  %v1442 = vadd.f32 %v212, %v1441
  %v1443 = vpop.f32.mrf.mxu0
  %1444 = vmatprep.mubr.f32.mxu0 0.0
  %1445 = vmatmul.mubr.f32.gmra.mxu0 %v582
  %v1446 = vpop.f32.mrf.mxu0
  %v1447 = vadd.f32 %v212, %v1446
  %v1448 = vpop.f32.mrf.mxu0
  %1449 = vmatprep.mubr.f32.mxu0 0.0
  %1450 = vmatmul.mubr.f32.gmra.mxu0 %v585
  %v1451 = vpop.f32.mrf.mxu0
  %v1452 = vadd.f32 %v212, %v1451
  %v1453 = vpop.f32.mrf.mxu0
  %1454 = vmatprep.mubr.f32.mxu0 0.0
  %1455 = vmatmul.mubr.f32.gmra.mxu0 %v588
  %v1456 = vpop.f32.mrf.mxu0
  %v1457 = vadd.f32 %v212, %v1456
  %v1458 = vpop.f32.mrf.mxu0
  %1459 = vmatprep.mubr.f32.mxu0 0.0
  %1460 = vmatmul.mubr.f32.gmra.mxu0 %v591
  %v1461 = vpop.f32.mrf.mxu0
  %v1462 = vadd.f32 %v212, %v1461
  %v1463 = vpop.f32.mrf.mxu0
  %1464 = vmatprep.mubr.f32.mxu0 0.0
  %1465 = vmatmul.mubr.f32.gmra.mxu0 %v594
  %v1466 = vpop.f32.mrf.mxu0
  %v1467 = vadd.f32 %v212, %v1466
  %v1468 = vpop.f32.mrf.mxu0
  %1469 = vmatprep.mubr.f32.mxu0 0.0
  %1470 = vmatmul.mubr.f32.gmra.mxu0 %v597
  %v1471 = vpop.f32.mrf.mxu0
  %v1472 = vadd.f32 %v212, %v1471
  %v1473 = vpop.f32.mrf.mxu0
  %1474 = vmatprep.mubr.f32.mxu0 0.0
  %1475 = vmatmul.mubr.f32.gmra.mxu0 %v600
  %v1476 = vpop.f32.mrf.mxu0
  %v1477 = vadd.f32 %v212, %v1476
  %v1478 = vpop.f32.mrf.mxu0
  %1479 = vmatprep.mubr.f32.mxu0 0.0
  %1480 = vmatmul.mubr.f32.gmra.mxu0 %v603
  %v1481 = vpop.f32.mrf.mxu0
  %v1482 = vadd.f32 %v212, %v1481
  %v1483 = vpop.f32.mrf.mxu0
  %1484 = vmatprep.mubr.f32.mxu0 0.0
  %1485 = vmatmul.mubr.f32.gmra.mxu0 %v606
  %v1486 = vpop.f32.mrf.mxu0
  %v1487 = vadd.f32 %v212, %v1486
  %v1488 = vpop.f32.mrf.mxu0
  %1489 = vmatprep.mubr.f32.mxu0 0.0
  %1490 = vmatmul.mubr.f32.gmra.mxu0 %v609
  %v1491 = vpop.f32.mrf.mxu0
  %v1492 = vadd.f32 %v212, %v1491
  %v1493 = vpop.f32.mrf.mxu0
  %1494 = vmatprep.mubr.f32.mxu0 0.0
  %1495 = vmatmul.mubr.f32.gmra.mxu0 %v612
  %v1496 = vpop.f32.mrf.mxu0
  %v1497 = vadd.f32 %v212, %v1496
  %v1498 = vpop.f32.mrf.mxu0
  %1499 = vmatprep.mubr.f32.mxu0 0.0
  %1500 = vmatmul.mubr.f32.gmra.mxu0 %v615
  %v1501 = vpop.f32.mrf.mxu0
  %v1502 = vadd.f32 %v212, %v1501
  %v1503 = vpop.f32.mrf.mxu0
  %1504 = vmatprep.mubr.f32.mxu0 0.0
  %1505 = vmatmul.mubr.f32.gmra.mxu0 %v618
  %v1506 = vpop.f32.mrf.mxu0
  %v1507 = vadd.f32 %v212, %v1506
  %v1508 = vpop.f32.mrf.mxu0
  %1509 = vmatprep.mubr.f32.mxu0 0.0
  %1510 = vmatmul.mubr.f32.gmra.mxu0 %v621
  %v1511 = vpop.f32.mrf.mxu0
  %v1512 = vadd.f32 %v212, %v1511
  %v1513 = vpop.f32.mrf.mxu0
  %1514 = vmatprep.mubr.f32.mxu0 0.0
  %1515 = vmatmul.mubr.f32.gmra.mxu0 %v624
  %v1516 = vpop.f32.mrf.mxu0
  %v1517 = vadd.f32 %v212, %v1516
  %v1518 = vpop.f32.mrf.mxu0
  %1519 = vmatprep.mubr.f32.mxu0 0.0
  %1520 = vmatmul.mubr.f32.gmra.mxu0 %v627
  %v1521 = vpop.f32.mrf.mxu0
  %v1522 = vadd.f32 %v212, %v1521
  %v1523 = vpop.f32.mrf.mxu0
  %1524 = vmatprep.mubr.f32.mxu0 0.0
  %1525 = vmatmul.mubr.f32.gmra.mxu0 %v630
  %v1526 = vpop.f32.mrf.mxu0
  %v1527 = vadd.f32 %v212, %v1526
  %v1528 = vpop.f32.mrf.mxu0
  %1529 = vmatprep.mubr.f32.mxu0 0.0
  %1530 = vmatmul.mubr.f32.gmra.mxu0 %v633
  %v1531 = vpop.f32.mrf.mxu0
  %v1532 = vadd.f32 %v212, %v1531
  %v1533 = vpop.f32.mrf.mxu0
  %1534 = vmatprep.mubr.f32.mxu0 0.0
  %1535 = vmatmul.mubr.f32.gmra.mxu0 %v636
  %v1536 = vpop.f32.mrf.mxu0
  %v1537 = vadd.f32 %v212, %v1536
  %v1538 = vpop.f32.mrf.mxu0
  %1539 = vmatprep.mubr.f32.mxu0 0.0
  %1540 = vmatmul.mubr.f32.gmra.mxu0 %v639
  %v1541 = vpop.f32.mrf.mxu0
  %v1542 = vadd.f32 %v212, %v1541
  %v1543 = vpop.f32.mrf.mxu0
  %1544 = vmatprep.mubr.f32.mxu0 0.0
  %1545 = vmatmul.mubr.f32.gmra.mxu0 %v642
  %v1546 = vpop.f32.mrf.mxu0
  %v1547 = vadd.f32 %v212, %v1546
  %v1548 = vpop.f32.mrf.mxu0
  %1549 = vmatprep.mubr.f32.mxu0 0.0
  %1550 = vmatmul.mubr.f32.gmra.mxu0 %v645
  %v1551 = vpop.f32.mrf.mxu0
  %v1552 = vadd.f32 %v212, %v1551
  %v1553 = vpop.f32.mrf.mxu0
  %1554 = vmatprep.mubr.f32.mxu0 0.0
  %1555 = vmatmul.mubr.f32.gmra.mxu0 %v648
  %v1556 = vpop.f32.mrf.mxu0
  %v1557 = vadd.f32 %v212, %v1556
  %v1558 = vpop.f32.mrf.mxu0
  %1559 = vmatprep.mubr.f32.mxu0 0.0
  %1560 = vmatmul.mubr.f32.gmra.mxu0 %v651
  %v1561 = vpop.f32.mrf.mxu0
  %v1562 = vadd.f32 %v212, %v1561
  %v1563 = vpop.f32.mrf.mxu0
  %1564 = vmatprep.mubr.f32.mxu0 0.0
  %1565 = vmatmul.mubr.f32.gmra.mxu0 %v654
  %v1566 = vpop.f32.mrf.mxu0
  %v1567 = vadd.f32 %v212, %v1566
  %v1568 = vpop.f32.mrf.mxu0
  %1569 = vmatprep.mubr.f32.mxu0 0.0
  %1570 = vmatmul.mubr.f32.gmra.mxu0 %v657
  %v1571 = vpop.f32.mrf.mxu0
  %v1572 = vadd.f32 %v212, %v1571
  %v1573 = vpop.f32.mrf.mxu0
  %1574 = vmatprep.mubr.f32.mxu0 0.0
  %1575 = vmatmul.mubr.f32.gmra.mxu0 %v660
  %v1576 = vpop.f32.mrf.mxu0
  %v1577 = vadd.f32 %v212, %v1576
  %v1578 = vpop.f32.mrf.mxu0
  %1579 = vmatprep.mubr.f32.mxu0 0.0
  %1580 = vmatmul.mubr.f32.gmra.mxu0 %v663
  %v1581 = vpop.f32.mrf.mxu0
  %v1582 = vadd.f32 %v212, %v1581
  %v1583 = vpop.f32.mrf.mxu0
  %1584 = vmatprep.mubr.f32.mxu0 0.0
  %1585 = vmatmul.mubr.f32.gmra.mxu0 %v666
  %v1586 = vpop.f32.mrf.mxu0
  %v1587 = vadd.f32 %v212, %v1586
  %v1588 = vpop.f32.mrf.mxu0
  %1589 = vmatprep.mubr.f32.mxu0 0.0
  %1590 = vmatmul.mubr.f32.gmra.mxu0 %v669
  %v1591 = vpop.f32.mrf.mxu0
  %v1592 = vadd.f32 %v212, %v1591
  %v1593 = vpop.f32.mrf.mxu0
  %1594 = vmatprep.mubr.f32.mxu0 0.0
  %1595 = vmatmul.mubr.f32.gmra.mxu0 %v672
  %v1596 = vpop.f32.mrf.mxu0
  %v1597 = vadd.f32 %v212, %v1596
  %v1598 = vpop.f32.mrf.mxu0
  %1599 = vmatprep.mubr.f32.mxu0 0.0
  %1600 = vmatmul.mubr.f32.gmra.mxu0 %v675
  %v1601 = vpop.f32.mrf.mxu0
  %v1602 = vadd.f32 %v212, %v1601
  %v1603 = vpop.f32.mrf.mxu0
  %1604 = vmatprep.mubr.f32.mxu0 0.0
  %1605 = vmatmul.mubr.f32.gmra.mxu0 %v678
  %v1606 = vpop.f32.mrf.mxu0
  %v1607 = vadd.f32 %v212, %v1606
  %v1608 = vpop.f32.mrf.mxu0
  %1609 = vmatprep.mubr.f32.mxu0 0.0
  %1610 = vmatmul.mubr.f32.gmra.mxu0 %v681
  %v1611 = vpop.f32.mrf.mxu0
  %v1612 = vadd.f32 %v212, %v1611
  %v1613 = vpop.f32.mrf.mxu0
  %1614 = vmatprep.mubr.f32.mxu0 0.0
  %1615 = vmatmul.mubr.f32.gmra.mxu0 %v684
  %v1616 = vpop.f32.mrf.mxu0
  %v1617 = vadd.f32 %v212, %v1616
  %v1618 = vpop.f32.mrf.mxu0
  %1619 = vmatprep.mubr.f32.mxu0 0.0
  %1620 = vmatmul.mubr.f32.gmra.mxu0 %v687
  %v1621 = vpop.f32.mrf.mxu0
  %v1622 = vadd.f32 %v212, %v1621
  %v1623 = vpop.f32.mrf.mxu0
  %1624 = vmatprep.mubr.f32.mxu0 0.0
  %1625 = vmatmul.mubr.f32.gmra.mxu0 %v690
  %v1626 = vpop.f32.mrf.mxu0
  %v1627 = vadd.f32 %v212, %v1626
  %v1628 = vpop.f32.mrf.mxu0
  %1629 = vmatprep.mubr.f32.mxu0 0.0
  %1630 = vmatmul.mubr.f32.gmra.mxu0 %v693
  %v1631 = vpop.f32.mrf.mxu0
  %v1632 = vadd.f32 %v212, %v1631
  %v1633 = vpop.f32.mrf.mxu0
  %1634 = vmatprep.mubr.f32.mxu0 0.0
  %1635 = vmatmul.mubr.f32.gmra.mxu0 %v696
  %v1636 = vpop.f32.mrf.mxu0
  %v1637 = vadd.f32 %v212, %v1636
  %v1638 = vpop.f32.mrf.mxu0
  %1639 = vmatprep.mubr.f32.mxu0 0.0
  %1640 = vmatmul.mubr.f32.gmra.mxu0 %v699
  %v1641 = vpop.f32.mrf.mxu0
  %v1642 = vadd.f32 %v212, %v1641
  %v1643 = vpop.f32.mrf.mxu0
  %1644 = vmatprep.mubr.f32.mxu0 0.0
  %1645 = vmatmul.mubr.f32.gmra.mxu0 %v702
  %v1646 = vpop.f32.mrf.mxu0
  %v1647 = vadd.f32 %v212, %v1646
  %v1648 = vpop.f32.mrf.mxu0
  %1649 = vmatprep.mubr.f32.mxu0 0.0
  %1650 = vmatmul.mubr.f32.gmra.mxu0 %v705
  %v1651 = vpop.f32.mrf.mxu0
  %v1652 = vadd.f32 %v212, %v1651
  %v1653 = vpop.f32.mrf.mxu0
  %1654 = vmatprep.mubr.f32.mxu0 0.0
  %1655 = vmatmul.mubr.f32.gmra.mxu0 %v708
  %v1656 = vpop.f32.mrf.mxu0
  %v1657 = vadd.f32 %v212, %v1656
  %v1658 = vpop.f32.mrf.mxu0
  %1659 = vmatprep.mubr.f32.mxu0 0.0
  %1660 = vmatmul.mubr.f32.gmra.mxu0 %v711
  %v1661 = vpop.f32.mrf.mxu0
  %v1662 = vadd.f32 %v212, %v1661
  %v1663 = vpop.f32.mrf.mxu0
  %1664 = vmatprep.mubr.f32.mxu0 0.0
  %1665 = vmatmul.mubr.f32.gmra.mxu0 %v714
  %v1666 = vpop.f32.mrf.mxu0
  %v1667 = vadd.f32 %v212, %v1666
  %v1668 = vpop.f32.mrf.mxu0
  %1669 = vmatprep.mubr.f32.mxu0 0.0
  %1670 = vmatmul.mubr.f32.gmra.mxu0 %v717
  %v1671 = vpop.f32.mrf.mxu0
  %v1672 = vadd.f32 %v212, %v1671
  %v1673 = vpop.f32.mrf.mxu0
  %1674 = vmatprep.mubr.f32.mxu0 0.0
  %1675 = vmatmul.mubr.f32.gmra.mxu0 %v720
  %v1676 = vpop.f32.mrf.mxu0
  %v1677 = vadd.f32 %v212, %v1676
  %v1678 = vpop.f32.mrf.mxu0
  %1679 = vmatprep.mubr.f32.mxu0 0.0
  %1680 = vmatmul.mubr.f32.gmra.mxu0 %v723
  %v1681 = vpop.f32.mrf.mxu0
  %v1682 = vadd.f32 %v212, %v1681
  %v1683 = vpop.f32.mrf.mxu0
  %1684 = vmatprep.mubr.f32.mxu0 0.0
  %1685 = vmatmul.mubr.f32.gmra.mxu0 %v726
  %v1686 = vpop.f32.mrf.mxu0
  %v1687 = vadd.f32 %v212, %v1686
  %v1688 = vpop.f32.mrf.mxu0
  %1689 = vmatprep.mubr.f32.mxu0 0.0
  %1690 = vmatmul.mubr.f32.gmra.mxu0 %v729
  %v1691 = vpop.f32.mrf.mxu0
  %v1692 = vadd.f32 %v212, %v1691
  %v1693 = vpop.f32.mrf.mxu0
  %1694 = vmatprep.mubr.f32.mxu0 0.0
  %1695 = vmatmul.mubr.f32.gmra.mxu0 %v732
  %v1696 = vpop.f32.mrf.mxu0
  %v1697 = vadd.f32 %v212, %v1696
  %v1698 = vpop.f32.mrf.mxu0
  %1699 = vmatprep.mubr.f32.mxu0 0.0
  %1700 = vmatmul.mubr.f32.gmra.mxu0 %v735
  %v1701 = vpop.f32.mrf.mxu0
  %v1702 = vadd.f32 %v212, %v1701
  %v1703 = vpop.f32.mrf.mxu0
  %1704 = vmatprep.mubr.f32.mxu0 0.0
  %1705 = vmatmul.mubr.f32.gmra.mxu0 %v738
  %v1706 = vpop.f32.mrf.mxu0
  %v1707 = vadd.f32 %v212, %v1706
  %v1708 = vpop.f32.mrf.mxu0
  %1709 = vmatprep.mubr.f32.mxu0 0.0
  %1710 = vmatmul.mubr.f32.gmra.mxu0 %v741
  %v1711 = vpop.f32.mrf.mxu0
  %v1712 = vadd.f32 %v212, %v1711
  %v1713 = vpop.f32.mrf.mxu0
  %1714 = vmatprep.mubr.f32.mxu0 0.0
  %1715 = vmatmul.mubr.f32.gmra.mxu0 %v744
  %v1716 = vpop.f32.mrf.mxu0
  %v1717 = vadd.f32 %v212, %v1716
  %v1718 = vpop.f32.mrf.mxu0
  %1719 = vmatprep.mubr.f32.mxu0 0.0
  %1720 = vmatmul.mubr.f32.gmra.mxu0 %v747
  %v1721 = vpop.f32.mrf.mxu0
  %v1722 = vadd.f32 %v212, %v1721
  %v1723 = vpop.f32.mrf.mxu0
  %1724 = vmatprep.mubr.f32.mxu0 0.0
  %1725 = vmatmul.mubr.f32.gmra.mxu0 %v750
  %v1726 = vpop.f32.mrf.mxu0
  %v1727 = vadd.f32 %v212, %v1726
  %v1728 = vpop.f32.mrf.mxu0
  %1729 = vmatprep.mubr.f32.mxu0 0.0
  %1730 = vmatmul.mubr.f32.gmra.mxu0 %v753
  %v1731 = vpop.f32.mrf.mxu0
  %v1732 = vadd.f32 %v212, %v1731
  %v1733 = vpop.f32.mrf.mxu0
  %1734 = vmatprep.mubr.f32.mxu0 0.0
  %1735 = vmatmul.mubr.f32.gmra.mxu0 %v756
  %v1736 = vpop.f32.mrf.mxu0
  %v1737 = vadd.f32 %v212, %v1736
  %v1738 = vpop.f32.mrf.mxu0
  %1739 = vmatprep.mubr.f32.mxu0 0.0
  %1740 = vmatmul.mubr.f32.gmra.mxu0 %v759
  %v1741 = vpop.f32.mrf.mxu0
  %v1742 = vadd.f32 %v212, %v1741
  %v1743 = vpop.f32.mrf.mxu0
  %1744 = vmatprep.mubr.f32.mxu0 0.0
  %1745 = vmatmul.mubr.f32.gmra.mxu0 %v762
  %v1746 = vpop.f32.mrf.mxu0
  %v1747 = vadd.f32 %v212, %v1746
  %v1748 = vpop.f32.mrf.mxu0
  %1749 = vmatprep.mubr.f32.mxu0 0.0
  %1750 = vmatmul.mubr.f32.gmra.mxu0 %v765
  %v1751 = vpop.f32.mrf.mxu0
  %v1752 = vadd.f32 %v212, %v1751
  %v1753 = vpop.f32.mrf.mxu0
  %1754 = vmatprep.mubr.f32.mxu0 0.0
  %1755 = vmatmul.mubr.f32.gmra.mxu0 %v768
  %v1756 = vpop.f32.mrf.mxu0
  %v1757 = vadd.f32 %v212, %v1756
  %v1758 = vpop.f32.mrf.mxu0
  %1759 = vdwg.mxu0
  %v1760 = vadd.f32 %v837, 3.0
  %v1761 = vadd.f32 %v842, 3.0
  %v1762 = vadd.f32 %v847, 3.0
  %v1763 = vadd.f32 %v852, 3.0
  %v1764 = vadd.f32 %v857, 3.0
  %v1765 = vadd.f32 %v862, 3.0
  %v1766 = vadd.f32 %v867, 3.0
  %v1767 = vadd.f32 %v872, 3.0
  %v1768 = vadd.f32 %v877, 3.0
  %v1769 = vadd.f32 %v882, 3.0
  %v1770 = vadd.f32 %v887, 3.0
  %v1771 = vadd.f32 %v892, 3.0
  %v1772 = vadd.f32 %v897, 3.0
  %v1773 = vadd.f32 %v902, 3.0
  %v1774 = vadd.f32 %v907, 3.0
  %v1775 = vadd.f32 %v912, 3.0
  %v1776 = vadd.f32 %v917, 3.0
  %v1777 = vadd.f32 %v922, 3.0
  %v1778 = vadd.f32 %v927, 3.0
  %v1779 = vadd.f32 %v932, 3.0
  %v1780 = vadd.f32 %v937, 3.0
  %v1781 = vadd.f32 %v942, 3.0
  %v1782 = vadd.f32 %v947, 3.0
  %v1783 = vadd.f32 %v952, 3.0
  %v1784 = vadd.f32 %v957, 3.0
  %v1785 = vadd.f32 %v962, 3.0
  %v1786 = vadd.f32 %v967, 3.0
  %v1787 = vadd.f32 %v972, 3.0
  %v1788 = vadd.f32 %v977, 3.0
  %v1789 = vadd.f32 %v982, 3.0
  %v1790 = vadd.f32 %v987, 3.0
  %v1791 = vadd.f32 %v992, 3.0
  %v1792 = vadd.f32 %v997, 3.0
  %v1793 = vadd.f32 %v1002, 3.0
  %v1794 = vadd.f32 %v1007, 3.0
  %v1795 = vadd.f32 %v1012, 3.0
  %v1796 = vadd.f32 %v1017, 3.0
  %v1797 = vadd.f32 %v1022, 3.0
  %v1798 = vadd.f32 %v1027, 3.0
  %v1799 = vadd.f32 %v1032, 3.0
  %v1800 = vadd.f32 %v1037, 3.0
  %v1801 = vadd.f32 %v1042, 3.0
  %v1802 = vadd.f32 %v1047, 3.0
  %v1803 = vadd.f32 %v1052, 3.0
  %v1804 = vadd.f32 %v1057, 3.0
  %v1805 = vadd.f32 %v1062, 3.0
  %v1806 = vadd.f32 %v1067, 3.0
  %v1807 = vadd.f32 %v1072, 3.0
  %v1808 = vadd.f32 %v1077, 3.0
  %v1809 = vadd.f32 %v1082, 3.0
  %v1810 = vadd.f32 %v1087, 3.0
  %v1811 = vadd.f32 %v1092, 3.0
  %v1812 = vadd.f32 %v1097, 3.0
  %v1813 = vadd.f32 %v1102, 3.0
  %v1814 = vadd.f32 %v1107, 3.0
  %v1815 = vadd.f32 %v1112, 3.0
  %v1816 = vadd.f32 %v1117, 3.0
  %v1817 = vadd.f32 %v1122, 3.0
  %v1818 = vadd.f32 %v1127, 3.0
  %v1819 = vadd.f32 %v1132, 3.0
  %v1820 = vadd.f32 %v1137, 3.0
  %v1821 = vadd.f32 %v1142, 3.0
  %v1822 = vadd.f32 %v1147, 3.0
  %v1823 = vadd.f32 %v1152, 3.0
  %v1824 = vadd.f32 %v1157, 3.0
  %v1825 = vadd.f32 %v1162, 3.0
  %v1826 = vadd.f32 %v1167, 3.0
  %v1827 = vadd.f32 %v1172, 3.0
  %v1828 = vadd.f32 %v1177, 3.0
  %v1829 = vadd.f32 %v1182, 3.0
  %v1830 = vadd.f32 %v1187, 3.0
  %v1831 = vadd.f32 %v1192, 3.0
  %v1832 = vadd.f32 %v1197, 3.0
  %v1833 = vadd.f32 %v1202, 3.0
  %v1834 = vadd.f32 %v1207, 3.0
  %v1835 = vadd.f32 %v1212, 3.0
  %v1836 = vadd.f32 %v1217, 3.0
  %v1837 = vadd.f32 %v1222, 3.0
  %v1838 = vadd.f32 %v1227, 3.0
  %v1839 = vadd.f32 %v1232, 3.0
  %v1840 = vadd.f32 %v1237, 3.0
  %v1841 = vadd.f32 %v1242, 3.0
  %v1842 = vadd.f32 %v1247, 3.0
  %v1843 = vadd.f32 %v1252, 3.0
  %v1844 = vadd.f32 %v1257, 3.0
  %v1845 = vadd.f32 %v1262, 3.0
  %v1846 = vadd.f32 %v1267, 3.0
  %v1847 = vadd.f32 %v1272, 3.0
  %v1848 = vadd.f32 %v1277, 3.0
  %v1849 = vadd.f32 %v1282, 3.0
  %v1850 = vadd.f32 %v1287, 3.0
  %v1851 = vadd.f32 %v1292, 3.0
  %v1852 = vadd.f32 %v1297, 3.0
  %v1853 = vadd.f32 %v1302, 3.0
  %v1854 = vadd.f32 %v1307, 3.0
  %v1855 = vadd.f32 %v1312, 3.0
  %v1856 = vadd.f32 %v1317, 3.0
  %v1857 = vadd.f32 %v1322, 3.0
  %v1858 = vadd.f32 %v1327, 3.0
  %v1859 = vadd.f32 %v1332, 3.0
  %v1860 = vadd.f32 %v1337, 3.0
  %v1861 = vadd.f32 %v1342, 3.0
  %v1862 = vadd.f32 %v1347, 3.0
  %v1863 = vadd.f32 %v1352, 3.0
  %v1864 = vadd.f32 %v1357, 3.0
  %v1865 = vadd.f32 %v1362, 3.0
  %v1866 = vadd.f32 %v1367, 3.0
  %v1867 = vadd.f32 %v1372, 3.0
  %v1868 = vadd.f32 %v1377, 3.0
  %v1869 = vadd.f32 %v1382, 3.0
  %v1870 = vadd.f32 %v1387, 3.0
  %v1871 = vadd.f32 %v1392, 3.0
  %v1872 = vadd.f32 %v1397, 3.0
  %v1873 = vadd.f32 %v1402, 3.0
  %v1874 = vadd.f32 %v1407, 3.0
  %v1875 = vadd.f32 %v1412, 3.0
  %v1876 = vadd.f32 %v1417, 3.0
  %v1877 = vadd.f32 %v1422, 3.0
  %v1878 = vadd.f32 %v1427, 3.0
  %v1879 = vadd.f32 %v1432, 3.0
  %v1880 = vadd.f32 %v1437, 3.0
  %v1881 = vadd.f32 %v1442, 3.0
  %v1882 = vadd.f32 %v1447, 3.0
  %v1883 = vadd.f32 %v1452, 3.0
  %v1884 = vadd.f32 %v1457, 3.0
  %v1885 = vadd.f32 %v1462, 3.0
  %v1886 = vadd.f32 %v1467, 3.0
  %v1887 = vadd.f32 %v1472, 3.0
  %v1888 = vadd.f32 %v1477, 3.0
  %v1889 = vadd.f32 %v1482, 3.0
  %v1890 = vadd.f32 %v1487, 3.0
  %v1891 = vadd.f32 %v1492, 3.0
  %v1892 = vadd.f32 %v1497, 3.0
  %v1893 = vadd.f32 %v1502, 3.0
  %v1894 = vadd.f32 %v1507, 3.0
  %v1895 = vadd.f32 %v1512, 3.0
  %v1896 = vadd.f32 %v1517, 3.0
  %v1897 = vadd.f32 %v1522, 3.0
  %v1898 = vadd.f32 %v1527, 3.0
  %v1899 = vadd.f32 %v1532, 3.0
  %v1900 = vadd.f32 %v1537, 3.0
  %v1901 = vadd.f32 %v1542, 3.0
  %v1902 = vadd.f32 %v1547, 3.0
  %v1903 = vadd.f32 %v1552, 3.0
  %v1904 = vadd.f32 %v1557, 3.0
  %v1905 = vadd.f32 %v1562, 3.0
  %v1906 = vadd.f32 %v1567, 3.0
  %v1907 = vadd.f32 %v1572, 3.0
  %v1908 = vadd.f32 %v1577, 3.0
  %v1909 = vadd.f32 %v1582, 3.0
  %v1910 = vadd.f32 %v1587, 3.0
  %v1911 = vadd.f32 %v1592, 3.0
  %v1912 = vadd.f32 %v1597, 3.0
  %v1913 = vadd.f32 %v1602, 3.0
  %v1914 = vadd.f32 %v1607, 3.0
  %v1915 = vadd.f32 %v1612, 3.0
  %v1916 = vadd.f32 %v1617, 3.0
  %v1917 = vadd.f32 %v1622, 3.0
  %v1918 = vadd.f32 %v1627, 3.0
  %v1919 = vadd.f32 %v1632, 3.0
  %v1920 = vadd.f32 %v1637, 3.0
  %v1921 = vadd.f32 %v1642, 3.0
  %v1922 = vadd.f32 %v1647, 3.0
  %v1923 = vadd.f32 %v1652, 3.0
  %v1924 = vadd.f32 %v1657, 3.0
  %v1925 = vadd.f32 %v1662, 3.0
  %v1926 = vadd.f32 %v1667, 3.0
  %v1927 = vadd.f32 %v1672, 3.0
  %v1928 = vadd.f32 %v1677, 3.0
  %v1929 = vadd.f32 %v1682, 3.0
  %v1930 = vadd.f32 %v1687, 3.0
  %v1931 = vadd.f32 %v1692, 3.0
  %v1932 = vadd.f32 %v1697, 3.0
  %v1933 = vadd.f32 %v1702, 3.0
  %v1934 = vadd.f32 %v1707, 3.0
  %v1935 = vadd.f32 %v1712, 3.0
  %v1936 = vadd.f32 %v1717, 3.0
  %v1937 = vadd.f32 %v1722, 3.0
  %v1938 = vadd.f32 %v1727, 3.0
  %v1939 = vadd.f32 %v1732, 3.0
  %v1940 = vadd.f32 %v1737, 3.0
  %v1941 = vadd.f32 %v1742, 3.0
  %v1942 = vadd.f32 %v1747, 3.0
  %v1943 = vadd.f32 %v1752, 3.0
  %v1944 = vadd.f32 %v1757, 3.0
  %v1945 = vmax.f32 %v1760, 0.0
  %v1946 = vmax.f32 %v1761, 0.0
  %v1947 = vmax.f32 %v1762, 0.0
  %v1948 = vmax.f32 %v1763, 0.0
  %v1949 = vmax.f32 %v1764, 0.0
  %v1950 = vmax.f32 %v1765, 0.0
  %v1951 = vmax.f32 %v1766, 0.0
  %v1952 = vmax.f32 %v1767, 0.0
  %v1953 = vmax.f32 %v1768, 0.0
  %v1954 = vmax.f32 %v1769, 0.0
  %v1955 = vmax.f32 %v1770, 0.0
  %v1956 = vmax.f32 %v1771, 0.0
  %v1957 = vmax.f32 %v1772, 0.0
  %v1958 = vmax.f32 %v1773, 0.0
  %v1959 = vmax.f32 %v1774, 0.0
  %v1960 = vmax.f32 %v1775, 0.0
  %v1961 = vmax.f32 %v1776, 0.0
  %v1962 = vmax.f32 %v1777, 0.0
  %v1963 = vmax.f32 %v1778, 0.0
  %v1964 = vmax.f32 %v1779, 0.0
  %v1965 = vmax.f32 %v1780, 0.0
  %v1966 = vmax.f32 %v1781, 0.0
  %v1967 = vmax.f32 %v1782, 0.0
  %v1968 = vmax.f32 %v1783, 0.0
  %v1969 = vmax.f32 %v1784, 0.0
  %v1970 = vmax.f32 %v1785, 0.0
  %v1971 = vmax.f32 %v1786, 0.0
  %v1972 = vmax.f32 %v1787, 0.0
  %v1973 = vmax.f32 %v1788, 0.0
  %v1974 = vmax.f32 %v1789, 0.0
  %v1975 = vmax.f32 %v1790, 0.0
  %v1976 = vmax.f32 %v1791, 0.0
  %v1977 = vmax.f32 %v1792, 0.0
  %v1978 = vmax.f32 %v1793, 0.0
  %v1979 = vmax.f32 %v1794, 0.0
  %v1980 = vmax.f32 %v1795, 0.0
  %v1981 = vmax.f32 %v1796, 0.0
  %v1982 = vmax.f32 %v1797, 0.0
  %v1983 = vmax.f32 %v1798, 0.0
  %v1984 = vmax.f32 %v1799, 0.0
  %v1985 = vmax.f32 %v1800, 0.0
  %v1986 = vmax.f32 %v1801, 0.0
  %v1987 = vmax.f32 %v1802, 0.0
  %v1988 = vmax.f32 %v1803, 0.0
  %v1989 = vmax.f32 %v1804, 0.0
  %v1990 = vmax.f32 %v1805, 0.0
  %v1991 = vmax.f32 %v1806, 0.0
  %v1992 = vmax.f32 %v1807, 0.0
  %v1993 = vmax.f32 %v1808, 0.0
  %v1994 = vmax.f32 %v1809, 0.0
  %v1995 = vmax.f32 %v1810, 0.0
  %v1996 = vmax.f32 %v1811, 0.0
  %v1997 = vmax.f32 %v1812, 0.0
  %v1998 = vmax.f32 %v1813, 0.0
  %v1999 = vmax.f32 %v1814, 0.0
  %v2000 = vmax.f32 %v1815, 0.0
  %v2001 = vmax.f32 %v1816, 0.0
  %v2002 = vmax.f32 %v1817, 0.0
  %v2003 = vmax.f32 %v1818, 0.0
  %v2004 = vmax.f32 %v1819, 0.0
  %v2005 = vmax.f32 %v1820, 0.0
  %v2006 = vmax.f32 %v1821, 0.0
  %v2007 = vmax.f32 %v1822, 0.0
  %v2008 = vmax.f32 %v1823, 0.0
  %v2009 = vmax.f32 %v1824, 0.0
  %v2010 = vmax.f32 %v1825, 0.0
  %v2011 = vmax.f32 %v1826, 0.0
  %v2012 = vmax.f32 %v1827, 0.0
  %v2013 = vmax.f32 %v1828, 0.0
  %v2014 = vmax.f32 %v1829, 0.0
  %v2015 = vmax.f32 %v1830, 0.0
  %v2016 = vmax.f32 %v1831, 0.0
  %v2017 = vmax.f32 %v1832, 0.0
  %v2018 = vmax.f32 %v1833, 0.0
  %v2019 = vmax.f32 %v1834, 0.0
  %v2020 = vmax.f32 %v1835, 0.0
  %v2021 = vmax.f32 %v1836, 0.0
  %v2022 = vmax.f32 %v1837, 0.0
  %v2023 = vmax.f32 %v1838, 0.0
  %v2024 = vmax.f32 %v1839, 0.0
  %v2025 = vmax.f32 %v1840, 0.0
  %v2026 = vmax.f32 %v1841, 0.0
  %v2027 = vmax.f32 %v1842, 0.0
  %v2028 = vmax.f32 %v1843, 0.0
  %v2029 = vmax.f32 %v1844, 0.0
  %v2030 = vmax.f32 %v1845, 0.0
  %v2031 = vmax.f32 %v1846, 0.0
  %v2032 = vmax.f32 %v1847, 0.0
  %v2033 = vmax.f32 %v1848, 0.0
  %v2034 = vmax.f32 %v1849, 0.0
  %v2035 = vmax.f32 %v1850, 0.0
  %v2036 = vmax.f32 %v1851, 0.0
  %v2037 = vmax.f32 %v1852, 0.0
  %v2038 = vmax.f32 %v1853, 0.0
  %v2039 = vmax.f32 %v1854, 0.0
  %v2040 = vmax.f32 %v1855, 0.0
  %v2041 = vmax.f32 %v1856, 0.0
  %v2042 = vmax.f32 %v1857, 0.0
  %v2043 = vmax.f32 %v1858, 0.0
  %v2044 = vmax.f32 %v1859, 0.0
  %v2045 = vmax.f32 %v1860, 0.0
  %v2046 = vmax.f32 %v1861, 0.0
  %v2047 = vmax.f32 %v1862, 0.0
  %v2048 = vmax.f32 %v1863, 0.0
  %v2049 = vmax.f32 %v1864, 0.0
  %v2050 = vmax.f32 %v1865, 0.0
  %v2051 = vmax.f32 %v1866, 0.0
  %v2052 = vmax.f32 %v1867, 0.0
  %v2053 = vmax.f32 %v1868, 0.0
  %v2054 = vmax.f32 %v1869, 0.0
  %v2055 = vmax.f32 %v1870, 0.0
  %v2056 = vmax.f32 %v1871, 0.0
  %v2057 = vmax.f32 %v1872, 0.0
  %v2058 = vmax.f32 %v1873, 0.0
  %v2059 = vmax.f32 %v1874, 0.0
  %v2060 = vmax.f32 %v1875, 0.0
  %v2061 = vmax.f32 %v1876, 0.0
  %v2062 = vmax.f32 %v1877, 0.0
  %v2063 = vmax.f32 %v1878, 0.0
  %v2064 = vmax.f32 %v1879, 0.0
  %v2065 = vmax.f32 %v1880, 0.0
  %v2066 = vmax.f32 %v1881, 0.0
  %v2067 = vmax.f32 %v1882, 0.0
  %v2068 = vmax.f32 %v1883, 0.0
  %v2069 = vmax.f32 %v1884, 0.0
  %v2070 = vmax.f32 %v1885, 0.0
  %v2071 = vmax.f32 %v1886, 0.0
  %v2072 = vmax.f32 %v1887, 0.0
  %v2073 = vmax.f32 %v1888, 0.0
  %v2074 = vmax.f32 %v1889, 0.0
  %v2075 = vmax.f32 %v1890, 0.0
  %v2076 = vmax.f32 %v1891, 0.0
  %v2077 = vmax.f32 %v1892, 0.0
  %v2078 = vmax.f32 %v1893, 0.0
  %v2079 = vmax.f32 %v1894, 0.0
  %v2080 = vmax.f32 %v1895, 0.0
  %v2081 = vmax.f32 %v1896, 0.0
  %v2082 = vmax.f32 %v1897, 0.0
  %v2083 = vmax.f32 %v1898, 0.0
  %v2084 = vmax.f32 %v1899, 0.0
  %v2085 = vmax.f32 %v1900, 0.0
  %v2086 = vmax.f32 %v1901, 0.0
  %v2087 = vmax.f32 %v1902, 0.0
  %v2088 = vmax.f32 %v1903, 0.0
  %v2089 = vmax.f32 %v1904, 0.0
  %v2090 = vmax.f32 %v1905, 0.0
  %v2091 = vmax.f32 %v1906, 0.0
  %v2092 = vmax.f32 %v1907, 0.0
  %v2093 = vmax.f32 %v1908, 0.0
  %v2094 = vmax.f32 %v1909, 0.0
  %v2095 = vmax.f32 %v1910, 0.0
  %v2096 = vmax.f32 %v1911, 0.0
  %v2097 = vmax.f32 %v1912, 0.0
  %v2098 = vmax.f32 %v1913, 0.0
  %v2099 = vmax.f32 %v1914, 0.0
  %v2100 = vmax.f32 %v1915, 0.0
  %v2101 = vmax.f32 %v1916, 0.0
  %v2102 = vmax.f32 %v1917, 0.0
  %v2103 = vmax.f32 %v1918, 0.0
  %v2104 = vmax.f32 %v1919, 0.0
  %v2105 = vmax.f32 %v1920, 0.0
  %v2106 = vmax.f32 %v1921, 0.0
  %v2107 = vmax.f32 %v1922, 0.0
  %v2108 = vmax.f32 %v1923, 0.0
  %v2109 = vmax.f32 %v1924, 0.0
  %v2110 = vmax.f32 %v1925, 0.0
  %v2111 = vmax.f32 %v1926, 0.0
  %v2112 = vmax.f32 %v1927, 0.0
  %v2113 = vmax.f32 %v1928, 0.0
  %v2114 = vmax.f32 %v1929, 0.0
  %v2115 = vmax.f32 %v1930, 0.0
  %v2116 = vmax.f32 %v1931, 0.0
  %v2117 = vmax.f32 %v1932, 0.0
  %v2118 = vmax.f32 %v1933, 0.0
  %v2119 = vmax.f32 %v1934, 0.0
  %v2120 = vmax.f32 %v1935, 0.0
  %v2121 = vmax.f32 %v1936, 0.0
  %v2122 = vmax.f32 %v1937, 0.0
  %v2123 = vmax.f32 %v1938, 0.0
  %v2124 = vmax.f32 %v1939, 0.0
  %v2125 = vmax.f32 %v1940, 0.0
  %v2126 = vmax.f32 %v1941, 0.0
  %v2127 = vmax.f32 %v1942, 0.0
  %v2128 = vmax.f32 %v1943, 0.0
  %v2129 = vmax.f32 %v1944, 0.0
  %v2130 = vmin.f32 %v1945, 6.0
  %v2131 = vmin.f32 %v1946, 6.0
  %v2132 = vmin.f32 %v1947, 6.0
  %v2133 = vmin.f32 %v1948, 6.0
  %v2134 = vmin.f32 %v1949, 6.0
  %v2135 = vmin.f32 %v1950, 6.0
  %v2136 = vmin.f32 %v1951, 6.0
  %v2137 = vmin.f32 %v1952, 6.0
  %v2138 = vmin.f32 %v1953, 6.0
  %v2139 = vmin.f32 %v1954, 6.0
  %v2140 = vmin.f32 %v1955, 6.0
  %v2141 = vmin.f32 %v1956, 6.0
  %v2142 = vmin.f32 %v1957, 6.0
  %v2143 = vmin.f32 %v1958, 6.0
  %v2144 = vmin.f32 %v1959, 6.0
  %v2145 = vmin.f32 %v1960, 6.0
  %v2146 = vmin.f32 %v1961, 6.0
  %v2147 = vmin.f32 %v1962, 6.0
  %v2148 = vmin.f32 %v1963, 6.0
  %v2149 = vmin.f32 %v1964, 6.0
  %v2150 = vmin.f32 %v1965, 6.0
  %v2151 = vmin.f32 %v1966, 6.0
  %v2152 = vmin.f32 %v1967, 6.0
  %v2153 = vmin.f32 %v1968, 6.0
  %v2154 = vmin.f32 %v1969, 6.0
  %v2155 = vmin.f32 %v1970, 6.0
  %v2156 = vmin.f32 %v1971, 6.0
  %v2157 = vmin.f32 %v1972, 6.0
  %v2158 = vmin.f32 %v1973, 6.0
  %v2159 = vmin.f32 %v1974, 6.0
  %v2160 = vmin.f32 %v1975, 6.0
  %v2161 = vmin.f32 %v1976, 6.0
  %v2162 = vmin.f32 %v1977, 6.0
  %v2163 = vmin.f32 %v1978, 6.0
  %v2164 = vmin.f32 %v1979, 6.0
  %v2165 = vmin.f32 %v1980, 6.0
  %v2166 = vmin.f32 %v1981, 6.0
  %v2167 = vmin.f32 %v1982, 6.0
  %v2168 = vmin.f32 %v1983, 6.0
  %v2169 = vmin.f32 %v1984, 6.0
  %v2170 = vmin.f32 %v1985, 6.0
  %v2171 = vmin.f32 %v1986, 6.0
  %v2172 = vmin.f32 %v1987, 6.0
  %v2173 = vmin.f32 %v1988, 6.0
  %v2174 = vmin.f32 %v1989, 6.0
  %v2175 = vmin.f32 %v1990, 6.0
  %v2176 = vmin.f32 %v1991, 6.0
  %v2177 = vmin.f32 %v1992, 6.0
  %v2178 = vmin.f32 %v1993, 6.0
  %v2179 = vmin.f32 %v1994, 6.0
  %v2180 = vmin.f32 %v1995, 6.0
  %v2181 = vmin.f32 %v1996, 6.0
  %v2182 = vmin.f32 %v1997, 6.0
  %v2183 = vmin.f32 %v1998, 6.0
  %v2184 = vmin.f32 %v1999, 6.0
  %v2185 = vmin.f32 %v2000, 6.0
  %v2186 = vmin.f32 %v2001, 6.0
  %v2187 = vmin.f32 %v2002, 6.0
  %v2188 = vmin.f32 %v2003, 6.0
  %v2189 = vmin.f32 %v2004, 6.0
  %v2190 = vmin.f32 %v2005, 6.0
  %v2191 = vmin.f32 %v2006, 6.0
  %v2192 = vmin.f32 %v2007, 6.0
  %v2193 = vmin.f32 %v2008, 6.0
  %v2194 = vmin.f32 %v2009, 6.0
  %v2195 = vmin.f32 %v2010, 6.0
  %v2196 = vmin.f32 %v2011, 6.0
  %v2197 = vmin.f32 %v2012, 6.0
  %v2198 = vmin.f32 %v2013, 6.0
  %v2199 = vmin.f32 %v2014, 6.0
  %v2200 = vmin.f32 %v2015, 6.0
  %v2201 = vmin.f32 %v2016, 6.0
  %v2202 = vmin.f32 %v2017, 6.0
  %v2203 = vmin.f32 %v2018, 6.0
  %v2204 = vmin.f32 %v2019, 6.0
  %v2205 = vmin.f32 %v2020, 6.0
  %v2206 = vmin.f32 %v2021, 6.0
  %v2207 = vmin.f32 %v2022, 6.0
  %v2208 = vmin.f32 %v2023, 6.0
  %v2209 = vmin.f32 %v2024, 6.0
  %v2210 = vmin.f32 %v2025, 6.0
  %v2211 = vmin.f32 %v2026, 6.0
  %v2212 = vmin.f32 %v2027, 6.0
  %v2213 = vmin.f32 %v2028, 6.0
  %v2214 = vmin.f32 %v2029, 6.0
  %v2215 = vmin.f32 %v2030, 6.0
  %v2216 = vmin.f32 %v2031, 6.0
  %v2217 = vmin.f32 %v2032, 6.0
  %v2218 = vmin.f32 %v2033, 6.0
  %v2219 = vmin.f32 %v2034, 6.0
  %v2220 = vmin.f32 %v2035, 6.0
  %v2221 = vmin.f32 %v2036, 6.0
  %v2222 = vmin.f32 %v2037, 6.0
  %v2223 = vmin.f32 %v2038, 6.0
  %v2224 = vmin.f32 %v2039, 6.0
  %v2225 = vmin.f32 %v2040, 6.0
  %v2226 = vmin.f32 %v2041, 6.0
  %v2227 = vmin.f32 %v2042, 6.0
  %v2228 = vmin.f32 %v2043, 6.0
  %v2229 = vmin.f32 %v2044, 6.0
  %v2230 = vmin.f32 %v2045, 6.0
  %v2231 = vmin.f32 %v2046, 6.0
  %v2232 = vmin.f32 %v2047, 6.0
  %v2233 = vmin.f32 %v2048, 6.0
  %v2234 = vmin.f32 %v2049, 6.0
  %v2235 = vmin.f32 %v2050, 6.0
  %v2236 = vmin.f32 %v2051, 6.0
  %v2237 = vmin.f32 %v2052, 6.0
  %v2238 = vmin.f32 %v2053, 6.0
  %v2239 = vmin.f32 %v2054, 6.0
  %v2240 = vmin.f32 %v2055, 6.0
  %v2241 = vmin.f32 %v2056, 6.0
  %v2242 = vmin.f32 %v2057, 6.0
  %v2243 = vmin.f32 %v2058, 6.0
  %v2244 = vmin.f32 %v2059, 6.0
  %v2245 = vmin.f32 %v2060, 6.0
  %v2246 = vmin.f32 %v2061, 6.0
  %v2247 = vmin.f32 %v2062, 6.0
  %v2248 = vmin.f32 %v2063, 6.0
  %v2249 = vmin.f32 %v2064, 6.0
  %v2250 = vmin.f32 %v2065, 6.0
  %v2251 = vmin.f32 %v2066, 6.0
  %v2252 = vmin.f32 %v2067, 6.0
  %v2253 = vmin.f32 %v2068, 6.0
  %v2254 = vmin.f32 %v2069, 6.0
  %v2255 = vmin.f32 %v2070, 6.0
  %v2256 = vmin.f32 %v2071, 6.0
  %v2257 = vmin.f32 %v2072, 6.0
  %v2258 = vmin.f32 %v2073, 6.0
  %v2259 = vmin.f32 %v2074, 6.0
  %v2260 = vmin.f32 %v2075, 6.0
  %v2261 = vmin.f32 %v2076, 6.0
  %v2262 = vmin.f32 %v2077, 6.0
  %v2263 = vmin.f32 %v2078, 6.0
  %v2264 = vmin.f32 %v2079, 6.0
  %v2265 = vmin.f32 %v2080, 6.0
  %v2266 = vmin.f32 %v2081, 6.0
  %v2267 = vmin.f32 %v2082, 6.0
  %v2268 = vmin.f32 %v2083, 6.0
  %v2269 = vmin.f32 %v2084, 6.0
  %v2270 = vmin.f32 %v2085, 6.0
  %v2271 = vmin.f32 %v2086, 6.0
  %v2272 = vmin.f32 %v2087, 6.0
  %v2273 = vmin.f32 %v2088, 6.0
  %v2274 = vmin.f32 %v2089, 6.0
  %v2275 = vmin.f32 %v2090, 6.0
  %v2276 = vmin.f32 %v2091, 6.0
  %v2277 = vmin.f32 %v2092, 6.0
  %v2278 = vmin.f32 %v2093, 6.0
  %v2279 = vmin.f32 %v2094, 6.0
  %v2280 = vmin.f32 %v2095, 6.0
  %v2281 = vmin.f32 %v2096, 6.0
  %v2282 = vmin.f32 %v2097, 6.0
  %v2283 = vmin.f32 %v2098, 6.0
  %v2284 = vmin.f32 %v2099, 6.0
  %v2285 = vmin.f32 %v2100, 6.0
  %v2286 = vmin.f32 %v2101, 6.0
  %v2287 = vmin.f32 %v2102, 6.0
  %v2288 = vmin.f32 %v2103, 6.0
  %v2289 = vmin.f32 %v2104, 6.0
  %v2290 = vmin.f32 %v2105, 6.0
  %v2291 = vmin.f32 %v2106, 6.0
  %v2292 = vmin.f32 %v2107, 6.0
  %v2293 = vmin.f32 %v2108, 6.0
  %v2294 = vmin.f32 %v2109, 6.0
  %v2295 = vmin.f32 %v2110, 6.0
  %v2296 = vmin.f32 %v2111, 6.0
  %v2297 = vmin.f32 %v2112, 6.0
  %v2298 = vmin.f32 %v2113, 6.0
  %v2299 = vmin.f32 %v2114, 6.0
  %v2300 = vmin.f32 %v2115, 6.0
  %v2301 = vmin.f32 %v2116, 6.0
  %v2302 = vmin.f32 %v2117, 6.0
  %v2303 = vmin.f32 %v2118, 6.0
  %v2304 = vmin.f32 %v2119, 6.0
  %v2305 = vmin.f32 %v2120, 6.0
  %v2306 = vmin.f32 %v2121, 6.0
  %v2307 = vmin.f32 %v2122, 6.0
  %v2308 = vmin.f32 %v2123, 6.0
  %v2309 = vmin.f32 %v2124, 6.0
  %v2310 = vmin.f32 %v2125, 6.0
  %v2311 = vmin.f32 %v2126, 6.0
  %v2312 = vmin.f32 %v2127, 6.0
  %v2313 = vmin.f32 %v2128, 6.0
  %v2314 = vmin.f32 %v2129, 6.0
  %v2315 = vmul.f32 %v837, %v2130
  %v2316 = vmul.f32 %v842, %v2131
  %v2317 = vmul.f32 %v847, %v2132
  %v2318 = vmul.f32 %v852, %v2133
  %v2319 = vmul.f32 %v857, %v2134
  %v2320 = vmul.f32 %v862, %v2135
  %v2321 = vmul.f32 %v867, %v2136
  %v2322 = vmul.f32 %v872, %v2137
  %v2323 = vmul.f32 %v877, %v2138
  %v2324 = vmul.f32 %v882, %v2139
  %v2325 = vmul.f32 %v887, %v2140
  %v2326 = vmul.f32 %v892, %v2141
  %v2327 = vmul.f32 %v897, %v2142
  %v2328 = vmul.f32 %v902, %v2143
  %v2329 = vmul.f32 %v907, %v2144
  %v2330 = vmul.f32 %v912, %v2145
  %v2331 = vmul.f32 %v917, %v2146
  %v2332 = vmul.f32 %v922, %v2147
  %v2333 = vmul.f32 %v927, %v2148
  %v2334 = vmul.f32 %v932, %v2149
  %v2335 = vmul.f32 %v937, %v2150
  %v2336 = vmul.f32 %v942, %v2151
  %v2337 = vmul.f32 %v947, %v2152
  %v2338 = vmul.f32 %v952, %v2153
  %v2339 = vmul.f32 %v957, %v2154
  %v2340 = vmul.f32 %v962, %v2155
  %v2341 = vmul.f32 %v967, %v2156
  %v2342 = vmul.f32 %v972, %v2157
  %v2343 = vmul.f32 %v977, %v2158
  %v2344 = vmul.f32 %v982, %v2159
  %v2345 = vmul.f32 %v987, %v2160
  %v2346 = vmul.f32 %v992, %v2161
  %v2347 = vmul.f32 %v997, %v2162
  %v2348 = vmul.f32 %v1002, %v2163
  %v2349 = vmul.f32 %v1007, %v2164
  %v2350 = vmul.f32 %v1012, %v2165
  %v2351 = vmul.f32 %v1017, %v2166
  %v2352 = vmul.f32 %v1022, %v2167
  %v2353 = vmul.f32 %v1027, %v2168
  %v2354 = vmul.f32 %v1032, %v2169
  %v2355 = vmul.f32 %v1037, %v2170
  %v2356 = vmul.f32 %v1042, %v2171
  %v2357 = vmul.f32 %v1047, %v2172
  %v2358 = vmul.f32 %v1052, %v2173
  %v2359 = vmul.f32 %v1057, %v2174
  %v2360 = vmul.f32 %v1062, %v2175
  %v2361 = vmul.f32 %v1067, %v2176
  %v2362 = vmul.f32 %v1072, %v2177
  %v2363 = vmul.f32 %v1077, %v2178
  %v2364 = vmul.f32 %v1082, %v2179
  %v2365 = vmul.f32 %v1087, %v2180
  %v2366 = vmul.f32 %v1092, %v2181
  %v2367 = vmul.f32 %v1097, %v2182
  %v2368 = vmul.f32 %v1102, %v2183
  %v2369 = vmul.f32 %v1107, %v2184
  %v2370 = vmul.f32 %v1112, %v2185
  %v2371 = vmul.f32 %v1117, %v2186
  %v2372 = vmul.f32 %v1122, %v2187
  %v2373 = vmul.f32 %v1127, %v2188
  %v2374 = vmul.f32 %v1132, %v2189
  %v2375 = vmul.f32 %v1137, %v2190
  %v2376 = vmul.f32 %v1142, %v2191
  %v2377 = vmul.f32 %v1147, %v2192
  %v2378 = vmul.f32 %v1152, %v2193
  %v2379 = vmul.f32 %v1157, %v2194
  %v2380 = vmul.f32 %v1162, %v2195
  %v2381 = vmul.f32 %v1167, %v2196
  %v2382 = vmul.f32 %v1172, %v2197
  %v2383 = vmul.f32 %v1177, %v2198
  %v2384 = vmul.f32 %v1182, %v2199
  %v2385 = vmul.f32 %v1187, %v2200
  %v2386 = vmul.f32 %v1192, %v2201
  %v2387 = vmul.f32 %v1197, %v2202
  %v2388 = vmul.f32 %v1202, %v2203
  %v2389 = vmul.f32 %v1207, %v2204
  %v2390 = vmul.f32 %v1212, %v2205
  %v2391 = vmul.f32 %v1217, %v2206
  %v2392 = vmul.f32 %v1222, %v2207
  %v2393 = vmul.f32 %v1227, %v2208
  %v2394 = vmul.f32 %v1232, %v2209
  %v2395 = vmul.f32 %v1237, %v2210
  %v2396 = vmul.f32 %v1242, %v2211
  %v2397 = vmul.f32 %v1247, %v2212
  %v2398 = vmul.f32 %v1252, %v2213
  %v2399 = vmul.f32 %v1257, %v2214
  %v2400 = vmul.f32 %v1262, %v2215
  %v2401 = vmul.f32 %v1267, %v2216
  %v2402 = vmul.f32 %v1272, %v2217
  %v2403 = vmul.f32 %v1277, %v2218
  %v2404 = vmul.f32 %v1282, %v2219
  %v2405 = vmul.f32 %v1287, %v2220
  %v2406 = vmul.f32 %v1292, %v2221
  %v2407 = vmul.f32 %v1297, %v2222
  %v2408 = vmul.f32 %v1302, %v2223
  %v2409 = vmul.f32 %v1307, %v2224
  %v2410 = vmul.f32 %v1312, %v2225
  %v2411 = vmul.f32 %v1317, %v2226
  %v2412 = vmul.f32 %v1322, %v2227
  %v2413 = vmul.f32 %v1327, %v2228
  %v2414 = vmul.f32 %v1332, %v2229
  %v2415 = vmul.f32 %v1337, %v2230
  %v2416 = vmul.f32 %v1342, %v2231
  %v2417 = vmul.f32 %v1347, %v2232
  %v2418 = vmul.f32 %v1352, %v2233
  %v2419 = vmul.f32 %v1357, %v2234
  %v2420 = vmul.f32 %v1362, %v2235
  %v2421 = vmul.f32 %v1367, %v2236
  %v2422 = vmul.f32 %v1372, %v2237
  %v2423 = vmul.f32 %v1377, %v2238
  %v2424 = vmul.f32 %v1382, %v2239
  %v2425 = vmul.f32 %v1387, %v2240
  %v2426 = vmul.f32 %v1392, %v2241
  %v2427 = vmul.f32 %v1397, %v2242
  %v2428 = vmul.f32 %v1402, %v2243
  %v2429 = vmul.f32 %v1407, %v2244
  %v2430 = vmul.f32 %v1412, %v2245
  %v2431 = vmul.f32 %v1417, %v2246
  %v2432 = vmul.f32 %v1422, %v2247
  %v2433 = vmul.f32 %v1427, %v2248
  %v2434 = vmul.f32 %v1432, %v2249
  %v2435 = vmul.f32 %v1437, %v2250
  %v2436 = vmul.f32 %v1442, %v2251
  %v2437 = vmul.f32 %v1447, %v2252
  %v2438 = vmul.f32 %v1452, %v2253
  %v2439 = vmul.f32 %v1457, %v2254
  %v2440 = vmul.f32 %v1462, %v2255
  %v2441 = vmul.f32 %v1467, %v2256
  %v2442 = vmul.f32 %v1472, %v2257
  %v2443 = vmul.f32 %v1477, %v2258
  %v2444 = vmul.f32 %v1482, %v2259
  %v2445 = vmul.f32 %v1487, %v2260
  %v2446 = vmul.f32 %v1492, %v2261
  %v2447 = vmul.f32 %v1497, %v2262
  %v2448 = vmul.f32 %v1502, %v2263
  %v2449 = vmul.f32 %v1507, %v2264
  %v2450 = vmul.f32 %v1512, %v2265
  %v2451 = vmul.f32 %v1517, %v2266
  %v2452 = vmul.f32 %v1522, %v2267
  %v2453 = vmul.f32 %v1527, %v2268
  %v2454 = vmul.f32 %v1532, %v2269
  %v2455 = vmul.f32 %v1537, %v2270
  %v2456 = vmul.f32 %v1542, %v2271
  %v2457 = vmul.f32 %v1547, %v2272
  %v2458 = vmul.f32 %v1552, %v2273
  %v2459 = vmul.f32 %v1557, %v2274
  %v2460 = vmul.f32 %v1562, %v2275
  %v2461 = vmul.f32 %v1567, %v2276
  %v2462 = vmul.f32 %v1572, %v2277
  %v2463 = vmul.f32 %v1577, %v2278
  %v2464 = vmul.f32 %v1582, %v2279
  %v2465 = vmul.f32 %v1587, %v2280
  %v2466 = vmul.f32 %v1592, %v2281
  %v2467 = vmul.f32 %v1597, %v2282
  %v2468 = vmul.f32 %v1602, %v2283
  %v2469 = vmul.f32 %v1607, %v2284
  %v2470 = vmul.f32 %v1612, %v2285
  %v2471 = vmul.f32 %v1617, %v2286
  %v2472 = vmul.f32 %v1622, %v2287
  %v2473 = vmul.f32 %v1627, %v2288
  %v2474 = vmul.f32 %v1632, %v2289
  %v2475 = vmul.f32 %v1637, %v2290
  %v2476 = vmul.f32 %v1642, %v2291
  %v2477 = vmul.f32 %v1647, %v2292
  %v2478 = vmul.f32 %v1652, %v2293
  %v2479 = vmul.f32 %v1657, %v2294
  %v2480 = vmul.f32 %v1662, %v2295
  %v2481 = vmul.f32 %v1667, %v2296
  %v2482 = vmul.f32 %v1672, %v2297
  %v2483 = vmul.f32 %v1677, %v2298
  %v2484 = vmul.f32 %v1682, %v2299
  %v2485 = vmul.f32 %v1687, %v2300
  %v2486 = vmul.f32 %v1692, %v2301
  %v2487 = vmul.f32 %v1697, %v2302
  %v2488 = vmul.f32 %v1702, %v2303
  %v2489 = vmul.f32 %v1707, %v2304
  %v2490 = vmul.f32 %v1712, %v2305
  %v2491 = vmul.f32 %v1717, %v2306
  %v2492 = vmul.f32 %v1722, %v2307
  %v2493 = vmul.f32 %v1727, %v2308
  %v2494 = vmul.f32 %v1732, %v2309
  %v2495 = vmul.f32 %v1737, %v2310
  %v2496 = vmul.f32 %v1742, %v2311
  %v2497 = vmul.f32 %v1747, %v2312
  %v2498 = vmul.f32 %v1752, %v2313
  %v2499 = vmul.f32 %v1757, %v2314
  %v2500 = vmul.f32 %v2315, 0.16666667
  %v2501 = vmul.f32 %v2316, 0.16666667
  %v2502 = vmul.f32 %v2317, 0.16666667
  %v2503 = vmul.f32 %v2318, 0.16666667
  %v2504 = vmul.f32 %v2319, 0.16666667
  %v2505 = vmul.f32 %v2320, 0.16666667
  %v2506 = vmul.f32 %v2321, 0.16666667
  %v2507 = vmul.f32 %v2322, 0.16666667
  %v2508 = vmul.f32 %v2323, 0.16666667
  %v2509 = vmul.f32 %v2324, 0.16666667
  %v2510 = vmul.f32 %v2325, 0.16666667
  %v2511 = vmul.f32 %v2326, 0.16666667
  %v2512 = vmul.f32 %v2327, 0.16666667
  %v2513 = vmul.f32 %v2328, 0.16666667
  %v2514 = vmul.f32 %v2329, 0.16666667
  %v2515 = vmul.f32 %v2330, 0.16666667
  %v2516 = vmul.f32 %v2331, 0.16666667
  %v2517 = vmul.f32 %v2332, 0.16666667
  %v2518 = vmul.f32 %v2333, 0.16666667
  %v2519 = vmul.f32 %v2334, 0.16666667
  %v2520 = vmul.f32 %v2335, 0.16666667
  %v2521 = vmul.f32 %v2336, 0.16666667
  %v2522 = vmul.f32 %v2337, 0.16666667
  %v2523 = vmul.f32 %v2338, 0.16666667
  %v2524 = vmul.f32 %v2339, 0.16666667
  %v2525 = vmul.f32 %v2340, 0.16666667
  %v2526 = vmul.f32 %v2341, 0.16666667
  %v2527 = vmul.f32 %v2342, 0.16666667
  %v2528 = vmul.f32 %v2343, 0.16666667
  %v2529 = vmul.f32 %v2344, 0.16666667
  %v2530 = vmul.f32 %v2345, 0.16666667
  %v2531 = vmul.f32 %v2346, 0.16666667
  %v2532 = vmul.f32 %v2347, 0.16666667
  %v2533 = vmul.f32 %v2348, 0.16666667
  %v2534 = vmul.f32 %v2349, 0.16666667
  %v2535 = vmul.f32 %v2350, 0.16666667
  %v2536 = vmul.f32 %v2351, 0.16666667
  %v2537 = vmul.f32 %v2352, 0.16666667
  %v2538 = vmul.f32 %v2353, 0.16666667
  %v2539 = vmul.f32 %v2354, 0.16666667
  %v2540 = vmul.f32 %v2355, 0.16666667
  %v2541 = vmul.f32 %v2356, 0.16666667
  %v2542 = vmul.f32 %v2357, 0.16666667
  %v2543 = vmul.f32 %v2358, 0.16666667
  %v2544 = vmul.f32 %v2359, 0.16666667
  %v2545 = vmul.f32 %v2360, 0.16666667
  %v2546 = vmul.f32 %v2361, 0.16666667
  %v2547 = vmul.f32 %v2362, 0.16666667
  %v2548 = vmul.f32 %v2363, 0.16666667
  %v2549 = vmul.f32 %v2364, 0.16666667
  %v2550 = vmul.f32 %v2365, 0.16666667
  %v2551 = vmul.f32 %v2366, 0.16666667
  %v2552 = vmul.f32 %v2367, 0.16666667
  %v2553 = vmul.f32 %v2368, 0.16666667
  %v2554 = vmul.f32 %v2369, 0.16666667
  %v2555 = vmul.f32 %v2370, 0.16666667
  %v2556 = vmul.f32 %v2371, 0.16666667
  %v2557 = vmul.f32 %v2372, 0.16666667
  %v2558 = vmul.f32 %v2373, 0.16666667
  %v2559 = vmul.f32 %v2374, 0.16666667
  %v2560 = vmul.f32 %v2375, 0.16666667
  %v2561 = vmul.f32 %v2376, 0.16666667
  %v2562 = vmul.f32 %v2377, 0.16666667
  %v2563 = vmul.f32 %v2378, 0.16666667
  %v2564 = vmul.f32 %v2379, 0.16666667
  %v2565 = vmul.f32 %v2380, 0.16666667
  %v2566 = vmul.f32 %v2381, 0.16666667
  %v2567 = vmul.f32 %v2382, 0.16666667
  %v2568 = vmul.f32 %v2383, 0.16666667
  %v2569 = vmul.f32 %v2384, 0.16666667
  %v2570 = vmul.f32 %v2385, 0.16666667
  %v2571 = vmul.f32 %v2386, 0.16666667
  %v2572 = vmul.f32 %v2387, 0.16666667
  %v2573 = vmul.f32 %v2388, 0.16666667
  %v2574 = vmul.f32 %v2389, 0.16666667
  %v2575 = vmul.f32 %v2390, 0.16666667
  %v2576 = vmul.f32 %v2391, 0.16666667
  %v2577 = vmul.f32 %v2392, 0.16666667
  %v2578 = vmul.f32 %v2393, 0.16666667
  %v2579 = vmul.f32 %v2394, 0.16666667
  %v2580 = vmul.f32 %v2395, 0.16666667
  %v2581 = vmul.f32 %v2396, 0.16666667
  %v2582 = vmul.f32 %v2397, 0.16666667
  %v2583 = vmul.f32 %v2398, 0.16666667
  %v2584 = vmul.f32 %v2399, 0.16666667
  %v2585 = vmul.f32 %v2400, 0.16666667
  %v2586 = vmul.f32 %v2401, 0.16666667
  %v2587 = vmul.f32 %v2402, 0.16666667
  %v2588 = vmul.f32 %v2403, 0.16666667
  %v2589 = vmul.f32 %v2404, 0.16666667
  %v2590 = vmul.f32 %v2405, 0.16666667
  %v2591 = vmul.f32 %v2406, 0.16666667
  %v2592 = vmul.f32 %v2407, 0.16666667
  %v2593 = vmul.f32 %v2408, 0.16666667
  %v2594 = vmul.f32 %v2409, 0.16666667
  %v2595 = vmul.f32 %v2410, 0.16666667
  %v2596 = vmul.f32 %v2411, 0.16666667
  %v2597 = vmul.f32 %v2412, 0.16666667
  %v2598 = vmul.f32 %v2413, 0.16666667
  %v2599 = vmul.f32 %v2414, 0.16666667
  %v2600 = vmul.f32 %v2415, 0.16666667
  %v2601 = vmul.f32 %v2416, 0.16666667
  %v2602 = vmul.f32 %v2417, 0.16666667
  %v2603 = vmul.f32 %v2418, 0.16666667
  %v2604 = vmul.f32 %v2419, 0.16666667
  %v2605 = vmul.f32 %v2420, 0.16666667
  %v2606 = vmul.f32 %v2421, 0.16666667
  %v2607 = vmul.f32 %v2422, 0.16666667
  %v2608 = vmul.f32 %v2423, 0.16666667
  %v2609 = vmul.f32 %v2424, 0.16666667
  %v2610 = vmul.f32 %v2425, 0.16666667
  %v2611 = vmul.f32 %v2426, 0.16666667
  %v2612 = vmul.f32 %v2427, 0.16666667
  %v2613 = vmul.f32 %v2428, 0.16666667
  %v2614 = vmul.f32 %v2429, 0.16666667
  %v2615 = vmul.f32 %v2430, 0.16666667
  %v2616 = vmul.f32 %v2431, 0.16666667
  %v2617 = vmul.f32 %v2432, 0.16666667
  %v2618 = vmul.f32 %v2433, 0.16666667
  %v2619 = vmul.f32 %v2434, 0.16666667
  %v2620 = vmul.f32 %v2435, 0.16666667
  %v2621 = vmul.f32 %v2436, 0.16666667
  %v2622 = vmul.f32 %v2437, 0.16666667
  %v2623 = vmul.f32 %v2438, 0.16666667
  %v2624 = vmul.f32 %v2439, 0.16666667
  %v2625 = vmul.f32 %v2440, 0.16666667
  %v2626 = vmul.f32 %v2441, 0.16666667
  %v2627 = vmul.f32 %v2442, 0.16666667
  %v2628 = vmul.f32 %v2443, 0.16666667
  %v2629 = vmul.f32 %v2444, 0.16666667
  %v2630 = vmul.f32 %v2445, 0.16666667
  %v2631 = vmul.f32 %v2446, 0.16666667
  %v2632 = vmul.f32 %v2447, 0.16666667
  %v2633 = vmul.f32 %v2448, 0.16666667
  %v2634 = vmul.f32 %v2449, 0.16666667
  %v2635 = vmul.f32 %v2450, 0.16666667
  %v2636 = vmul.f32 %v2451, 0.16666667
  %v2637 = vmul.f32 %v2452, 0.16666667
  %v2638 = vmul.f32 %v2453, 0.16666667
  %v2639 = vmul.f32 %v2454, 0.16666667
  %v2640 = vmul.f32 %v2455, 0.16666667
  %v2641 = vmul.f32 %v2456, 0.16666667
  %v2642 = vmul.f32 %v2457, 0.16666667
  %v2643 = vmul.f32 %v2458, 0.16666667
  %v2644 = vmul.f32 %v2459, 0.16666667
  %v2645 = vmul.f32 %v2460, 0.16666667
  %v2646 = vmul.f32 %v2461, 0.16666667
  %v2647 = vmul.f32 %v2462, 0.16666667
  %v2648 = vmul.f32 %v2463, 0.16666667
  %v2649 = vmul.f32 %v2464, 0.16666667
  %v2650 = vmul.f32 %v2465, 0.16666667
  %v2651 = vmul.f32 %v2466, 0.16666667
  %v2652 = vmul.f32 %v2467, 0.16666667
  %v2653 = vmul.f32 %v2468, 0.16666667
  %v2654 = vmul.f32 %v2469, 0.16666667
  %v2655 = vmul.f32 %v2470, 0.16666667
  %v2656 = vmul.f32 %v2471, 0.16666667
  %v2657 = vmul.f32 %v2472, 0.16666667
  %v2658 = vmul.f32 %v2473, 0.16666667
  %v2659 = vmul.f32 %v2474, 0.16666667
  %v2660 = vmul.f32 %v2475, 0.16666667
  %v2661 = vmul.f32 %v2476, 0.16666667
  %v2662 = vmul.f32 %v2477, 0.16666667
  %v2663 = vmul.f32 %v2478, 0.16666667
  %v2664 = vmul.f32 %v2479, 0.16666667
  %v2665 = vmul.f32 %v2480, 0.16666667
  %v2666 = vmul.f32 %v2481, 0.16666667
  %v2667 = vmul.f32 %v2482, 0.16666667
  %v2668 = vmul.f32 %v2483, 0.16666667
  %v2669 = vmul.f32 %v2484, 0.16666667
  %v2670 = vmul.f32 %v2485, 0.16666667
  %v2671 = vmul.f32 %v2486, 0.16666667
  %v2672 = vmul.f32 %v2487, 0.16666667
  %v2673 = vmul.f32 %v2488, 0.16666667
  %v2674 = vmul.f32 %v2489, 0.16666667
  %v2675 = vmul.f32 %v2490, 0.16666667
  %v2676 = vmul.f32 %v2491, 0.16666667
  %v2677 = vmul.f32 %v2492, 0.16666667
  %v2678 = vmul.f32 %v2493, 0.16666667
  %v2679 = vmul.f32 %v2494, 0.16666667
  %v2680 = vmul.f32 %v2495, 0.16666667
  %v2681 = vmul.f32 %v2496, 0.16666667
  %v2682 = vmul.f32 %v2497, 0.16666667
  %v2683 = vmul.f32 %v2498, 0.16666667
  %v2684 = vmul.f32 %v2499, 0.16666667
  %2685 = vst [vmem:[%s3] sm:$0xff] %v2500
  %2686 = vst [vmem:[%s3 + $0x8] sm:$0xff] %v2501
  %2687 = vst [vmem:[%s3 + $0x10] sm:$0xff] %v2502
  %2688 = vst [vmem:[%s3 + $0x18] sm:$0xff] %v2503
  %2689 = vst [vmem:[%s3 + $0x20] sm:$0xff] %v2504
  %2690 = vst [vmem:[%s3 + $0x28] sm:$0xff] %v2505
  %2691 = vst [vmem:[%s3 + $0x30] sm:$0xff] %v2506
  %2692 = vst [vmem:[%s3 + $0x38] sm:$0xff] %v2507
  %2693 = vst [vmem:[%s3 + $0x40] sm:$0xff] %v2508
  %2694 = vst [vmem:[%s3 + $0x48] sm:$0xff] %v2509
  %2695 = vst [vmem:[%s3 + $0x50] sm:$0xff] %v2510
  %2696 = vst [vmem:[%s3 + $0x58] sm:$0xff] %v2511
  %2697 = vst [vmem:[%s3 + $0x60] sm:$0xff] %v2512
  %2698 = vst [vmem:[%s3 + $0x68] sm:$0xff] %v2513
  %2699 = vst [vmem:[%s3 + $0x70] sm:$0xff] %v2514
  %2700 = vst [vmem:[%s3 + $0x78] sm:$0xff] %v2515
  %2701 = vst [vmem:[%s3 + $0x80] sm:$0xff] %v2516
  %2702 = vst [vmem:[%s3 + $0x88] sm:$0xff] %v2517
  %2703 = vst [vmem:[%s3 + $0x90] sm:$0xff] %v2518
  %2704 = vst [vmem:[%s3 + $0x98] sm:$0xff] %v2519
  %2705 = vst [vmem:[%s3 + $0xa0] sm:$0xff] %v2520
  %2706 = vst [vmem:[%s3 + $0xa8] sm:$0xff] %v2521
  %2707 = vst [vmem:[%s3 + $0xb0] sm:$0xff] %v2522
  %2708 = vst [vmem:[%s3 + $0xb8] sm:$0xff] %v2523
  %2709 = vst [vmem:[%s3 + $0xc0] sm:$0xff] %v2524
  %2710 = vst [vmem:[%s3 + $0xc8] sm:$0xff] %v2525
  %2711 = vst [vmem:[%s3 + $0xd0] sm:$0xff] %v2526
  %2712 = vst [vmem:[%s3 + $0xd8] sm:$0xff] %v2527
  %2713 = vst [vmem:[%s3 + $0xe0] sm:$0xff] %v2528
  %2714 = vst [vmem:[%s3 + $0xe8] sm:$0xff] %v2529
  %2715 = vst [vmem:[%s3 + $0xf0] sm:$0xff] %v2530
  %2716 = vst [vmem:[%s3 + $0xf8] sm:$0xff] %v2531
  %2717 = vst [vmem:[%s3 + $0x100] sm:$0xff] %v2532
  %2718 = vst [vmem:[%s3 + $0x108] sm:$0xff] %v2533
  %2719 = vst [vmem:[%s3 + $0x110] sm:$0xff] %v2534
  %2720 = vst [vmem:[%s3 + $0x118] sm:$0xff] %v2535
  %2721 = vst [vmem:[%s3 + $0x120] sm:$0xff] %v2536
  %2722 = vst [vmem:[%s3 + $0x128] sm:$0xff] %v2537
  %2723 = vst [vmem:[%s3 + $0x130] sm:$0xff] %v2538
  %2724 = vst [vmem:[%s3 + $0x138] sm:$0xff] %v2539
  %2725 = vst [vmem:[%s3 + $0x140] sm:$0xff] %v2540
  %2726 = vst [vmem:[%s3 + $0x148] sm:$0xff] %v2541
  %2727 = vst [vmem:[%s3 + $0x150] sm:$0xff] %v2542
  %2728 = vst [vmem:[%s3 + $0x158] sm:$0xff] %v2543
  %2729 = vst [vmem:[%s3 + $0x160] sm:$0xff] %v2544
  %2730 = vst [vmem:[%s3 + $0x168] sm:$0xff] %v2545
  %2731 = vst [vmem:[%s3 + $0x170] sm:$0xff] %v2546
  %2732 = vst [vmem:[%s3 + $0x178] sm:$0xff] %v2547
  %2733 = vst [vmem:[%s3 + $0x180] sm:$0xff] %v2548
  %2734 = vst [vmem:[%s3 + $0x188] sm:$0xff] %v2549
  %2735 = vst [vmem:[%s3 + $0x190] sm:$0xff] %v2550
  %2736 = vst [vmem:[%s3 + $0x198] sm:$0xff] %v2551
  %2737 = vst [vmem:[%s3 + $0x1a0] sm:$0xff] %v2552
  %2738 = vst [vmem:[%s3 + $0x1a8] sm:$0xff] %v2553
  %2739 = vst [vmem:[%s3 + $0x1b0] sm:$0xff] %v2554
  %2740 = vst [vmem:[%s3 + $0x1b8] sm:$0xff] %v2555
  %2741 = vst [vmem:[%s3 + $0x1c0] sm:$0xff] %v2556
  %2742 = vst [vmem:[%s3 + $0x1c8] sm:$0xff] %v2557
  %2743 = vst [vmem:[%s3 + $0x1d0] sm:$0xff] %v2558
  %2744 = vst [vmem:[%s3 + $0x1d8] sm:$0xff] %v2559
  %2745 = vst [vmem:[%s3 + $0x1e0] sm:$0xff] %v2560
  %2746 = vst [vmem:[%s3 + $0x1e8] sm:$0xff] %v2561
  %2747 = vst [vmem:[%s3 + $0x1f0] sm:$0xff] %v2562
  %2748 = vst [vmem:[%s3 + $0x1f8] sm:$0xff] %v2563
  %2749 = vst [vmem:[%s3 + $0x200] sm:$0xff] %v2564
  %2750 = vst [vmem:[%s3 + $0x208] sm:$0xff] %v2565
  %2751 = vst [vmem:[%s3 + $0x210] sm:$0xff] %v2566
  %2752 = vst [vmem:[%s3 + $0x218] sm:$0xff] %v2567
  %2753 = vst [vmem:[%s3 + $0x220] sm:$0xff] %v2568
  %2754 = vst [vmem:[%s3 + $0x228] sm:$0xff] %v2569
  %2755 = vst [vmem:[%s3 + $0x230] sm:$0xff] %v2570
  %2756 = vst [vmem:[%s3 + $0x238] sm:$0xff] %v2571
  %2757 = vst [vmem:[%s3 + $0x240] sm:$0xff] %v2572
  %2758 = vst [vmem:[%s3 + $0x248] sm:$0xff] %v2573
  %2759 = vst [vmem:[%s3 + $0x250] sm:$0xff] %v2574
  %2760 = vst [vmem:[%s3 + $0x258] sm:$0xff] %v2575
  %2761 = vst [vmem:[%s3 + $0x260] sm:$0xff] %v2576
  %2762 = vst [vmem:[%s3 + $0x268] sm:$0xff] %v2577
  %2763 = vst [vmem:[%s3 + $0x270] sm:$0xff] %v2578
  %2764 = vst [vmem:[%s3 + $0x278] sm:$0xff] %v2579
  %2765 = vst [vmem:[%s3 + $0x280] sm:$0xff] %v2580
  %2766 = vst [vmem:[%s3 + $0x288] sm:$0xff] %v2581
  %2767 = vst [vmem:[%s3 + $0x290] sm:$0xff] %v2582
  %2768 = vst [vmem:[%s3 + $0x298] sm:$0xff] %v2583
  %2769 = vst [vmem:[%s3 + $0x2a0] sm:$0xff] %v2584
  %2770 = vst [vmem:[%s3 + $0x2a8] sm:$0xff] %v2585
  %2771 = vst [vmem:[%s3 + $0x2b0] sm:$0xff] %v2586
  %2772 = vst [vmem:[%s3 + $0x2b8] sm:$0xff] %v2587
  %2773 = vst [vmem:[%s3 + $0x2c0] sm:$0xff] %v2588
  %2774 = vst [vmem:[%s3 + $0x2c8] sm:$0xff] %v2589
  %2775 = vst [vmem:[%s3 + $0x2d0] sm:$0xff] %v2590
  %2776 = vst [vmem:[%s3 + $0x2d8] sm:$0xff] %v2591
  %2777 = vst [vmem:[%s3 + $0x2e0] sm:$0xff] %v2592
  %2778 = vst [vmem:[%s3 + $0x2e8] sm:$0xff] %v2593
  %2779 = vst [vmem:[%s3 + $0x2f0] sm:$0xff] %v2594
  %2780 = vst [vmem:[%s3 + $0x2f8] sm:$0xff] %v2595
  %2781 = vst [vmem:[%s3 + $0x300] sm:$0xff] %v2596
  %2782 = vst [vmem:[%s3 + $0x308] sm:$0xff] %v2597
  %2783 = vst [vmem:[%s3 + $0x310] sm:$0xff] %v2598
  %2784 = vst [vmem:[%s3 + $0x318] sm:$0xff] %v2599
  %2785 = vst [vmem:[%s3 + $0x320] sm:$0xff] %v2600
  %2786 = vst [vmem:[%s3 + $0x328] sm:$0xff] %v2601
  %2787 = vst [vmem:[%s3 + $0x330] sm:$0xff] %v2602
  %2788 = vst [vmem:[%s3 + $0x338] sm:$0xff] %v2603
  %2789 = vst [vmem:[%s3 + $0x340] sm:$0xff] %v2604
  %2790 = vst [vmem:[%s3 + $0x348] sm:$0xff] %v2605
  %2791 = vst [vmem:[%s3 + $0x350] sm:$0xff] %v2606
  %2792 = vst [vmem:[%s3 + $0x358] sm:$0xff] %v2607
  %2793 = vst [vmem:[%s3 + $0x360] sm:$0xff] %v2608
  %2794 = vst [vmem:[%s3 + $0x368] sm:$0xff] %v2609
  %2795 = vst [vmem:[%s3 + $0x370] sm:$0xff] %v2610
  %2796 = vst [vmem:[%s3 + $0x378] sm:$0xff] %v2611
  %2797 = vst [vmem:[%s3 + $0x380] sm:$0xff] %v2612
  %2798 = vst [vmem:[%s3 + $0x388] sm:$0xff] %v2613
  %2799 = vst [vmem:[%s3 + $0x390] sm:$0xff] %v2614
  %2800 = vst [vmem:[%s3 + $0x398] sm:$0xff] %v2615
  %2801 = vst [vmem:[%s3 + $0x3a0] sm:$0xff] %v2616
  %2802 = vst [vmem:[%s3 + $0x3a8] sm:$0xff] %v2617
  %2803 = vst [vmem:[%s3 + $0x3b0] sm:$0xff] %v2618
  %2804 = vst [vmem:[%s3 + $0x3b8] sm:$0xff] %v2619
  %2805 = vst [vmem:[%s3 + $0x3c0] sm:$0xff] %v2620
  %2806 = vst [vmem:[%s3 + $0x3c8] sm:$0xff] %v2621
  %2807 = vst [vmem:[%s3 + $0x3d0] sm:$0xff] %v2622
  %2808 = vst [vmem:[%s3 + $0x3d8] sm:$0xff] %v2623
  %2809 = vst [vmem:[%s3 + $0x3e0] sm:$0xff] %v2624
  %2810 = vst [vmem:[%s3 + $0x3e8] sm:$0xff] %v2625
  %2811 = vst [vmem:[%s3 + $0x3f0] sm:$0xff] %v2626
  %2812 = vst [vmem:[%s3 + $0x3f8] sm:$0xff] %v2627
  %2813 = vst [vmem:[%s3 + $0x400] sm:$0xff] %v2628
  %2814 = vst [vmem:[%s3 + $0x408] sm:$0xff] %v2629
  %2815 = vst [vmem:[%s3 + $0x410] sm:$0xff] %v2630
  %2816 = vst [vmem:[%s3 + $0x418] sm:$0xff] %v2631
  %2817 = vst [vmem:[%s3 + $0x420] sm:$0xff] %v2632
  %2818 = vst [vmem:[%s3 + $0x428] sm:$0xff] %v2633
  %2819 = vst [vmem:[%s3 + $0x430] sm:$0xff] %v2634
  %2820 = vst [vmem:[%s3 + $0x438] sm:$0xff] %v2635
  %2821 = vst [vmem:[%s3 + $0x440] sm:$0xff] %v2636
  %2822 = vst [vmem:[%s3 + $0x448] sm:$0xff] %v2637
  %2823 = vst [vmem:[%s3 + $0x450] sm:$0xff] %v2638
  %2824 = vst [vmem:[%s3 + $0x458] sm:$0xff] %v2639
  %2825 = vst [vmem:[%s3 + $0x460] sm:$0xff] %v2640
  %2826 = vst [vmem:[%s3 + $0x468] sm:$0xff] %v2641
  %2827 = vst [vmem:[%s3 + $0x470] sm:$0xff] %v2642
  %2828 = vst [vmem:[%s3 + $0x478] sm:$0xff] %v2643
  %2829 = vst [vmem:[%s3 + $0x480] sm:$0xff] %v2644
  %2830 = vst [vmem:[%s3 + $0x488] sm:$0xff] %v2645
  %2831 = vst [vmem:[%s3 + $0x490] sm:$0xff] %v2646
  %2832 = vst [vmem:[%s3 + $0x498] sm:$0xff] %v2647
  %2833 = vst [vmem:[%s3 + $0x4a0] sm:$0xff] %v2648
  %2834 = vst [vmem:[%s3 + $0x4a8] sm:$0xff] %v2649
  %2835 = vst [vmem:[%s3 + $0x4b0] sm:$0xff] %v2650
  %2836 = vst [vmem:[%s3 + $0x4b8] sm:$0xff] %v2651
  %2837 = vst [vmem:[%s3 + $0x4c0] sm:$0xff] %v2652
  %2838 = vst [vmem:[%s3 + $0x4c8] sm:$0xff] %v2653
  %2839 = vst [vmem:[%s3 + $0x4d0] sm:$0xff] %v2654
  %2840 = vst [vmem:[%s3 + $0x4d8] sm:$0xff] %v2655
  %2841 = vst [vmem:[%s3 + $0x4e0] sm:$0xff] %v2656
  %2842 = vst [vmem:[%s3 + $0x4e8] sm:$0xff] %v2657
  %2843 = vst [vmem:[%s3 + $0x4f0] sm:$0xff] %v2658
  %2844 = vst [vmem:[%s3 + $0x4f8] sm:$0xff] %v2659
  %2845 = vst [vmem:[%s3 + $0x500] sm:$0xff] %v2660
  %2846 = vst [vmem:[%s3 + $0x508] sm:$0xff] %v2661
  %2847 = vst [vmem:[%s3 + $0x510] sm:$0xff] %v2662
  %2848 = vst [vmem:[%s3 + $0x518] sm:$0xff] %v2663
  %2849 = vst [vmem:[%s3 + $0x520] sm:$0xff] %v2664
  %2850 = vst [vmem:[%s3 + $0x528] sm:$0xff] %v2665
  %2851 = vst [vmem:[%s3 + $0x530] sm:$0xff] %v2666
  %2852 = vst [vmem:[%s3 + $0x538] sm:$0xff] %v2667
  %2853 = vst [vmem:[%s3 + $0x540] sm:$0xff] %v2668
  %2854 = vst [vmem:[%s3 + $0x548] sm:$0xff] %v2669
  %2855 = vst [vmem:[%s3 + $0x550] sm:$0xff] %v2670
  %2856 = vst [vmem:[%s3 + $0x558] sm:$0xff] %v2671
  %2857 = vst [vmem:[%s3 + $0x560] sm:$0xff] %v2672
  %2858 = vst [vmem:[%s3 + $0x568] sm:$0xff] %v2673
  %2859 = vst [vmem:[%s3 + $0x570] sm:$0xff] %v2674
  %2860 = vst [vmem:[%s3 + $0x578] sm:$0xff] %v2675
  %2861 = vst [vmem:[%s3 + $0x580] sm:$0xff] %v2676
  %2862 = vst [vmem:[%s3 + $0x588] sm:$0xff] %v2677
  %2863 = vst [vmem:[%s3 + $0x590] sm:$0xff] %v2678
  %2864 = vst [vmem:[%s3 + $0x598] sm:$0xff] %v2679
  %2865 = vst [vmem:[%s3 + $0x5a0] sm:$0xff] %v2680
  %2866 = vst [vmem:[%s3 + $0x5a8] sm:$0xff] %v2681
  %2867 = vst [vmem:[%s3 + $0x5b0] sm:$0xff] %v2682
  %2868 = vst [vmem:[%s3 + $0x5b8] sm:$0xff] %v2683
  %2869 = vst [vmem:[%s3 + $0x5c0] sm:$0xff] %v2684
  // Predicated region
  $region14: #{model_forward.3} parent=0 // pred_check
    _
  $region15: #{model_forward.3} parent=0 // pred_check_branch
    %2871 = sbr.rel (0) target = $region17
  $region16: #{model_forward.3} parent=0 // pred_region
    _
  $region17: #{model_forward.3} parent=0 // pred_fallthru
    _
  // Predicated region
  $region18: #{model_forward.3} parent=0 // pred_check
    _
  $region19: #{model_forward.3} parent=0 // pred_check_branch
    %2873 = sbr.rel (0) target = $region21
  $region20: #{model_forward.3} parent=0 // pred_region
    _
  $region21: #{model_forward.3} parent=0 // pred_fallthru
    _

</llo_original>
